<compile_context>
chip_gen: v5e
topology: v5e:2x2
jax: 0.10.0
libtpu: 0.0.40
codegen_flags: <defaults>
</compile_context>

<pallas_src>
import math

import jax
import jax.numpy as jnp
from jax.experimental import pallas as pl
from jax.experimental.pallas import tpu as pltpu


# ---------------------------------------------------------------------------
# Conv layer: whole-problem GEMM  (C_out, K) @ (K, Ho*Wo)  + bias + ReLU.
# All operands fit VMEM comfortably (<2 MB), so a gridless single-block
# pallas_call is used (no accumulator, no pipelining needed).
# ---------------------------------------------------------------------------
def _conv_gemm_relu_kernel(w_ref, p_ref, b_ref, o_ref):
    y = jnp.dot(w_ref[...], p_ref[...], preferred_element_type=jnp.float32)
    y = y + b_ref[...]                      # (C_out, 1) broadcast over lanes
    o_ref[...] = jnp.maximum(y, 0.0).astype(o_ref.dtype)


def conv_gemm_relu(w_mat, patches, b_col):
    """w_mat:(C_out,K), patches:(K,N), b_col:(C_out,1) -> relu(w@p + b):(C_out,N)."""
    cout, k = w_mat.shape
    k2, n = patches.shape
    assert k == k2
    return pl.pallas_call(
        _conv_gemm_relu_kernel,
        out_shape=jax.ShapeDtypeStruct((cout, n), jnp.float32),
    )(w_mat, patches, b_col)


def _im2col(x, kh, kw, stride):
    """x:(C,H,W) -> (C*kh*kw, Ho*Wo) patch matrix in PyTorch (c,kh,kw) order."""
    C, H, W = x.shape
    Ho = (H - kh) // stride + 1
    Wo = (W - kw) // stride + 1
    cols = []
    for i in range(kh):
        for j in range(kw):
            cols.append(x[:, i:i + stride * Ho:stride, j:j + stride * Wo:stride])
    p = jnp.stack(cols, axis=1)              # (C, kh*kw, Ho, Wo)
    return p.reshape(C * kh * kw, Ho * Wo), Ho, Wo


def _conv_layer(x, w_mat, b_col, kh, kw, stride):
    patches, Ho, Wo = _im2col(x, kh, kw, stride)
    y = conv_gemm_relu(w_mat, patches, b_col)          # (C_out, Ho*Wo), lane-dense
    return y.reshape(w_mat.shape[0], Ho, Wo)


# ---------------------------------------------------------------------------
# Fused fc1 (8960 -> 512, leaky_relu) + fc2 (512 -> A) kernel.
# Grid is only the K reduction; M=1 (no padding), N=512 is one resident tile.
# fc1 weight arrives pre-transposed (K, 512) in bf16; accumulation is f32.
# ---------------------------------------------------------------------------
def _fc_fused_kernel(x_ref, w1_ref, b1_ref, w2_ref, b2_ref, o_ref, acc_ref):
    k = pl.program_id(0)

    @pl.when(k == 0)
    def _():
        acc_ref[...] = jnp.zeros_like(acc_ref)

    acc_ref[...] += jnp.dot(x_ref[...].astype(jnp.bfloat16), w1_ref[...],
                            preferred_element_type=jnp.float32)

    @pl.when(k == pl.num_programs(0) - 1)
    def _():
        h = acc_ref[...] + b1_ref[...]
        h = jnp.where(h > 0, h, 0.01 * h)       # PyTorch leaky_relu default slope
        y = jnp.dot(h, w2_ref[...], preferred_element_type=jnp.float32)
        o_ref[...] = (y + b2_ref[...]).astype(o_ref.dtype)


def fc1_fc2_fused(flat, w1, b1, w2, b2, *, tk=1792):
    m, K = flat.shape                         # (1, 8960)
    K2, N1 = w1.shape                         # (8960, 512)
    N1b, N2 = w2.shape                        # (512, A)
    assert K == K2 and N1 == N1b and K % tk == 0 and tk % 128 == 0
    return pl.pallas_call(
        _fc_fused_kernel,
        out_shape=jax.ShapeDtypeStruct((m, N2), jnp.float32),
        grid_spec=pltpu.PrefetchScalarGridSpec(
            num_scalar_prefetch=0,
            grid=(K // tk,),
            in_specs=[
                pl.BlockSpec((m, tk), lambda k: (0, k)),     # activations chunk
                pl.BlockSpec((tk, N1), lambda k: (k, 0)),    # fc1 weight chunk (bf16)
                pl.BlockSpec((1, N1), lambda k: (0, 0)),     # fc1 bias (resident)
                pl.BlockSpec((N1, N2), lambda k: (0, 0)),    # fc2 weight (resident)
                pl.BlockSpec((1, N2), lambda k: (0, 0)),     # fc2 bias (resident)
            ],
            out_specs=pl.BlockSpec((m, N2), lambda k: (0, 0)),
            scratch_shapes=[pltpu.VMEM((m, N1), jnp.float32)],
        ),
        compiler_params=pltpu.CompilerParams(
            dimension_semantics=("arbitrary",)),
    )(flat, w1, b1, w2, b2)


# ---------------------------------------------------------------------------
# Forward pass + one-time parameter layout preparation.
# ---------------------------------------------------------------------------
def prepare_params(params):
    """One-time (outside jit) layout prep: conv weights -> (C_out, C_in*kh*kw),
    fc weights pre-transposed to (K, N); fc1_w stored bf16 (f32 accumulation)."""
    def conv_w(w):
        return w.reshape(w.shape[0], -1).astype(jnp.float32)
    return {
        "conv1_w": conv_w(params["conv1_w"]),
        "conv1_b": params["conv1_b"].astype(jnp.float32).reshape(-1, 1),
        "conv2_w": conv_w(params["conv2_w"]),
        "conv2_b": params["conv2_b"].astype(jnp.float32).reshape(-1, 1),
        "conv3_w": conv_w(params["conv3_w"]),
        "conv3_b": params["conv3_b"].astype(jnp.float32).reshape(-1, 1),
        "fc1_w": params["fc1_w"].T.astype(jnp.bfloat16),          # (8960, 512)
        "fc1_b": params["fc1_b"].astype(jnp.float32).reshape(1, -1),
        "fc2_w": params["fc2_w"].T.astype(jnp.float32),           # (512, A)
        "fc2_b": params["fc2_b"].astype(jnp.float32).reshape(1, -1),
    }


def qnetwork_cnn_forward(inp, p):
    """Exact forward of QNetworkCNN: returns (1, action_dim) float32."""
    x = inp.reshape(1, 3, 210, 160)[0].astype(jnp.float32)            # (3,210,160)
    x = _conv_layer(x, p["conv1_w"], p["conv1_b"], 8, 8, 4)           # (32,51,39)
    x = _conv_layer(x, p["conv2_w"], p["conv2_b"], 4, 4, 3)           # (64,16,12)
    x = _conv_layer(x, p["conv3_w"], p["conv3_b"], 3, 3, 1)           # (64,14,10)
    flat = x.reshape(1, -1)                                           # (1,8960) C,H,W order
    return fc1_fc2_fused(flat, p["fc1_w"], p["fc1_b"], p["fc2_w"], p["fc2_b"])


def _reference_forward(inp, params):
    """Pure-JAX reference (XLA conv + matmul) for correctness check."""
    x = inp.reshape(1, 3, 210, 160).astype(jnp.float32)

    def conv(x, w, b, s):
        y = jax.lax.conv_general_dilated(
            x, w, (s, s), "VALID",
            dimension_numbers=("NCHW", "OIHW", "NCHW"))
        return y + b[None, :, None, None]

    x = jax.nn.relu(conv(x, params["conv1_w"], params["conv1_b"], 4))
    x = jax.nn.relu(conv(x, params["conv2_w"], params["conv2_b"], 3))
    x = jax.nn.relu(conv(x, params["conv3_w"], params["conv3_b"], 1))
    flat = x.reshape(1, -1)
    h = jax.nn.leaky_relu(flat @ params["fc1_w"].T + params["fc1_b"], 0.01)
    return h @ params["fc2_w"].T + params["fc2_b"]


if __name__ == "__main__":
    action_dim = 6
    key = jax.random.PRNGKey(0)
    keys = jax.random.split(key, 11)

    def uinit(k, shape, fan_in):
        bound = 1.0 / math.sqrt(fan_in)
        return jax.random.uniform(k, shape, jnp.float32, -bound, bound)

    # Deterministic PyTorch-style (uniform +-1/sqrt(fan_in)) parameter init.
    params = {
        "conv1_w": uinit(keys[0], (32, 3, 8, 8), 3 * 8 * 8),
        "conv1_b": uinit(keys[1], (32,), 3 * 8 * 8),
        "conv2_w": uinit(keys[2], (64, 32, 4, 4), 32 * 4 * 4),
        "conv2_b": uinit(keys[3], (64,), 32 * 4 * 4),
        "conv3_w": uinit(keys[4], (64, 64, 3, 3), 64 * 3 * 3),
        "conv3_b": uinit(keys[5], (64,), 64 * 3 * 3),
        "fc1_w": uinit(keys[6], (512, 8960), 8960),
        "fc1_b": uinit(keys[7], (512,), 8960),
        "fc2_w": uinit(keys[8], (action_dim, 512), 512),
        "fc2_b": uinit(keys[9], (action_dim,), 512),
    }

    # The module hardcodes view((1, 3, 210, 160)), so the input must have
    # exactly 1*3*210*160 elements.
    x = jax.random.normal(keys[10], (1, 3, 210, 160), jnp.float32)

    prep = prepare_params(params)                 # one-time layout prep, outside jit
    fwd = jax.jit(qnetwork_cnn_forward)
    out = jax.block_until_ready(fwd(x, prep))
    assert out.shape == (1, action_dim)

    ref = _reference_forward(x, params)
    assert jnp.allclose(out, ref, rtol=2e-2, atol=2e-2)

    print("KERNEL_OK")
</pallas_src>

<mosaic_0001>
module attributes {stable_mosaic.version = 11 : i64} {
  func.func @_conv_gemm_relu_kernel(%arg0: memref<32x192xf32, #tpu.memory_space<vmem>>, %arg1: memref<192x1989xf32, #tpu.memory_space<vmem>>, %arg2: memref<32x1xf32, #tpu.memory_space<vmem>>, %arg3: memref<32x1989xf32, #tpu.memory_space<vmem>>) attributes {dimension_semantics = [], scalar_prefetch = 0 : i64, scratch_operands = 0 : i64, tpu.core_type = #tpu.core_type<tc>} {
    %c0 = arith.constant 0 : index
    %c0_0 = arith.constant 0 : index
    %0 = vector.load %arg0[%c0, %c0_0] : memref<32x192xf32, #tpu.memory_space<vmem>>, vector<32x192xf32>
    %c0_1 = arith.constant 0 : index
    %c0_2 = arith.constant 0 : index
    %1 = vector.load %arg1[%c0_1, %c0_2] : memref<192x1989xf32, #tpu.memory_space<vmem>>, vector<192x1989xf32>
    %cst = arith.constant dense<0.000000e+00> : vector<32x1989xf32>
    %2 = tpu.matmul %0, %1, %cst {dimension_numbers = #tpu.dot_dimension_numbers<[1], [0], [0], [1], [0, 0, 1, 1], [], []>} : vector<32x192xf32>, vector<192x1989xf32>, vector<32x1989xf32> -> vector<32x1989xf32>
    %c0_3 = arith.constant 0 : index
    %c0_4 = arith.constant 0 : index
    %3 = vector.load %arg2[%c0_3, %c0_4] : memref<32x1xf32, #tpu.memory_space<vmem>>, vector<32x1xf32>
    %4 = vector.broadcast %3 : vector<32x1xf32> to vector<32x1989xf32>
    %5 = arith.addf %2, %4 : vector<32x1989xf32>
    %cst_5 = arith.constant 0.000000e+00 : f32
    %6 = vector.broadcast %cst_5 : f32 to vector<32x1989xf32>
    %7 = arith.maximumf %5, %6 : vector<32x1989xf32>
    %c0_6 = arith.constant 0 : index
    %c0_7 = arith.constant 0 : index
    %8 = vector.load %arg3[%c0_6, %c0_7] : memref<32x1989xf32, #tpu.memory_space<vmem>>, vector<32x1989xf32>
    tpu.vector_store %arg3[%c0_6, %c0_7], %7 {strides = array<i32>} : memref<32x1989xf32, #tpu.memory_space<vmem>>, vector<32x1989xf32>,
    return
  }
}

module attributes {stable_mosaic.version = 11 : i64} {
  func.func @_conv_gemm_relu_kernel(%arg0: memref<64x512xf32, #tpu.memory_space<vmem>>, %arg1: memref<512x192xf32, #tpu.memory_space<vmem>>, %arg2: memref<64x1xf32, #tpu.memory_space<vmem>>, %arg3: memref<64x192xf32, #tpu.memory_space<vmem>>) attributes {dimension_semantics = [], scalar_prefetch = 0 : i64, scratch_operands = 0 : i64, tpu.core_type = #tpu.core_type<tc>} {
    %c0 = arith.constant 0 : index
    %c0_0 = arith.constant 0 : index
    %0 = vector.load %arg0[%c0, %c0_0] : memref<64x512xf32, #tpu.memory_space<vmem>>, vector<64x512xf32>
    %c0_1 = arith.constant 0 : index
    %c0_2 = arith.constant 0 : index
    %1 = vector.load %arg1[%c0_1, %c0_2] : memref<512x192xf32, #tpu.memory_space<vmem>>, vector<512x192xf32>
    %cst = arith.constant dense<0.000000e+00> : vector<64x192xf32>
    %2 = tpu.matmul %0, %1, %cst {dimension_numbers = #tpu.dot_dimension_numbers<[1], [0], [0], [1], [0, 0, 1, 1], [], []>} : vector<64x512xf32>, vector<512x192xf32>, vector<64x192xf32> -> vector<64x192xf32>
    %c0_3 = arith.constant 0 : index
    %c0_4 = arith.constant 0 : index
    %3 = vector.load %arg2[%c0_3, %c0_4] : memref<64x1xf32, #tpu.memory_space<vmem>>, vector<64x1xf32>
    %4 = vector.broadcast %3 : vector<64x1xf32> to vector<64x192xf32>
    %5 = arith.addf %2, %4 : vector<64x192xf32>
    %cst_5 = arith.constant 0.000000e+00 : f32
    %6 = vector.broadcast %cst_5 : f32 to vector<64x192xf32>
    %7 = arith.maximumf %5, %6 : vector<64x192xf32>
    %c0_6 = arith.constant 0 : index
    %c0_7 = arith.constant 0 : index
    %8 = vector.load %arg3[%c0_6, %c0_7] : memref<64x192xf32, #tpu.memory_space<vmem>>, vector<64x192xf32>
    tpu.vector_store %arg3[%c0_6, %c0_7], %7 {strides = array<i32>} : memref<64x192xf32, #tpu.memory_space<vmem>>, vector<64x192xf32>,
    return
  }
}

module attributes {stable_mosaic.version = 11 : i64} {
  func.func @_conv_gemm_relu_kernel(%arg0: memref<64x576xf32, #tpu.memory_space<vmem>>, %arg1: memref<576x140xf32, #tpu.memory_space<vmem>>, %arg2: memref<64x1xf32, #tpu.memory_space<vmem>>, %arg3: memref<64x140xf32, #tpu.memory_space<vmem>>) attributes {dimension_semantics = [], scalar_prefetch = 0 : i64, scratch_operands = 0 : i64, tpu.core_type = #tpu.core_type<tc>} {
    %c0 = arith.constant 0 : index
    %c0_0 = arith.constant 0 : index
    %0 = vector.load %arg0[%c0, %c0_0] : memref<64x576xf32, #tpu.memory_space<vmem>>, vector<64x576xf32>
    %c0_1 = arith.constant 0 : index
    %c0_2 = arith.constant 0 : index
    %1 = vector.load %arg1[%c0_1, %c0_2] : memref<576x140xf32, #tpu.memory_space<vmem>>, vector<576x140xf32>
    %cst = arith.constant dense<0.000000e+00> : vector<64x140xf32>
    %2 = tpu.matmul %0, %1, %cst {dimension_numbers = #tpu.dot_dimension_numbers<[1], [0], [0], [1], [0, 0, 1, 1], [], []>} : vector<64x576xf32>, vector<576x140xf32>, vector<64x140xf32> -> vector<64x140xf32>
    %c0_3 = arith.constant 0 : index
    %c0_4 = arith.constant 0 : index
    %3 = vector.load %arg2[%c0_3, %c0_4] : memref<64x1xf32, #tpu.memory_space<vmem>>, vector<64x1xf32>
    %4 = vector.broadcast %3 : vector<64x1xf32> to vector<64x140xf32>
    %5 = arith.addf %2, %4 : vector<64x140xf32>
    %cst_5 = arith.constant 0.000000e+00 : f32
    %6 = vector.broadcast %cst_5 : f32 to vector<64x140xf32>
    %7 = arith.maximumf %5, %6 : vector<64x140xf32>
    %c0_6 = arith.constant 0 : index
    %c0_7 = arith.constant 0 : index
    %8 = vector.load %arg3[%c0_6, %c0_7] : memref<64x140xf32, #tpu.memory_space<vmem>>, vector<64x140xf32>
    tpu.vector_store %arg3[%c0_6, %c0_7], %7 {strides = array<i32>} : memref<64x140xf32, #tpu.memory_space<vmem>>, vector<64x140xf32>,
    return
  }
}

module attributes {stable_mosaic.version = 11 : i64} {
  func.func @_fc_fused_kernel(%arg0: i32, %arg1: memref<1x1792xf32, #tpu.memory_space<vmem>>, %arg2: memref<1792x512xbf16, #tpu.memory_space<vmem>>, %arg3: memref<1x512xf32, #tpu.memory_space<vmem>>, %arg4: memref<512x6xf32, #tpu.memory_space<vmem>>, %arg5: memref<1x6xf32, #tpu.memory_space<vmem>>, %arg6: memref<1x6xf32, #tpu.memory_space<vmem>>, %arg7: memref<1x512xf32, #tpu.memory_space<vmem>>) attributes {dimension_semantics = [#tpu.dimension_semantics<arbitrary>], iteration_bounds = array<i64: 5>, scalar_prefetch = 0 : i64, scratch_operands = 1 : i64, tpu.core_type = #tpu.core_type<tc>, window_params = [{transform_indices = @transform_0, window_bounds = array<i64: 1, 1792>}, {transform_indices = @transform_1, window_bounds = array<i64: 1792, 512>}, {pipeline_mode = #tpu.pipeline_mode<synchronous>, transform_indices = @transform_2, window_bounds = array<i64: 1, 512>}, {pipeline_mode = #tpu.pipeline_mode<synchronous>, transform_indices = @transform_3, window_bounds = array<i64: 512, 6>}, {pipeline_mode = #tpu.pipeline_mode<synchronous>, transform_indices = @transform_4, window_bounds = array<i64: 1, 6>}, {pipeline_mode = #tpu.pipeline_mode<synchronous>, transform_indices = @transform_5, window_bounds = array<i64: 1, 6>}]} {
    %c0_i32 = arith.constant 0 : i32
    %0 = arith.cmpi eq, %arg0, %c0_i32 : i32
    %1 = arith.extui %0 : i1 to i32
    %c0_i32_0 = arith.constant 0 : i32
    %2 = arith.cmpi ne, %1, %c0_i32_0 : i32
    scf.if %2 {
      %cst_9 = arith.constant 0.000000e+00 : f32
      %13 = vector.broadcast %cst_9 : f32 to vector<1x512xf32>
      %c0_10 = arith.constant 0 : index
      %c0_11 = arith.constant 0 : index
      %14 = vector.load %arg7[%c0_10, %c0_11] : memref<1x512xf32, #tpu.memory_space<vmem>>, vector<1x512xf32>
      tpu.vector_store %arg7[%c0_10, %c0_11], %13 {strides = array<i32>} : memref<1x512xf32, #tpu.memory_space<vmem>>, vector<1x512xf32>,
    } else {
    }
    %c0 = arith.constant 0 : index
    %c0_1 = arith.constant 0 : index
    %3 = vector.load %arg7[%c0, %c0_1] : memref<1x512xf32, #tpu.memory_space<vmem>>, vector<1x512xf32>
    %c0_2 = arith.constant 0 : index
    %c0_3 = arith.constant 0 : index
    %4 = vector.load %arg1[%c0_2, %c0_3] : memref<1x1792xf32, #tpu.memory_space<vmem>>, vector<1x1792xf32>
    %5 = arith.truncf %4 : vector<1x1792xf32> to vector<1x1792xbf16>
    %c0_4 = arith.constant 0 : index
    %c0_5 = arith.constant 0 : index
    %6 = vector.load %arg2[%c0_4, %c0_5] : memref<1792x512xbf16, #tpu.memory_space<vmem>>, vector<1792x512xbf16>
    %cst = arith.constant dense<0.000000e+00> : vector<1x512xf32>
    %7 = tpu.matmul %5, %6, %cst {dimension_numbers = #tpu.dot_dimension_numbers<[1], [0], [0], [1], [0, 0, 1, 1], [], []>} : vector<1x1792xbf16>, vector<1792x512xbf16>, vector<1x512xf32> -> vector<1x512xf32>
    %8 = arith.addf %3, %7 : vector<1x512xf32>
    %c0_6 = arith.constant 0 : index
    %c0_7 = arith.constant 0 : index
    %9 = vector.load %arg7[%c0_6, %c0_7] : memref<1x512xf32, #tpu.memory_space<vmem>>, vector<1x512xf32>
    tpu.vector_store %arg7[%c0_6, %c0_7], %8 {strides = array<i32>} : memref<1x512xf32, #tpu.memory_space<vmem>>, vector<1x512xf32>,
    %c4_i32 = arith.constant 4 : i32
    %10 = arith.cmpi eq, %arg0, %c4_i32 : i32
    %11 = arith.extui %10 : i1 to i32
    %c0_i32_8 = arith.constant 0 : i32
    %12 = arith.cmpi ne, %11, %c0_i32_8 : i32
    scf.if %12 {
      %c0_9 = arith.constant 0 : index
      %c0_10 = arith.constant 0 : index
      %13 = vector.load %arg7[%c0_9, %c0_10] : memref<1x512xf32, #tpu.memory_space<vmem>>, vector<1x512xf32>
      %c0_11 = arith.constant 0 : index
      %c0_12 = arith.constant 0 : index
      %14 = vector.load %arg3[%c0_11, %c0_12] : memref<1x512xf32, #tpu.memory_space<vmem>>, vector<1x512xf32>
      %15 = arith.addf %13, %14 : vector<1x512xf32>
      %cst_13 = arith.constant 0.000000e+00 : f32
      %16 = vector.broadcast %cst_13 : f32 to vector<1x512xf32>
      %17 = arith.cmpf ogt, %15, %16 : vector<1x512xf32>
      %cst_14 = arith.constant 0.00999999977 : f32
      %18 = vector.broadcast %cst_14 : f32 to vector<1x512xf32>
      %19 = arith.mulf %18, %15 : vector<1x512xf32>
      %20 = arith.select %17, %15, %19 : vector<1x512xi1>, vector<1x512xf32>
      %c0_15 = arith.constant 0 : index
      %c0_16 = arith.constant 0 : index
      %21 = vector.load %arg4[%c0_15, %c0_16] : memref<512x6xf32, #tpu.memory_space<vmem>>, vector<512x6xf32>
      %cst_17 = arith.constant dense<0.000000e+00> : vector<1x6xf32>
      %22 = tpu.matmul %20, %21, %cst_17 {dimension_numbers = #tpu.dot_dimension_numbers<[1], [0], [0], [1], [0, 0, 1, 1], [], []>} : vector<1x512xf32>, vector<512x6xf32>, vector<1x6xf32> -> vector<1x6xf32>
      %c0_18 = arith.constant 0 : index
      %c0_19 = arith.constant 0 : index
      %23 = vector.load %arg5[%c0_18, %c0_19] : memref<1x6xf32, #tpu.memory_space<vmem>>, vector<1x6xf32>
      %24 = arith.addf %22, %23 : vector<1x6xf32>
      %c0_20 = arith.constant 0 : index
      %c0_21 = arith.constant 0 : index
      %25 = vector.load %arg6[%c0_20, %c0_21] : memref<1x6xf32, #tpu.memory_space<vmem>>, vector<1x6xf32>
      tpu.vector_store %arg6[%c0_20, %c0_21], %24 {strides = array<i32>} : memref<1x6xf32, #tpu.memory_space<vmem>>, vector<1x6xf32>,
    } else {
    }
    return
  }
  func.func @transform_0(%arg0: i32) -> (i32, i32) {
    %c0_i32 = arith.constant 0 : i32
    %c0_i32_0 = arith.constant 0 : i32
    return %c0_i32, %arg0 : i32, i32
  }
  func.func @transform_1(%arg0: i32) -> (i32, i32) {
    %c0_i32 = arith.constant 0 : i32
    %c0_i32_0 = arith.constant 0 : i32
    return %arg0, %c0_i32 : i32, i32
  }
  func.func @transform_2(%arg0: i32) -> (i32, i32) {
    %c0_i32 = arith.constant 0 : i32
    %c0_i32_0 = arith.constant 0 : i32
    %c0_i32_1 = arith.constant 0 : i32
    return %c0_i32, %c0_i32_0 : i32, i32
  }
  func.func @transform_3(%arg0: i32) -> (i32, i32) {
    %c0_i32 = arith.constant 0 : i32
    %c0_i32_0 = arith.constant 0 : i32
    %c0_i32_1 = arith.constant 0 : i32
    return %c0_i32, %c0_i32_0 : i32, i32
  }
  func.func @transform_4(%arg0: i32) -> (i32, i32) {
    %c0_i32 = arith.constant 0 : i32
    %c0_i32_0 = arith.constant 0 : i32
    %c0_i32_1 = arith.constant 0 : i32
    return %c0_i32, %c0_i32_0 : i32, i32
  }
  func.func @transform_5(%arg0: i32) -> (i32, i32) {
    %c0_i32 = arith.constant 0 : i32
    %c0_i32_0 = arith.constant 0 : i32
    %c0_i32_1 = arith.constant 0 : i32
    return %c0_i32, %c0_i32_0 : i32, i32
  }
}

</mosaic_0001>

<llo_original>
// kernel: qnetwork_cnn_forward.4
$region0: #{qnetwork_cnn_forward.4}
  #allocation0 [shape = 'u32[]', space=smem, size = 0x4, offset = 0x4, fixed_abs, tag = 'smem constant byte address 0x4 - core index']
  #allocation1 [shape = 'u32[72,128]{1,0:T(1,128)}', space=vmem, size = 0x9000, scoped, tag = 'internal scratch']
  %s0 = inlined_call_operand.vmem [shape: f32[32,192], index: 0, kind: input, shape index: {}]
  %s1 = inlined_call_operand.vmem [shape: f32[192,1989], index: 1, kind: input, shape index: {}]
  %s2 = inlined_call_operand.vmem [shape: f32[32,1], index: 2, kind: input, shape index: {}]
  %s3 = inlined_call_operand.vmem [shape: f32[32,1989], index: 3, kind: output, shape index: {}]
  %s4 = sld [smem:[#allocation0]]
  $region22: #{qnetwork_cnn_forward.4} parent=0
    _
  %s6 = ssub.s32 1, %s4
  %s7 = scalar_select 0, %s6, %s4
  // Predicated region
  $region2: #{qnetwork_cnn_forward.4} parent=0 // pred_check
    _
  $region3: #{qnetwork_cnn_forward.4} parent=0 // pred_check_branch
    %9 = sbr.rel (0) target = $region5
  $region4: #{qnetwork_cnn_forward.4} parent=0 // pred_region
    _
  $region5: #{qnetwork_cnn_forward.4} parent=0 // pred_fallthru
    _
  // Predicated region
  $region6: #{qnetwork_cnn_forward.4} parent=0 // pred_check
    _
  $region7: #{qnetwork_cnn_forward.4} parent=0 // pred_check_branch
    %11 = sbr.rel (0) target = $region9
  $region8: #{qnetwork_cnn_forward.4} parent=0 // pred_region
    _
  $region9: #{qnetwork_cnn_forward.4} parent=0 // pred_fallthru
    _
  // Predicated region
  $region10: #{qnetwork_cnn_forward.4} parent=0 // pred_check
    _
  $region11: #{qnetwork_cnn_forward.4} parent=0 // pred_check_branch
    %13 = sbr.rel (0) target = $region13
  $region12: #{qnetwork_cnn_forward.4} parent=0 // pred_region
    _
  $region13: #{qnetwork_cnn_forward.4} parent=0 // pred_fallthru
    _
  %v14 = vld [vmem:[%s0] sm:$0xff]
  %v15 = vld [vmem:[%s0 + $0x8] sm:$0xff]
  %v16 = vld [vmem:[%s0 + $0x10] sm:$0xff]
  %v17 = vld [vmem:[%s0 + $0x18] sm:$0xff]
  %v18 = vld [vmem:[%s0 + $0x20] sm:$0xff]
  %v19 = vld [vmem:[%s0 + $0x28] sm:$0xff]
  %v20 = vld [vmem:[%s0 + $0x30] sm:$0xff]
  %v21 = vld [vmem:[%s0 + $0x38] sm:$0xff]
  %v22 = vld [vmem:[%s1] sm:$0xff]
  %v23 = vld [vmem:[%s1 + $0x8] sm:$0xff]
  %v24 = vld [vmem:[%s1 + $0x10] sm:$0xff]
  %v25 = vld [vmem:[%s1 + $0x18] sm:$0xff]
  %v26 = vld [vmem:[%s1 + $0x20] sm:$0xff]
  %v27 = vld [vmem:[%s1 + $0x28] sm:$0xff]
  %v28 = vld [vmem:[%s1 + $0x30] sm:$0xff]
  %v29 = vld [vmem:[%s1 + $0x38] sm:$0xff]
  %v30 = vld [vmem:[%s1 + $0x40] sm:$0xff]
  %v31 = vld [vmem:[%s1 + $0x48] sm:$0xff]
  %v32 = vld [vmem:[%s1 + $0x50] sm:$0xff]
  %v33 = vld [vmem:[%s1 + $0x58] sm:$0xff]
  %v34 = vld [vmem:[%s1 + $0x60] sm:$0xff]
  %v35 = vld [vmem:[%s1 + $0x68] sm:$0xff]
  %v36 = vld [vmem:[%s1 + $0x70] sm:$0xff]
  %v37 = vld [vmem:[%s1 + $0x78] sm:$0xff]
  %v38 = vld [vmem:[%s1 + $0x80] sm:$0xff]
  %v39 = vld [vmem:[%s1 + $0x88] sm:$0xff]
  %v40 = vld [vmem:[%s1 + $0x90] sm:$0xff]
  %v41 = vld [vmem:[%s1 + $0x98] sm:$0xff]
  %v42 = vld [vmem:[%s1 + $0xa0] sm:$0xff]
  %v43 = vld [vmem:[%s1 + $0xa8] sm:$0xff]
  %v44 = vld [vmem:[%s1 + $0xb0] sm:$0xff]
  %v45 = vld [vmem:[%s1 + $0xb8] sm:$0xff]
  %v46 = vld [vmem:[%s1 + $0xc0] sm:$0xff]
  %v47 = vld [vmem:[%s1 + $0xc8] sm:$0xff]
  %v48 = vld [vmem:[%s1 + $0xd0] sm:$0xff]
  %v49 = vld [vmem:[%s1 + $0xd8] sm:$0xff]
  %v50 = vld [vmem:[%s1 + $0xe0] sm:$0xff]
  %v51 = vld [vmem:[%s1 + $0xe8] sm:$0xff]
  %v52 = vld [vmem:[%s1 + $0xf0] sm:$0xff]
  %v53 = vld [vmem:[%s1 + $0xf8] sm:$0xff]
  %v54 = vld [vmem:[%s1 + $0x100] sm:$0xff]
  %v55 = vld [vmem:[%s1 + $0x108] sm:$0xff]
  %v56 = vld [vmem:[%s1 + $0x110] sm:$0xff]
  %v57 = vld [vmem:[%s1 + $0x118] sm:$0xff]
  %v58 = vld [vmem:[%s1 + $0x120] sm:$0xff]
  %v59 = vld [vmem:[%s1 + $0x128] sm:$0xff]
  %v60 = vld [vmem:[%s1 + $0x130] sm:$0xff]
  %v61 = vld [vmem:[%s1 + $0x138] sm:$0xff]
  %v62 = vld [vmem:[%s1 + $0x140] sm:$0xff]
  %v63 = vld [vmem:[%s1 + $0x148] sm:$0xff]
  %v64 = vld [vmem:[%s1 + $0x150] sm:$0xff]
  %v65 = vld [vmem:[%s1 + $0x158] sm:$0xff]
  %v66 = vld [vmem:[%s1 + $0x160] sm:$0xff]
  %v67 = vld [vmem:[%s1 + $0x168] sm:$0xff]
  %v68 = vld [vmem:[%s1 + $0x170] sm:$0xff]
  %v69 = vld [vmem:[%s1 + $0x178] sm:$0xff]
  %v70 = vld [vmem:[%s1 + $0x180] sm:$0xff]
  %v71 = vld [vmem:[%s1 + $0x188] sm:$0xff]
  %v72 = vld [vmem:[%s1 + $0x190] sm:$0xff]
  %v73 = vld [vmem:[%s1 + $0x198] sm:$0xff]
  %v74 = vld [vmem:[%s1 + $0x1a0] sm:$0xff]
  %v75 = vld [vmem:[%s1 + $0x1a8] sm:$0xff]
  %v76 = vld [vmem:[%s1 + $0x1b0] sm:$0xff]
  %v77 = vld [vmem:[%s1 + $0x1b8] sm:$0xff]
  %v78 = vld [vmem:[%s1 + $0x1c0] sm:$0xff]
  %v79 = vld [vmem:[%s1 + $0x1c8] sm:$0xff]
  %v80 = vld [vmem:[%s1 + $0x1d0] sm:$0xff]
  %v81 = vld [vmem:[%s1 + $0x1d8] sm:$0xff]
  %v82 = vld [vmem:[%s1 + $0x1e0] sm:$0xff]
  %v83 = vld [vmem:[%s1 + $0x1e8] sm:$0xff]
  %v84 = vld [vmem:[%s1 + $0x1f0] sm:$0xff]
  %v85 = vld [vmem:[%s1 + $0x1f8] sm:$0xff]
  %v86 = vld [vmem:[%s1 + $0x200] sm:$0xff]
  %v87 = vld [vmem:[%s1 + $0x208] sm:$0xff]
  %v88 = vld [vmem:[%s1 + $0x210] sm:$0xff]
  %v89 = vld [vmem:[%s1 + $0x218] sm:$0xff]
  %v90 = vld [vmem:[%s1 + $0x220] sm:$0xff]
  %v91 = vld [vmem:[%s1 + $0x228] sm:$0xff]
  %v92 = vld [vmem:[%s1 + $0x230] sm:$0xff]
  %v93 = vld [vmem:[%s1 + $0x238] sm:$0xff]
  %v94 = vld [vmem:[%s1 + $0x240] sm:$0xff]
  %v95 = vld [vmem:[%s1 + $0x248] sm:$0xff]
  %v96 = vld [vmem:[%s1 + $0x250] sm:$0xff]
  %v97 = vld [vmem:[%s1 + $0x258] sm:$0xff]
  %v98 = vld [vmem:[%s1 + $0x260] sm:$0xff]
  %v99 = vld [vmem:[%s1 + $0x268] sm:$0xff]
  %v100 = vld [vmem:[%s1 + $0x270] sm:$0xff]
  %v101 = vld [vmem:[%s1 + $0x278] sm:$0xff]
  %v102 = vld [vmem:[%s1 + $0x280] sm:$0xff]
  %v103 = vld [vmem:[%s1 + $0x288] sm:$0xff]
  %v104 = vld [vmem:[%s1 + $0x290] sm:$0xff]
  %v105 = vld [vmem:[%s1 + $0x298] sm:$0xff]
  %v106 = vld [vmem:[%s1 + $0x2a0] sm:$0xff]
  %v107 = vld [vmem:[%s1 + $0x2a8] sm:$0xff]
  %v108 = vld [vmem:[%s1 + $0x2b0] sm:$0xff]
  %v109 = vld [vmem:[%s1 + $0x2b8] sm:$0xff]
  %v110 = vld [vmem:[%s1 + $0x2c0] sm:$0xff]
  %v111 = vld [vmem:[%s1 + $0x2c8] sm:$0xff]
  %v112 = vld [vmem:[%s1 + $0x2d0] sm:$0xff]
  %v113 = vld [vmem:[%s1 + $0x2d8] sm:$0xff]
  %v114 = vld [vmem:[%s1 + $0x2e0] sm:$0xff]
  %v115 = vld [vmem:[%s1 + $0x2e8] sm:$0xff]
  %v116 = vld [vmem:[%s1 + $0x2f0] sm:$0xff]
  %v117 = vld [vmem:[%s1 + $0x2f8] sm:$0xff]
  %v118 = vld [vmem:[%s1 + $0x300] sm:$0xff]
  %v119 = vld [vmem:[%s1 + $0x308] sm:$0xff]
  %v120 = vld [vmem:[%s1 + $0x310] sm:$0xff]
  %v121 = vld [vmem:[%s1 + $0x318] sm:$0xff]
  %v122 = vld [vmem:[%s1 + $0x320] sm:$0xff]
  %v123 = vld [vmem:[%s1 + $0x328] sm:$0xff]
  %v124 = vld [vmem:[%s1 + $0x330] sm:$0xff]
  %v125 = vld [vmem:[%s1 + $0x338] sm:$0xff]
  %v126 = vld [vmem:[%s1 + $0x340] sm:$0xff]
  %v127 = vld [vmem:[%s1 + $0x348] sm:$0xff]
  %v128 = vld [vmem:[%s1 + $0x350] sm:$0xff]
  %v129 = vld [vmem:[%s1 + $0x358] sm:$0xff]
  %v130 = vld [vmem:[%s1 + $0x360] sm:$0xff]
  %v131 = vld [vmem:[%s1 + $0x368] sm:$0xff]
  %v132 = vld [vmem:[%s1 + $0x370] sm:$0xff]
  %v133 = vld [vmem:[%s1 + $0x378] sm:$0xff]
  %v134 = vld [vmem:[%s1 + $0x380] sm:$0xff]
  %v135 = vld [vmem:[%s1 + $0x388] sm:$0xff]
  %v136 = vld [vmem:[%s1 + $0x390] sm:$0xff]
  %v137 = vld [vmem:[%s1 + $0x398] sm:$0xff]
  %v138 = vld [vmem:[%s1 + $0x3a0] sm:$0xff]
  %v139 = vld [vmem:[%s1 + $0x3a8] sm:$0xff]
  %v140 = vld [vmem:[%s1 + $0x3b0] sm:$0xff]
  %v141 = vld [vmem:[%s1 + $0x3b8] sm:$0xff]
  %v142 = vld [vmem:[%s1 + $0x3c0] sm:$0xff]
  %v143 = vld [vmem:[%s1 + $0x3c8] sm:$0xff]
  %v144 = vld [vmem:[%s1 + $0x3d0] sm:$0xff]
  %v145 = vld [vmem:[%s1 + $0x3d8] sm:$0xff]
  %v146 = vld [vmem:[%s1 + $0x3e0] sm:$0xff]
  %v147 = vld [vmem:[%s1 + $0x3e8] sm:$0xff]
  %v148 = vld [vmem:[%s1 + $0x3f0] sm:$0xff]
  %v149 = vld [vmem:[%s1 + $0x3f8] sm:$0xff]
  %v150 = vld [vmem:[%s1 + $0x400] sm:$0xff]
  %v151 = vld [vmem:[%s1 + $0x408] sm:$0xff]
  %v152 = vld [vmem:[%s1 + $0x410] sm:$0xff]
  %v153 = vld [vmem:[%s1 + $0x418] sm:$0xff]
  %v154 = vld [vmem:[%s1 + $0x420] sm:$0xff]
  %v155 = vld [vmem:[%s1 + $0x428] sm:$0xff]
  %v156 = vld [vmem:[%s1 + $0x430] sm:$0xff]
  %v157 = vld [vmem:[%s1 + $0x438] sm:$0xff]
  %v158 = vld [vmem:[%s1 + $0x440] sm:$0xff]
  %v159 = vld [vmem:[%s1 + $0x448] sm:$0xff]
  %v160 = vld [vmem:[%s1 + $0x450] sm:$0xff]
  %v161 = vld [vmem:[%s1 + $0x458] sm:$0xff]
  %v162 = vld [vmem:[%s1 + $0x460] sm:$0xff]
  %v163 = vld [vmem:[%s1 + $0x468] sm:$0xff]
  %v164 = vld [vmem:[%s1 + $0x470] sm:$0xff]
  %v165 = vld [vmem:[%s1 + $0x478] sm:$0xff]
  %v166 = vld [vmem:[%s1 + $0x480] sm:$0xff]
  %v167 = vld [vmem:[%s1 + $0x488] sm:$0xff]
  %v168 = vld [vmem:[%s1 + $0x490] sm:$0xff]
  %v169 = vld [vmem:[%s1 + $0x498] sm:$0xff]
  %v170 = vld [vmem:[%s1 + $0x4a0] sm:$0xff]
  %v171 = vld [vmem:[%s1 + $0x4a8] sm:$0xff]
  %v172 = vld [vmem:[%s1 + $0x4b0] sm:$0xff]
  %v173 = vld [vmem:[%s1 + $0x4b8] sm:$0xff]
  %v174 = vld [vmem:[%s1 + $0x4c0] sm:$0xff]
  %v175 = vld [vmem:[%s1 + $0x4c8] sm:$0xff]
  %v176 = vld [vmem:[%s1 + $0x4d0] sm:$0xff]
  %v177 = vld [vmem:[%s1 + $0x4d8] sm:$0xff]
  %v178 = vld [vmem:[%s1 + $0x4e0] sm:$0xff]
  %v179 = vld [vmem:[%s1 + $0x4e8] sm:$0xff]
  %v180 = vld [vmem:[%s1 + $0x4f0] sm:$0xff]
  %v181 = vld [vmem:[%s1 + $0x4f8] sm:$0xff]
  %v182 = vld [vmem:[%s1 + $0x500] sm:$0xff]
  %v183 = vld [vmem:[%s1 + $0x508] sm:$0xff]
  %v184 = vld [vmem:[%s1 + $0x510] sm:$0xff]
  %v185 = vld [vmem:[%s1 + $0x518] sm:$0xff]
  %v186 = vld [vmem:[%s1 + $0x520] sm:$0xff]
  %v187 = vld [vmem:[%s1 + $0x528] sm:$0xff]
  %v188 = vld [vmem:[%s1 + $0x530] sm:$0xff]
  %v189 = vld [vmem:[%s1 + $0x538] sm:$0xff]
  %v190 = vld [vmem:[%s1 + $0x540] sm:$0xff]
  %v191 = vld [vmem:[%s1 + $0x548] sm:$0xff]
  %v192 = vld [vmem:[%s1 + $0x550] sm:$0xff]
  %v193 = vld [vmem:[%s1 + $0x558] sm:$0xff]
  %v194 = vld [vmem:[%s1 + $0x560] sm:$0xff]
  %v195 = vld [vmem:[%s1 + $0x568] sm:$0xff]
  %v196 = vld [vmem:[%s1 + $0x570] sm:$0xff]
  %v197 = vld [vmem:[%s1 + $0x578] sm:$0xff]
  %v198 = vld [vmem:[%s1 + $0x580] sm:$0xff]
  %v199 = vld [vmem:[%s1 + $0x588] sm:$0xff]
  %v200 = vld [vmem:[%s1 + $0x590] sm:$0xff]
  %v201 = vld [vmem:[%s1 + $0x598] sm:$0xff]
  %v202 = vld [vmem:[%s1 + $0x5a0] sm:$0xff]
  %v203 = vld [vmem:[%s1 + $0x5a8] sm:$0xff]
  %v204 = vld [vmem:[%s1 + $0x5b0] sm:$0xff]
  %v205 = vld [vmem:[%s1 + $0x5b8] sm:$0xff]
  %v206 = vld [vmem:[%s1 + $0x5c0] sm:$0xff]
  %v207 = vld [vmem:[%s1 + $0x5c8] sm:$0xff]
  %v208 = vld [vmem:[%s1 + $0x5d0] sm:$0xff]
  %v209 = vld [vmem:[%s1 + $0x5d8] sm:$0xff]
  %v210 = vld [vmem:[%s1 + $0x5e0] sm:$0xff]
  %v211 = vld [vmem:[%s1 + $0x5e8] sm:$0xff]
  %v212 = vld [vmem:[%s1 + $0x5f0] sm:$0xff]
  %v213 = vld [vmem:[%s1 + $0x5f8] sm:$0xff]
  %v214 = vld [vmem:[%s1 + $0x600] sm:$0xff]
  %v215 = vld [vmem:[%s1 + $0x608] sm:$0xff]
  %v216 = vld [vmem:[%s1 + $0x610] sm:$0xff]
  %v217 = vld [vmem:[%s1 + $0x618] sm:$0xff]
  %v218 = vld [vmem:[%s1 + $0x620] sm:$0xff]
  %v219 = vld [vmem:[%s1 + $0x628] sm:$0xff]
  %v220 = vld [vmem:[%s1 + $0x630] sm:$0xff]
  %v221 = vld [vmem:[%s1 + $0x638] sm:$0xff]
  %v222 = vld [vmem:[%s1 + $0x640] sm:$0xff]
  %v223 = vld [vmem:[%s1 + $0x648] sm:$0xff]
  %v224 = vld [vmem:[%s1 + $0x650] sm:$0xff]
  %v225 = vld [vmem:[%s1 + $0x658] sm:$0xff]
  %v226 = vld [vmem:[%s1 + $0x660] sm:$0xff]
  %v227 = vld [vmem:[%s1 + $0x668] sm:$0xff]
  %v228 = vld [vmem:[%s1 + $0x670] sm:$0xff]
  %v229 = vld [vmem:[%s1 + $0x678] sm:$0xff]
  %v230 = vld [vmem:[%s1 + $0x680] sm:$0xff]
  %v231 = vld [vmem:[%s1 + $0x688] sm:$0xff]
  %v232 = vld [vmem:[%s1 + $0x690] sm:$0xff]
  %v233 = vld [vmem:[%s1 + $0x698] sm:$0xff]
  %v234 = vld [vmem:[%s1 + $0x6a0] sm:$0xff]
  %v235 = vld [vmem:[%s1 + $0x6a8] sm:$0xff]
  %v236 = vld [vmem:[%s1 + $0x6b0] sm:$0xff]
  %v237 = vld [vmem:[%s1 + $0x6b8] sm:$0xff]
  %v238 = vld [vmem:[%s1 + $0x6c0] sm:$0xff]
  %v239 = vld [vmem:[%s1 + $0x6c8] sm:$0xff]
  %v240 = vld [vmem:[%s1 + $0x6d0] sm:$0xff]
  %v241 = vld [vmem:[%s1 + $0x6d8] sm:$0xff]
  %v242 = vld [vmem:[%s1 + $0x6e0] sm:$0xff]
  %v243 = vld [vmem:[%s1 + $0x6e8] sm:$0xff]
  %v244 = vld [vmem:[%s1 + $0x6f0] sm:$0xff]
  %v245 = vld [vmem:[%s1 + $0x6f8] sm:$0xff]
  %v246 = vld [vmem:[%s1 + $0x700] sm:$0xff]
  %v247 = vld [vmem:[%s1 + $0x708] sm:$0xff]
  %v248 = vld [vmem:[%s1 + $0x710] sm:$0xff]
  %v249 = vld [vmem:[%s1 + $0x718] sm:$0xff]
  %v250 = vld [vmem:[%s1 + $0x720] sm:$0xff]
  %v251 = vld [vmem:[%s1 + $0x728] sm:$0xff]
  %v252 = vld [vmem:[%s1 + $0x730] sm:$0xff]
  %v253 = vld [vmem:[%s1 + $0x738] sm:$0xff]
  %v254 = vld [vmem:[%s1 + $0x740] sm:$0xff]
  %v255 = vld [vmem:[%s1 + $0x748] sm:$0xff]
  %v256 = vld [vmem:[%s1 + $0x750] sm:$0xff]
  %v257 = vld [vmem:[%s1 + $0x758] sm:$0xff]
  %v258 = vld [vmem:[%s1 + $0x760] sm:$0xff]
  %v259 = vld [vmem:[%s1 + $0x768] sm:$0xff]
  %v260 = vld [vmem:[%s1 + $0x770] sm:$0xff]
  %v261 = vld [vmem:[%s1 + $0x778] sm:$0xff]
  %v262 = vld [vmem:[%s1 + $0x780] sm:$0xff]
  %v263 = vld [vmem:[%s1 + $0x788] sm:$0xff]
  %v264 = vld [vmem:[%s1 + $0x790] sm:$0xff]
  %v265 = vld [vmem:[%s1 + $0x798] sm:$0xff]
  %v266 = vld [vmem:[%s1 + $0x7a0] sm:$0xff]
  %v267 = vld [vmem:[%s1 + $0x7a8] sm:$0xff]
  %v268 = vld [vmem:[%s1 + $0x7b0] sm:$0xff]
  %v269 = vld [vmem:[%s1 + $0x7b8] sm:$0xff]
  %v270 = vld [vmem:[%s1 + $0x7c0] sm:$0xff]
  %v271 = vld [vmem:[%s1 + $0x7c8] sm:$0xff]
  %v272 = vld [vmem:[%s1 + $0x7d0] sm:$0xff]
  %v273 = vld [vmem:[%s1 + $0x7d8] sm:$0xff]
  %v274 = vld [vmem:[%s1 + $0x7e0] sm:$0xff]
  %v275 = vld [vmem:[%s1 + $0x7e8] sm:$0xff]
  %v276 = vld [vmem:[%s1 + $0x7f0] sm:$0xff]
  %v277 = vld [vmem:[%s1 + $0x7f8] sm:$0xff]
  %v278 = vld [vmem:[%s1 + $0x800] sm:$0xff]
  %v279 = vld [vmem:[%s1 + $0x808] sm:$0xff]
  %v280 = vld [vmem:[%s1 + $0x810] sm:$0xff]
  %v281 = vld [vmem:[%s1 + $0x818] sm:$0xff]
  %v282 = vld [vmem:[%s1 + $0x820] sm:$0xff]
  %v283 = vld [vmem:[%s1 + $0x828] sm:$0xff]
  %v284 = vld [vmem:[%s1 + $0x830] sm:$0xff]
  %v285 = vld [vmem:[%s1 + $0x838] sm:$0xff]
  %v286 = vld [vmem:[%s1 + $0x840] sm:$0xff]
  %v287 = vld [vmem:[%s1 + $0x848] sm:$0xff]
  %v288 = vld [vmem:[%s1 + $0x850] sm:$0xff]
  %v289 = vld [vmem:[%s1 + $0x858] sm:$0xff]
  %v290 = vld [vmem:[%s1 + $0x860] sm:$0xff]
  %v291 = vld [vmem:[%s1 + $0x868] sm:$0xff]
  %v292 = vld [vmem:[%s1 + $0x870] sm:$0xff]
  %v293 = vld [vmem:[%s1 + $0x878] sm:$0xff]
  %v294 = vld [vmem:[%s1 + $0x880] sm:$0xff]
  %v295 = vld [vmem:[%s1 + $0x888] sm:$0xff]
  %v296 = vld [vmem:[%s1 + $0x890] sm:$0xff]
  %v297 = vld [vmem:[%s1 + $0x898] sm:$0xff]
  %v298 = vld [vmem:[%s1 + $0x8a0] sm:$0xff]
  %v299 = vld [vmem:[%s1 + $0x8a8] sm:$0xff]
  %v300 = vld [vmem:[%s1 + $0x8b0] sm:$0xff]
  %v301 = vld [vmem:[%s1 + $0x8b8] sm:$0xff]
  %v302 = vld [vmem:[%s1 + $0x8c0] sm:$0xff]
  %v303 = vld [vmem:[%s1 + $0x8c8] sm:$0xff]
  %v304 = vld [vmem:[%s1 + $0x8d0] sm:$0xff]
  %v305 = vld [vmem:[%s1 + $0x8d8] sm:$0xff]
  %v306 = vld [vmem:[%s1 + $0x8e0] sm:$0xff]
  %v307 = vld [vmem:[%s1 + $0x8e8] sm:$0xff]
  %v308 = vld [vmem:[%s1 + $0x8f0] sm:$0xff]
  %v309 = vld [vmem:[%s1 + $0x8f8] sm:$0xff]
  %v310 = vld [vmem:[%s1 + $0x900] sm:$0xff]
  %v311 = vld [vmem:[%s1 + $0x908] sm:$0xff]
  %v312 = vld [vmem:[%s1 + $0x910] sm:$0xff]
  %v313 = vld [vmem:[%s1 + $0x918] sm:$0xff]
  %v314 = vld [vmem:[%s1 + $0x920] sm:$0xff]
  %v315 = vld [vmem:[%s1 + $0x928] sm:$0xff]
  %v316 = vld [vmem:[%s1 + $0x930] sm:$0xff]
  %v317 = vld [vmem:[%s1 + $0x938] sm:$0xff]
  %v318 = vld [vmem:[%s1 + $0x940] sm:$0xff]
  %v319 = vld [vmem:[%s1 + $0x948] sm:$0xff]
  %v320 = vld [vmem:[%s1 + $0x950] sm:$0xff]
  %v321 = vld [vmem:[%s1 + $0x958] sm:$0xff]
  %v322 = vld [vmem:[%s1 + $0x960] sm:$0xff]
  %v323 = vld [vmem:[%s1 + $0x968] sm:$0xff]
  %v324 = vld [vmem:[%s1 + $0x970] sm:$0xff]
  %v325 = vld [vmem:[%s1 + $0x978] sm:$0xff]
  %v326 = vld [vmem:[%s1 + $0x980] sm:$0xff]
  %v327 = vld [vmem:[%s1 + $0x988] sm:$0xff]
  %v328 = vld [vmem:[%s1 + $0x990] sm:$0xff]
  %v329 = vld [vmem:[%s1 + $0x998] sm:$0xff]
  %v330 = vld [vmem:[%s1 + $0x9a0] sm:$0xff]
  %v331 = vld [vmem:[%s1 + $0x9a8] sm:$0xff]
  %v332 = vld [vmem:[%s1 + $0x9b0] sm:$0xff]
  %v333 = vld [vmem:[%s1 + $0x9b8] sm:$0xff]
  %v334 = vld [vmem:[%s1 + $0x9c0] sm:$0xff]
  %v335 = vld [vmem:[%s1 + $0x9c8] sm:$0xff]
  %v336 = vld [vmem:[%s1 + $0x9d0] sm:$0xff]
  %v337 = vld [vmem:[%s1 + $0x9d8] sm:$0xff]
  %v338 = vld [vmem:[%s1 + $0x9e0] sm:$0xff]
  %v339 = vld [vmem:[%s1 + $0x9e8] sm:$0xff]
  %v340 = vld [vmem:[%s1 + $0x9f0] sm:$0xff]
  %v341 = vld [vmem:[%s1 + $0x9f8] sm:$0xff]
  %v342 = vld [vmem:[%s1 + $0xa00] sm:$0xff]
  %v343 = vld [vmem:[%s1 + $0xa08] sm:$0xff]
  %v344 = vld [vmem:[%s1 + $0xa10] sm:$0xff]
  %v345 = vld [vmem:[%s1 + $0xa18] sm:$0xff]
  %v346 = vld [vmem:[%s1 + $0xa20] sm:$0xff]
  %v347 = vld [vmem:[%s1 + $0xa28] sm:$0xff]
  %v348 = vld [vmem:[%s1 + $0xa30] sm:$0xff]
  %v349 = vld [vmem:[%s1 + $0xa38] sm:$0xff]
  %v350 = vld [vmem:[%s1 + $0xa40] sm:$0xff]
  %v351 = vld [vmem:[%s1 + $0xa48] sm:$0xff]
  %v352 = vld [vmem:[%s1 + $0xa50] sm:$0xff]
  %v353 = vld [vmem:[%s1 + $0xa58] sm:$0xff]
  %v354 = vld [vmem:[%s1 + $0xa60] sm:$0xff]
  %v355 = vld [vmem:[%s1 + $0xa68] sm:$0xff]
  %v356 = vld [vmem:[%s1 + $0xa70] sm:$0xff]
  %v357 = vld [vmem:[%s1 + $0xa78] sm:$0xff]
  %v358 = vld [vmem:[%s1 + $0xa80] sm:$0xff]
  %v359 = vld [vmem:[%s1 + $0xa88] sm:$0xff]
  %v360 = vld [vmem:[%s1 + $0xa90] sm:$0xff]
  %v361 = vld [vmem:[%s1 + $0xa98] sm:$0xff]
  %v362 = vld [vmem:[%s1 + $0xaa0] sm:$0xff]
  %v363 = vld [vmem:[%s1 + $0xaa8] sm:$0xff]
  %v364 = vld [vmem:[%s1 + $0xab0] sm:$0xff]
  %v365 = vld [vmem:[%s1 + $0xab8] sm:$0xff]
  %v366 = vld [vmem:[%s1 + $0xac0] sm:$0xff]
  %v367 = vld [vmem:[%s1 + $0xac8] sm:$0xff]
  %v368 = vld [vmem:[%s1 + $0xad0] sm:$0xff]
  %v369 = vld [vmem:[%s1 + $0xad8] sm:$0xff]
  %v370 = vld [vmem:[%s1 + $0xae0] sm:$0xff]
  %v371 = vld [vmem:[%s1 + $0xae8] sm:$0xff]
  %v372 = vld [vmem:[%s1 + $0xaf0] sm:$0xff]
  %v373 = vld [vmem:[%s1 + $0xaf8] sm:$0xff]
  %v374 = vld [vmem:[%s1 + $0xb00] sm:$0xff]
  %v375 = vld [vmem:[%s1 + $0xb08] sm:$0xff]
  %v376 = vld [vmem:[%s1 + $0xb10] sm:$0xff]
  %v377 = vld [vmem:[%s1 + $0xb18] sm:$0xff]
  %v378 = vld [vmem:[%s1 + $0xb20] sm:$0xff]
  %v379 = vld [vmem:[%s1 + $0xb28] sm:$0xff]
  %v380 = vld [vmem:[%s1 + $0xb30] sm:$0xff]
  %v381 = vld [vmem:[%s1 + $0xb38] sm:$0xff]
  %v382 = vld [vmem:[%s1 + $0xb40] sm:$0xff]
  %v383 = vld [vmem:[%s1 + $0xb48] sm:$0xff]
  %v384 = vld [vmem:[%s1 + $0xb50] sm:$0xff]
  %v385 = vld [vmem:[%s1 + $0xb58] sm:$0xff]
  %v386 = vld [vmem:[%s1 + $0xb60] sm:$0xff]
  %v387 = vld [vmem:[%s1 + $0xb68] sm:$0xff]
  %v388 = vld [vmem:[%s1 + $0xb70] sm:$0xff]
  %v389 = vld [vmem:[%s1 + $0xb78] sm:$0xff]
  %v390 = vld [vmem:[%s1 + $0xb80] sm:$0xff]
  %v391 = vld [vmem:[%s1 + $0xb88] sm:$0xff]
  %v392 = vld [vmem:[%s1 + $0xb90] sm:$0xff]
  %v393 = vld [vmem:[%s1 + $0xb98] sm:$0xff]
  %v394 = vld [vmem:[%s1 + $0xba0] sm:$0xff]
  %v395 = vld [vmem:[%s1 + $0xba8] sm:$0xff]
  %v396 = vld [vmem:[%s1 + $0xbb0] sm:$0xff]
  %v397 = vld [vmem:[%s1 + $0xbb8] sm:$0xff]
  %v398 = vld [vmem:[%s1 + $0xbc0] sm:$0xff]
  %v399 = vld [vmem:[%s1 + $0xbc8] sm:$0xff]
  %v400 = vld [vmem:[%s1 + $0xbd0] sm:$0xff]
  %v401 = vld [vmem:[%s1 + $0xbd8] sm:$0xff]
  %v402 = vld [vmem:[%s1 + $0xbe0] sm:$0xff]
  %v403 = vld [vmem:[%s1 + $0xbe8] sm:$0xff]
  %v404 = vld [vmem:[%s1 + $0xbf0] sm:$0xff]
  %v405 = vld [vmem:[%s1 + $0xbf8] sm:$0xff]
  %v406 = vld [vmem:[%s2] sm:$0xff]
  %v407 = vld [vmem:[%s2 + $0x8] sm:$0xff]
  %v408 = vld [vmem:[%s2 + $0x10] sm:$0xff]
  %v409 = vld [vmem:[%s2 + $0x18] sm:$0xff]
  %411 = vset.pattern.permute.xlu0 0
  %412 = vperm.xlu0 %411, %v406
  %v413 = vpop.permute.xlu0 %412
  %416 = vset.pattern.permute.xlu0 0
  %417 = vperm.xlu0 %416, %v407
  %v418 = vpop.permute.xlu0 %417
  %421 = vset.pattern.permute.xlu0 0
  %422 = vperm.xlu0 %421, %v408
  %v423 = vpop.permute.xlu0 %422
  %426 = vset.pattern.permute.xlu0 0
  %427 = vperm.xlu0 %426, %v409
  %v428 = vpop.permute.xlu0 %427
  %vm430 = vcmask 523264
  %v432 = vsel %vm430, %v15, 0
  %v435 = vsel %vm430, %v17, 0
  %v438 = vsel %vm430, %v19, 0
  %v441 = vsel %vm430, %v21, 0
  %443 = vmatpush.msra.mxu0 %v262
  %444 = vmatpush.msra.mxu0 %v246
  %445 = vmatpush.msra.mxu0 %v230
  %446 = vmatpush.msra.mxu0 %v214
  %447 = vmatpush.msra.mxu0 %v198
  %448 = vmatpush.msra.mxu0 %v182
  %449 = vmatpush.msra.mxu0 %v166
  %450 = vmatpush.msra.mxu0 %v150
  %451 = vmatpush.msra.mxu0 %v134
  %452 = vmatpush.msra.mxu0 %v118
  %453 = vmatpush.msra.mxu0 %v102
  %454 = vmatpush.msra.mxu0 %v86
  %455 = vmatpush.msra.mxu0 %v70
  %456 = vmatpush.msra.mxu0 %v54
  %457 = vmatpush.msra.mxu0 %v38
  %458 = vmatpush.msra.mxu0 %v22
  %459 = vmatmul.f32.gmra.mxu0 %v14
  %v460 = vpop.f32.mrf.mxu0
  %v461 = vadd.f32 %v413, %v460
  %462 = vmatmul.f32.gmra.mxu0 %v16
  %v463 = vpop.f32.mrf.mxu0
  %v464 = vadd.f32 %v418, %v463
  %465 = vmatmul.f32.gmra.mxu0 %v18
  %v466 = vpop.f32.mrf.mxu0
  %v467 = vadd.f32 %v423, %v466
  %468 = vmatmul.f32.gmra.mxu0 %v20
  %v469 = vpop.f32.mrf.mxu0
  %v470 = vadd.f32 %v428, %v469
  %471 = vdwg.mxu0
  %472 = vmatpush.msra.mxu0 0.0
  %473 = vmatpush.msra.mxu0 0.0
  %474 = vmatpush.msra.mxu0 0.0
  %475 = vmatpush.msra.mxu0 0.0
  %476 = vmatpush.msra.mxu0 0.0
  %477 = vmatpush.msra.mxu0 0.0
  %478 = vmatpush.msra.mxu0 0.0
  %479 = vmatpush.msra.mxu0 0.0
  %480 = vmatpush.msra.mxu0 %v390
  %481 = vmatpush.msra.mxu0 %v374
  %482 = vmatpush.msra.mxu0 %v358
  %483 = vmatpush.msra.mxu0 %v342
  %484 = vmatpush.msra.mxu0 %v326
  %485 = vmatpush.msra.mxu0 %v310
  %486 = vmatpush.msra.mxu0 %v294
  %487 = vmatpush.msra.mxu0 %v278
  %488 = vmatmul.f32.gmra.mxu0 %v432
  %v489 = vpop.f32.mrf.mxu0
  %v490 = vadd.f32 %v461, %v489
  %491 = vmatmul.f32.gmra.mxu0 %v435
  %v492 = vpop.f32.mrf.mxu0
  %v493 = vadd.f32 %v464, %v492
  %494 = vmatmul.f32.gmra.mxu0 %v438
  %v495 = vpop.f32.mrf.mxu0
  %v496 = vadd.f32 %v467, %v495
  %497 = vmatmul.f32.gmra.mxu0 %v441
  %v498 = vpop.f32.mrf.mxu0
  %v499 = vadd.f32 %v470, %v498
  %500 = vdwg.mxu0
  %501 = vmatpush.msra.mxu0 %v263
  %502 = vmatpush.msra.mxu0 %v247
  %503 = vmatpush.msra.mxu0 %v231
  %504 = vmatpush.msra.mxu0 %v215
  %505 = vmatpush.msra.mxu0 %v199
  %506 = vmatpush.msra.mxu0 %v183
  %507 = vmatpush.msra.mxu0 %v167
  %508 = vmatpush.msra.mxu0 %v151
  %509 = vmatpush.msra.mxu0 %v135
  %510 = vmatpush.msra.mxu0 %v119
  %511 = vmatpush.msra.mxu0 %v103
  %512 = vmatpush.msra.mxu0 %v87
  %513 = vmatpush.msra.mxu0 %v71
  %514 = vmatpush.msra.mxu0 %v55
  %515 = vmatpush.msra.mxu0 %v39
  %516 = vmatpush.msra.mxu0 %v23
  %517 = vmatmul.f32.gmra.mxu0 %v14
  %v518 = vpop.f32.mrf.mxu0
  %v519 = vadd.f32 %v413, %v518
  %520 = vmatmul.f32.gmra.mxu0 %v16
  %v521 = vpop.f32.mrf.mxu0
  %v522 = vadd.f32 %v418, %v521
  %523 = vmatmul.f32.gmra.mxu0 %v18
  %v524 = vpop.f32.mrf.mxu0
  %v525 = vadd.f32 %v423, %v524
  %526 = vmatmul.f32.gmra.mxu0 %v20
  %v527 = vpop.f32.mrf.mxu0
  %v528 = vadd.f32 %v428, %v527
  %529 = vdwg.mxu0
  %530 = vmatpush.msra.mxu0 0.0
  %531 = vmatpush.msra.mxu0 0.0
  %532 = vmatpush.msra.mxu0 0.0
  %533 = vmatpush.msra.mxu0 0.0
  %534 = vmatpush.msra.mxu0 0.0
  %535 = vmatpush.msra.mxu0 0.0
  %536 = vmatpush.msra.mxu0 0.0
  %537 = vmatpush.msra.mxu0 0.0
  %538 = vmatpush.msra.mxu0 %v391
  %539 = vmatpush.msra.mxu0 %v375
  %540 = vmatpush.msra.mxu0 %v359
  %541 = vmatpush.msra.mxu0 %v343
  %542 = vmatpush.msra.mxu0 %v327
  %543 = vmatpush.msra.mxu0 %v311
  %544 = vmatpush.msra.mxu0 %v295
  %545 = vmatpush.msra.mxu0 %v279
  %546 = vmatmul.f32.gmra.mxu0 %v432
  %v547 = vpop.f32.mrf.mxu0
  %v548 = vadd.f32 %v519, %v547
  %549 = vmatmul.f32.gmra.mxu0 %v435
  %v550 = vpop.f32.mrf.mxu0
  %v551 = vadd.f32 %v522, %v550
  %552 = vmatmul.f32.gmra.mxu0 %v438
  %v553 = vpop.f32.mrf.mxu0
  %v554 = vadd.f32 %v525, %v553
  %555 = vmatmul.f32.gmra.mxu0 %v441
  %v556 = vpop.f32.mrf.mxu0
  %v557 = vadd.f32 %v528, %v556
  %558 = vdwg.mxu0
  %559 = vmatpush.msra.mxu0 %v264
  %560 = vmatpush.msra.mxu0 %v248
  %561 = vmatpush.msra.mxu0 %v232
  %562 = vmatpush.msra.mxu0 %v216
  %563 = vmatpush.msra.mxu0 %v200
  %564 = vmatpush.msra.mxu0 %v184
  %565 = vmatpush.msra.mxu0 %v168
  %566 = vmatpush.msra.mxu0 %v152
  %567 = vmatpush.msra.mxu0 %v136
  %568 = vmatpush.msra.mxu0 %v120
  %569 = vmatpush.msra.mxu0 %v104
  %570 = vmatpush.msra.mxu0 %v88
  %571 = vmatpush.msra.mxu0 %v72
  %572 = vmatpush.msra.mxu0 %v56
  %573 = vmatpush.msra.mxu0 %v40
  %574 = vmatpush.msra.mxu0 %v24
  %575 = vmatmul.f32.gmra.mxu0 %v14
  %v576 = vpop.f32.mrf.mxu0
  %v577 = vadd.f32 %v413, %v576
  %578 = vmatmul.f32.gmra.mxu0 %v16
  %v579 = vpop.f32.mrf.mxu0
  %v580 = vadd.f32 %v418, %v579
  %581 = vmatmul.f32.gmra.mxu0 %v18
  %v582 = vpop.f32.mrf.mxu0
  %v583 = vadd.f32 %v423, %v582
  %584 = vmatmul.f32.gmra.mxu0 %v20
  %v585 = vpop.f32.mrf.mxu0
  %v586 = vadd.f32 %v428, %v585
  %587 = vdwg.mxu0
  %588 = vmatpush.msra.mxu0 0.0
  %589 = vmatpush.msra.mxu0 0.0
  %590 = vmatpush.msra.mxu0 0.0
  %591 = vmatpush.msra.mxu0 0.0
  %592 = vmatpush.msra.mxu0 0.0
  %593 = vmatpush.msra.mxu0 0.0
  %594 = vmatpush.msra.mxu0 0.0
  %595 = vmatpush.msra.mxu0 0.0
  %596 = vmatpush.msra.mxu0 %v392
  %597 = vmatpush.msra.mxu0 %v376
  %598 = vmatpush.msra.mxu0 %v360
  %599 = vmatpush.msra.mxu0 %v344
  %600 = vmatpush.msra.mxu0 %v328
  %601 = vmatpush.msra.mxu0 %v312
  %602 = vmatpush.msra.mxu0 %v296
  %603 = vmatpush.msra.mxu0 %v280
  %604 = vmatmul.f32.gmra.mxu0 %v432
  %v605 = vpop.f32.mrf.mxu0
  %v606 = vadd.f32 %v577, %v605
  %607 = vmatmul.f32.gmra.mxu0 %v435
  %v608 = vpop.f32.mrf.mxu0
  %v609 = vadd.f32 %v580, %v608
  %610 = vmatmul.f32.gmra.mxu0 %v438
  %v611 = vpop.f32.mrf.mxu0
  %v612 = vadd.f32 %v583, %v611
  %613 = vmatmul.f32.gmra.mxu0 %v441
  %v614 = vpop.f32.mrf.mxu0
  %v615 = vadd.f32 %v586, %v614
  %616 = vdwg.mxu0
  %617 = vmatpush.msra.mxu0 %v265
  %618 = vmatpush.msra.mxu0 %v249
  %619 = vmatpush.msra.mxu0 %v233
  %620 = vmatpush.msra.mxu0 %v217
  %621 = vmatpush.msra.mxu0 %v201
  %622 = vmatpush.msra.mxu0 %v185
  %623 = vmatpush.msra.mxu0 %v169
  %624 = vmatpush.msra.mxu0 %v153
  %625 = vmatpush.msra.mxu0 %v137
  %626 = vmatpush.msra.mxu0 %v121
  %627 = vmatpush.msra.mxu0 %v105
  %628 = vmatpush.msra.mxu0 %v89
  %629 = vmatpush.msra.mxu0 %v73
  %630 = vmatpush.msra.mxu0 %v57
  %631 = vmatpush.msra.mxu0 %v41
  %632 = vmatpush.msra.mxu0 %v25
  %633 = vmatmul.f32.gmra.mxu0 %v14
  %v634 = vpop.f32.mrf.mxu0
  %v635 = vadd.f32 %v413, %v634
  %636 = vmatmul.f32.gmra.mxu0 %v16
  %v637 = vpop.f32.mrf.mxu0
  %v638 = vadd.f32 %v418, %v637
  %639 = vmatmul.f32.gmra.mxu0 %v18
  %v640 = vpop.f32.mrf.mxu0
  %v641 = vadd.f32 %v423, %v640
  %642 = vmatmul.f32.gmra.mxu0 %v20
  %v643 = vpop.f32.mrf.mxu0
  %v644 = vadd.f32 %v428, %v643
  %645 = vdwg.mxu0
  %646 = vmatpush.msra.mxu0 0.0
  %647 = vmatpush.msra.mxu0 0.0
  %648 = vmatpush.msra.mxu0 0.0
  %649 = vmatpush.msra.mxu0 0.0
  %650 = vmatpush.msra.mxu0 0.0
  %651 = vmatpush.msra.mxu0 0.0
  %652 = vmatpush.msra.mxu0 0.0
  %653 = vmatpush.msra.mxu0 0.0
  %654 = vmatpush.msra.mxu0 %v393
  %655 = vmatpush.msra.mxu0 %v377
  %656 = vmatpush.msra.mxu0 %v361
  %657 = vmatpush.msra.mxu0 %v345
  %658 = vmatpush.msra.mxu0 %v329
  %659 = vmatpush.msra.mxu0 %v313
  %660 = vmatpush.msra.mxu0 %v297
  %661 = vmatpush.msra.mxu0 %v281
  %662 = vmatmul.f32.gmra.mxu0 %v432
  %v663 = vpop.f32.mrf.mxu0
  %v664 = vadd.f32 %v635, %v663
  %665 = vmatmul.f32.gmra.mxu0 %v435
  %v666 = vpop.f32.mrf.mxu0
  %v667 = vadd.f32 %v638, %v666
  %668 = vmatmul.f32.gmra.mxu0 %v438
  %v669 = vpop.f32.mrf.mxu0
  %v670 = vadd.f32 %v641, %v669
  %671 = vmatmul.f32.gmra.mxu0 %v441
  %v672 = vpop.f32.mrf.mxu0
  %v673 = vadd.f32 %v644, %v672
  %674 = vdwg.mxu0
  %675 = vmatpush.msra.mxu0 %v266
  %676 = vmatpush.msra.mxu0 %v250
  %677 = vmatpush.msra.mxu0 %v234
  %678 = vmatpush.msra.mxu0 %v218
  %679 = vmatpush.msra.mxu0 %v202
  %680 = vmatpush.msra.mxu0 %v186
  %681 = vmatpush.msra.mxu0 %v170
  %682 = vmatpush.msra.mxu0 %v154
  %683 = vmatpush.msra.mxu0 %v138
  %684 = vmatpush.msra.mxu0 %v122
  %685 = vmatpush.msra.mxu0 %v106
  %686 = vmatpush.msra.mxu0 %v90
  %687 = vmatpush.msra.mxu0 %v74
  %688 = vmatpush.msra.mxu0 %v58
  %689 = vmatpush.msra.mxu0 %v42
  %690 = vmatpush.msra.mxu0 %v26
  %691 = vmatmul.f32.gmra.mxu0 %v14
  %v692 = vpop.f32.mrf.mxu0
  %v693 = vadd.f32 %v413, %v692
  %694 = vmatmul.f32.gmra.mxu0 %v16
  %v695 = vpop.f32.mrf.mxu0
  %v696 = vadd.f32 %v418, %v695
  %697 = vmatmul.f32.gmra.mxu0 %v18
  %v698 = vpop.f32.mrf.mxu0
  %v699 = vadd.f32 %v423, %v698
  %700 = vmatmul.f32.gmra.mxu0 %v20
  %v701 = vpop.f32.mrf.mxu0
  %v702 = vadd.f32 %v428, %v701
  %703 = vdwg.mxu0
  %704 = vmatpush.msra.mxu0 0.0
  %705 = vmatpush.msra.mxu0 0.0
  %706 = vmatpush.msra.mxu0 0.0
  %707 = vmatpush.msra.mxu0 0.0
  %708 = vmatpush.msra.mxu0 0.0
  %709 = vmatpush.msra.mxu0 0.0
  %710 = vmatpush.msra.mxu0 0.0
  %711 = vmatpush.msra.mxu0 0.0
  %712 = vmatpush.msra.mxu0 %v394
  %713 = vmatpush.msra.mxu0 %v378
  %714 = vmatpush.msra.mxu0 %v362
  %715 = vmatpush.msra.mxu0 %v346
  %716 = vmatpush.msra.mxu0 %v330
  %717 = vmatpush.msra.mxu0 %v314
  %718 = vmatpush.msra.mxu0 %v298
  %719 = vmatpush.msra.mxu0 %v282
  %720 = vmatmul.f32.gmra.mxu0 %v432
  %v721 = vpop.f32.mrf.mxu0
  %v722 = vadd.f32 %v693, %v721
  %723 = vmatmul.f32.gmra.mxu0 %v435
  %v724 = vpop.f32.mrf.mxu0
  %v725 = vadd.f32 %v696, %v724
  %726 = vmatmul.f32.gmra.mxu0 %v438
  %v727 = vpop.f32.mrf.mxu0
  %v728 = vadd.f32 %v699, %v727
  %729 = vmatmul.f32.gmra.mxu0 %v441
  %v730 = vpop.f32.mrf.mxu0
  %v731 = vadd.f32 %v702, %v730
  %732 = vdwg.mxu0
  %733 = vmatpush.msra.mxu0 %v267
  %734 = vmatpush.msra.mxu0 %v251
  %735 = vmatpush.msra.mxu0 %v235
  %736 = vmatpush.msra.mxu0 %v219
  %737 = vmatpush.msra.mxu0 %v203
  %738 = vmatpush.msra.mxu0 %v187
  %739 = vmatpush.msra.mxu0 %v171
  %740 = vmatpush.msra.mxu0 %v155
  %741 = vmatpush.msra.mxu0 %v139
  %742 = vmatpush.msra.mxu0 %v123
  %743 = vmatpush.msra.mxu0 %v107
  %744 = vmatpush.msra.mxu0 %v91
  %745 = vmatpush.msra.mxu0 %v75
  %746 = vmatpush.msra.mxu0 %v59
  %747 = vmatpush.msra.mxu0 %v43
  %748 = vmatpush.msra.mxu0 %v27
  %749 = vmatmul.f32.gmra.mxu0 %v14
  %v750 = vpop.f32.mrf.mxu0
  %v751 = vadd.f32 %v413, %v750
  %752 = vmatmul.f32.gmra.mxu0 %v16
  %v753 = vpop.f32.mrf.mxu0
  %v754 = vadd.f32 %v418, %v753
  %755 = vmatmul.f32.gmra.mxu0 %v18
  %v756 = vpop.f32.mrf.mxu0
  %v757 = vadd.f32 %v423, %v756
  %758 = vmatmul.f32.gmra.mxu0 %v20
  %v759 = vpop.f32.mrf.mxu0
  %v760 = vadd.f32 %v428, %v759
  %761 = vdwg.mxu0
  %762 = vmatpush.msra.mxu0 0.0
  %763 = vmatpush.msra.mxu0 0.0
  %764 = vmatpush.msra.mxu0 0.0
  %765 = vmatpush.msra.mxu0 0.0
  %766 = vmatpush.msra.mxu0 0.0
  %767 = vmatpush.msra.mxu0 0.0
  %768 = vmatpush.msra.mxu0 0.0
  %769 = vmatpush.msra.mxu0 0.0
  %770 = vmatpush.msra.mxu0 %v395
  %771 = vmatpush.msra.mxu0 %v379
  %772 = vmatpush.msra.mxu0 %v363
  %773 = vmatpush.msra.mxu0 %v347
  %774 = vmatpush.msra.mxu0 %v331
  %775 = vmatpush.msra.mxu0 %v315
  %776 = vmatpush.msra.mxu0 %v299
  %777 = vmatpush.msra.mxu0 %v283
  %778 = vmatmul.f32.gmra.mxu0 %v432
  %v779 = vpop.f32.mrf.mxu0
  %v780 = vadd.f32 %v751, %v779
  %781 = vmatmul.f32.gmra.mxu0 %v435
  %v782 = vpop.f32.mrf.mxu0
  %v783 = vadd.f32 %v754, %v782
  %784 = vmatmul.f32.gmra.mxu0 %v438
  %v785 = vpop.f32.mrf.mxu0
  %v786 = vadd.f32 %v757, %v785
  %787 = vmatmul.f32.gmra.mxu0 %v441
  %v788 = vpop.f32.mrf.mxu0
  %v789 = vadd.f32 %v760, %v788
  %790 = vdwg.mxu0
  %791 = vmatpush.msra.mxu0 %v268
  %792 = vmatpush.msra.mxu0 %v252
  %793 = vmatpush.msra.mxu0 %v236
  %794 = vmatpush.msra.mxu0 %v220
  %795 = vmatpush.msra.mxu0 %v204
  %796 = vmatpush.msra.mxu0 %v188
  %797 = vmatpush.msra.mxu0 %v172
  %798 = vmatpush.msra.mxu0 %v156
  %799 = vmatpush.msra.mxu0 %v140
  %800 = vmatpush.msra.mxu0 %v124
  %801 = vmatpush.msra.mxu0 %v108
  %802 = vmatpush.msra.mxu0 %v92
  %803 = vmatpush.msra.mxu0 %v76
  %804 = vmatpush.msra.mxu0 %v60
  %805 = vmatpush.msra.mxu0 %v44
  %806 = vmatpush.msra.mxu0 %v28
  %807 = vmatmul.f32.gmra.mxu0 %v14
  %v808 = vpop.f32.mrf.mxu0
  %v809 = vadd.f32 %v413, %v808
  %810 = vmatmul.f32.gmra.mxu0 %v16
  %v811 = vpop.f32.mrf.mxu0
  %v812 = vadd.f32 %v418, %v811
  %813 = vmatmul.f32.gmra.mxu0 %v18
  %v814 = vpop.f32.mrf.mxu0
  %v815 = vadd.f32 %v423, %v814
  %816 = vmatmul.f32.gmra.mxu0 %v20
  %v817 = vpop.f32.mrf.mxu0
  %v818 = vadd.f32 %v428, %v817
  %819 = vdwg.mxu0
  %820 = vmatpush.msra.mxu0 0.0
  %821 = vmatpush.msra.mxu0 0.0
  %822 = vmatpush.msra.mxu0 0.0
  %823 = vmatpush.msra.mxu0 0.0
  %824 = vmatpush.msra.mxu0 0.0
  %825 = vmatpush.msra.mxu0 0.0
  %826 = vmatpush.msra.mxu0 0.0
  %827 = vmatpush.msra.mxu0 0.0
  %828 = vmatpush.msra.mxu0 %v396
  %829 = vmatpush.msra.mxu0 %v380
  %830 = vmatpush.msra.mxu0 %v364
  %831 = vmatpush.msra.mxu0 %v348
  %832 = vmatpush.msra.mxu0 %v332
  %833 = vmatpush.msra.mxu0 %v316
  %834 = vmatpush.msra.mxu0 %v300
  %835 = vmatpush.msra.mxu0 %v284
  %836 = vmatmul.f32.gmra.mxu0 %v432
  %v837 = vpop.f32.mrf.mxu0
  %v838 = vadd.f32 %v809, %v837
  %839 = vmatmul.f32.gmra.mxu0 %v435
  %v840 = vpop.f32.mrf.mxu0
  %v841 = vadd.f32 %v812, %v840
  %842 = vmatmul.f32.gmra.mxu0 %v438
  %v843 = vpop.f32.mrf.mxu0
  %v844 = vadd.f32 %v815, %v843
  %845 = vmatmul.f32.gmra.mxu0 %v441
  %v846 = vpop.f32.mrf.mxu0
  %v847 = vadd.f32 %v818, %v846
  %848 = vdwg.mxu0
  %849 = vmatpush.msra.mxu0 %v269
  %850 = vmatpush.msra.mxu0 %v253
  %851 = vmatpush.msra.mxu0 %v237
  %852 = vmatpush.msra.mxu0 %v221
  %853 = vmatpush.msra.mxu0 %v205
  %854 = vmatpush.msra.mxu0 %v189
  %855 = vmatpush.msra.mxu0 %v173
  %856 = vmatpush.msra.mxu0 %v157
  %857 = vmatpush.msra.mxu0 %v141
  %858 = vmatpush.msra.mxu0 %v125
  %859 = vmatpush.msra.mxu0 %v109
  %860 = vmatpush.msra.mxu0 %v93
  %861 = vmatpush.msra.mxu0 %v77
  %862 = vmatpush.msra.mxu0 %v61
  %863 = vmatpush.msra.mxu0 %v45
  %864 = vmatpush.msra.mxu0 %v29
  %865 = vmatmul.f32.gmra.mxu0 %v14
  %v866 = vpop.f32.mrf.mxu0
  %v867 = vadd.f32 %v413, %v866
  %868 = vmatmul.f32.gmra.mxu0 %v16
  %v869 = vpop.f32.mrf.mxu0
  %v870 = vadd.f32 %v418, %v869
  %871 = vmatmul.f32.gmra.mxu0 %v18
  %v872 = vpop.f32.mrf.mxu0
  %v873 = vadd.f32 %v423, %v872
  %874 = vmatmul.f32.gmra.mxu0 %v20
  %v875 = vpop.f32.mrf.mxu0
  %v876 = vadd.f32 %v428, %v875
  %877 = vdwg.mxu0
  %878 = vmatpush.msra.mxu0 0.0
  %879 = vmatpush.msra.mxu0 0.0
  %880 = vmatpush.msra.mxu0 0.0
  %881 = vmatpush.msra.mxu0 0.0
  %882 = vmatpush.msra.mxu0 0.0
  %883 = vmatpush.msra.mxu0 0.0
  %884 = vmatpush.msra.mxu0 0.0
  %885 = vmatpush.msra.mxu0 0.0
  %886 = vmatpush.msra.mxu0 %v397
  %887 = vmatpush.msra.mxu0 %v381
  %888 = vmatpush.msra.mxu0 %v365
  %889 = vmatpush.msra.mxu0 %v349
  %890 = vmatpush.msra.mxu0 %v333
  %891 = vmatpush.msra.mxu0 %v317
  %892 = vmatpush.msra.mxu0 %v301
  %893 = vmatpush.msra.mxu0 %v285
  %894 = vmatmul.f32.gmra.mxu0 %v432
  %v895 = vpop.f32.mrf.mxu0
  %v896 = vadd.f32 %v867, %v895
  %897 = vmatmul.f32.gmra.mxu0 %v435
  %v898 = vpop.f32.mrf.mxu0
  %v899 = vadd.f32 %v870, %v898
  %900 = vmatmul.f32.gmra.mxu0 %v438
  %v901 = vpop.f32.mrf.mxu0
  %v902 = vadd.f32 %v873, %v901
  %903 = vmatmul.f32.gmra.mxu0 %v441
  %v904 = vpop.f32.mrf.mxu0
  %v905 = vadd.f32 %v876, %v904
  %906 = vdwg.mxu0
  %907 = vmatpush.msra.mxu0 %v270
  %908 = vmatpush.msra.mxu0 %v254
  %909 = vmatpush.msra.mxu0 %v238
  %910 = vmatpush.msra.mxu0 %v222
  %911 = vmatpush.msra.mxu0 %v206
  %912 = vmatpush.msra.mxu0 %v190
  %913 = vmatpush.msra.mxu0 %v174
  %914 = vmatpush.msra.mxu0 %v158
  %915 = vmatpush.msra.mxu0 %v142
  %916 = vmatpush.msra.mxu0 %v126
  %917 = vmatpush.msra.mxu0 %v110
  %918 = vmatpush.msra.mxu0 %v94
  %919 = vmatpush.msra.mxu0 %v78
  %920 = vmatpush.msra.mxu0 %v62
  %921 = vmatpush.msra.mxu0 %v46
  %922 = vmatpush.msra.mxu0 %v30
  %923 = vmatmul.f32.gmra.mxu0 %v14
  %v924 = vpop.f32.mrf.mxu0
  %v925 = vadd.f32 %v413, %v924
  %926 = vmatmul.f32.gmra.mxu0 %v16
  %v927 = vpop.f32.mrf.mxu0
  %v928 = vadd.f32 %v418, %v927
  %929 = vmatmul.f32.gmra.mxu0 %v18
  %v930 = vpop.f32.mrf.mxu0
  %v931 = vadd.f32 %v423, %v930
  %932 = vmatmul.f32.gmra.mxu0 %v20
  %v933 = vpop.f32.mrf.mxu0
  %v934 = vadd.f32 %v428, %v933
  %935 = vdwg.mxu0
  %936 = vmatpush.msra.mxu0 0.0
  %937 = vmatpush.msra.mxu0 0.0
  %938 = vmatpush.msra.mxu0 0.0
  %939 = vmatpush.msra.mxu0 0.0
  %940 = vmatpush.msra.mxu0 0.0
  %941 = vmatpush.msra.mxu0 0.0
  %942 = vmatpush.msra.mxu0 0.0
  %943 = vmatpush.msra.mxu0 0.0
  %944 = vmatpush.msra.mxu0 %v398
  %945 = vmatpush.msra.mxu0 %v382
  %946 = vmatpush.msra.mxu0 %v366
  %947 = vmatpush.msra.mxu0 %v350
  %948 = vmatpush.msra.mxu0 %v334
  %949 = vmatpush.msra.mxu0 %v318
  %950 = vmatpush.msra.mxu0 %v302
  %951 = vmatpush.msra.mxu0 %v286
  %952 = vmatmul.f32.gmra.mxu0 %v432
  %v953 = vpop.f32.mrf.mxu0
  %v954 = vadd.f32 %v925, %v953
  %955 = vmatmul.f32.gmra.mxu0 %v435
  %v956 = vpop.f32.mrf.mxu0
  %v957 = vadd.f32 %v928, %v956
  %958 = vmatmul.f32.gmra.mxu0 %v438
  %v959 = vpop.f32.mrf.mxu0
  %v960 = vadd.f32 %v931, %v959
  %961 = vmatmul.f32.gmra.mxu0 %v441
  %v962 = vpop.f32.mrf.mxu0
  %v963 = vadd.f32 %v934, %v962
  %964 = vdwg.mxu0
  %965 = vmatpush.msra.mxu0 %v271
  %966 = vmatpush.msra.mxu0 %v255
  %967 = vmatpush.msra.mxu0 %v239
  %968 = vmatpush.msra.mxu0 %v223
  %969 = vmatpush.msra.mxu0 %v207
  %970 = vmatpush.msra.mxu0 %v191
  %971 = vmatpush.msra.mxu0 %v175
  %972 = vmatpush.msra.mxu0 %v159
  %973 = vmatpush.msra.mxu0 %v143
  %974 = vmatpush.msra.mxu0 %v127
  %975 = vmatpush.msra.mxu0 %v111
  %976 = vmatpush.msra.mxu0 %v95
  %977 = vmatpush.msra.mxu0 %v79
  %978 = vmatpush.msra.mxu0 %v63
  %979 = vmatpush.msra.mxu0 %v47
  %980 = vmatpush.msra.mxu0 %v31
  %981 = vmatmul.f32.gmra.mxu0 %v14
  %v982 = vpop.f32.mrf.mxu0
  %v983 = vadd.f32 %v413, %v982
  %984 = vmatmul.f32.gmra.mxu0 %v16
  %v985 = vpop.f32.mrf.mxu0
  %v986 = vadd.f32 %v418, %v985
  %987 = vmatmul.f32.gmra.mxu0 %v18
  %v988 = vpop.f32.mrf.mxu0
  %v989 = vadd.f32 %v423, %v988
  %990 = vmatmul.f32.gmra.mxu0 %v20
  %v991 = vpop.f32.mrf.mxu0
  %v992 = vadd.f32 %v428, %v991
  %993 = vdwg.mxu0
  %994 = vmatpush.msra.mxu0 0.0
  %995 = vmatpush.msra.mxu0 0.0
  %996 = vmatpush.msra.mxu0 0.0
  %997 = vmatpush.msra.mxu0 0.0
  %998 = vmatpush.msra.mxu0 0.0
  %999 = vmatpush.msra.mxu0 0.0
  %1000 = vmatpush.msra.mxu0 0.0
  %1001 = vmatpush.msra.mxu0 0.0
  %1002 = vmatpush.msra.mxu0 %v399
  %1003 = vmatpush.msra.mxu0 %v383
  %1004 = vmatpush.msra.mxu0 %v367
  %1005 = vmatpush.msra.mxu0 %v351
  %1006 = vmatpush.msra.mxu0 %v335
  %1007 = vmatpush.msra.mxu0 %v319
  %1008 = vmatpush.msra.mxu0 %v303
  %1009 = vmatpush.msra.mxu0 %v287
  %1010 = vmatmul.f32.gmra.mxu0 %v432
  %v1011 = vpop.f32.mrf.mxu0
  %v1012 = vadd.f32 %v983, %v1011
  %1013 = vmatmul.f32.gmra.mxu0 %v435
  %v1014 = vpop.f32.mrf.mxu0
  %v1015 = vadd.f32 %v986, %v1014
  %1016 = vmatmul.f32.gmra.mxu0 %v438
  %v1017 = vpop.f32.mrf.mxu0
  %v1018 = vadd.f32 %v989, %v1017
  %1019 = vmatmul.f32.gmra.mxu0 %v441
  %v1020 = vpop.f32.mrf.mxu0
  %v1021 = vadd.f32 %v992, %v1020
  %1022 = vdwg.mxu0
  %1023 = vmatpush.msra.mxu0 %v272
  %1024 = vmatpush.msra.mxu0 %v256
  %1025 = vmatpush.msra.mxu0 %v240
  %1026 = vmatpush.msra.mxu0 %v224
  %1027 = vmatpush.msra.mxu0 %v208
  %1028 = vmatpush.msra.mxu0 %v192
  %1029 = vmatpush.msra.mxu0 %v176
  %1030 = vmatpush.msra.mxu0 %v160
  %1031 = vmatpush.msra.mxu0 %v144
  %1032 = vmatpush.msra.mxu0 %v128
  %1033 = vmatpush.msra.mxu0 %v112
  %1034 = vmatpush.msra.mxu0 %v96
  %1035 = vmatpush.msra.mxu0 %v80
  %1036 = vmatpush.msra.mxu0 %v64
  %1037 = vmatpush.msra.mxu0 %v48
  %1038 = vmatpush.msra.mxu0 %v32
  %1039 = vmatmul.f32.gmra.mxu0 %v14
  %v1040 = vpop.f32.mrf.mxu0
  %v1041 = vadd.f32 %v413, %v1040
  %1042 = vmatmul.f32.gmra.mxu0 %v16
  %v1043 = vpop.f32.mrf.mxu0
  %v1044 = vadd.f32 %v418, %v1043
  %1045 = vmatmul.f32.gmra.mxu0 %v18
  %v1046 = vpop.f32.mrf.mxu0
  %v1047 = vadd.f32 %v423, %v1046
  %1048 = vmatmul.f32.gmra.mxu0 %v20
  %v1049 = vpop.f32.mrf.mxu0
  %v1050 = vadd.f32 %v428, %v1049
  %1051 = vdwg.mxu0
  %1052 = vmatpush.msra.mxu0 0.0
  %1053 = vmatpush.msra.mxu0 0.0
  %1054 = vmatpush.msra.mxu0 0.0
  %1055 = vmatpush.msra.mxu0 0.0
  %1056 = vmatpush.msra.mxu0 0.0
  %1057 = vmatpush.msra.mxu0 0.0
  %1058 = vmatpush.msra.mxu0 0.0
  %1059 = vmatpush.msra.mxu0 0.0
  %1060 = vmatpush.msra.mxu0 %v400
  %1061 = vmatpush.msra.mxu0 %v384
  %1062 = vmatpush.msra.mxu0 %v368
  %1063 = vmatpush.msra.mxu0 %v352
  %1064 = vmatpush.msra.mxu0 %v336
  %1065 = vmatpush.msra.mxu0 %v320
  %1066 = vmatpush.msra.mxu0 %v304
  %1067 = vmatpush.msra.mxu0 %v288
  %1068 = vmatmul.f32.gmra.mxu0 %v432
  %v1069 = vpop.f32.mrf.mxu0
  %v1070 = vadd.f32 %v1041, %v1069
  %1071 = vmatmul.f32.gmra.mxu0 %v435
  %v1072 = vpop.f32.mrf.mxu0
  %v1073 = vadd.f32 %v1044, %v1072
  %1074 = vmatmul.f32.gmra.mxu0 %v438
  %v1075 = vpop.f32.mrf.mxu0
  %v1076 = vadd.f32 %v1047, %v1075
  %1077 = vmatmul.f32.gmra.mxu0 %v441
  %v1078 = vpop.f32.mrf.mxu0
  %v1079 = vadd.f32 %v1050, %v1078
  %1080 = vdwg.mxu0
  %1081 = vmatpush.msra.mxu0 %v273
  %1082 = vmatpush.msra.mxu0 %v257
  %1083 = vmatpush.msra.mxu0 %v241
  %1084 = vmatpush.msra.mxu0 %v225
  %1085 = vmatpush.msra.mxu0 %v209
  %1086 = vmatpush.msra.mxu0 %v193
  %1087 = vmatpush.msra.mxu0 %v177
  %1088 = vmatpush.msra.mxu0 %v161
  %1089 = vmatpush.msra.mxu0 %v145
  %1090 = vmatpush.msra.mxu0 %v129
  %1091 = vmatpush.msra.mxu0 %v113
  %1092 = vmatpush.msra.mxu0 %v97
  %1093 = vmatpush.msra.mxu0 %v81
  %1094 = vmatpush.msra.mxu0 %v65
  %1095 = vmatpush.msra.mxu0 %v49
  %1096 = vmatpush.msra.mxu0 %v33
  %1097 = vmatmul.f32.gmra.mxu0 %v14
  %v1098 = vpop.f32.mrf.mxu0
  %v1099 = vadd.f32 %v413, %v1098
  %1100 = vmatmul.f32.gmra.mxu0 %v16
  %v1101 = vpop.f32.mrf.mxu0
  %v1102 = vadd.f32 %v418, %v1101
  %1103 = vmatmul.f32.gmra.mxu0 %v18
  %v1104 = vpop.f32.mrf.mxu0
  %v1105 = vadd.f32 %v423, %v1104
  %1106 = vmatmul.f32.gmra.mxu0 %v20
  %v1107 = vpop.f32.mrf.mxu0
  %v1108 = vadd.f32 %v428, %v1107
  %1109 = vdwg.mxu0
  %1110 = vmatpush.msra.mxu0 0.0
  %1111 = vmatpush.msra.mxu0 0.0
  %1112 = vmatpush.msra.mxu0 0.0
  %1113 = vmatpush.msra.mxu0 0.0
  %1114 = vmatpush.msra.mxu0 0.0
  %1115 = vmatpush.msra.mxu0 0.0
  %1116 = vmatpush.msra.mxu0 0.0
  %1117 = vmatpush.msra.mxu0 0.0
  %1118 = vmatpush.msra.mxu0 %v401
  %1119 = vmatpush.msra.mxu0 %v385
  %1120 = vmatpush.msra.mxu0 %v369
  %1121 = vmatpush.msra.mxu0 %v353
  %1122 = vmatpush.msra.mxu0 %v337
  %1123 = vmatpush.msra.mxu0 %v321
  %1124 = vmatpush.msra.mxu0 %v305
  %1125 = vmatpush.msra.mxu0 %v289
  %1126 = vmatmul.f32.gmra.mxu0 %v432
  %v1127 = vpop.f32.mrf.mxu0
  %v1128 = vadd.f32 %v1099, %v1127
  %1129 = vmatmul.f32.gmra.mxu0 %v435
  %v1130 = vpop.f32.mrf.mxu0
  %v1131 = vadd.f32 %v1102, %v1130
  %1132 = vmatmul.f32.gmra.mxu0 %v438
  %v1133 = vpop.f32.mrf.mxu0
  %v1134 = vadd.f32 %v1105, %v1133
  %1135 = vmatmul.f32.gmra.mxu0 %v441
  %v1136 = vpop.f32.mrf.mxu0
  %v1137 = vadd.f32 %v1108, %v1136
  %1138 = vdwg.mxu0
  %1139 = vmatpush.msra.mxu0 %v274
  %1140 = vmatpush.msra.mxu0 %v258
  %1141 = vmatpush.msra.mxu0 %v242
  %1142 = vmatpush.msra.mxu0 %v226
  %1143 = vmatpush.msra.mxu0 %v210
  %1144 = vmatpush.msra.mxu0 %v194
  %1145 = vmatpush.msra.mxu0 %v178
  %1146 = vmatpush.msra.mxu0 %v162
  %1147 = vmatpush.msra.mxu0 %v146
  %1148 = vmatpush.msra.mxu0 %v130
  %1149 = vmatpush.msra.mxu0 %v114
  %1150 = vmatpush.msra.mxu0 %v98
  %1151 = vmatpush.msra.mxu0 %v82
  %1152 = vmatpush.msra.mxu0 %v66
  %1153 = vmatpush.msra.mxu0 %v50
  %1154 = vmatpush.msra.mxu0 %v34
  %1155 = vmatmul.f32.gmra.mxu0 %v14
  %v1156 = vpop.f32.mrf.mxu0
  %v1157 = vadd.f32 %v413, %v1156
  %1158 = vmatmul.f32.gmra.mxu0 %v16
  %v1159 = vpop.f32.mrf.mxu0
  %v1160 = vadd.f32 %v418, %v1159
  %1161 = vmatmul.f32.gmra.mxu0 %v18
  %v1162 = vpop.f32.mrf.mxu0
  %v1163 = vadd.f32 %v423, %v1162
  %1164 = vmatmul.f32.gmra.mxu0 %v20
  %v1165 = vpop.f32.mrf.mxu0
  %v1166 = vadd.f32 %v428, %v1165
  %1167 = vdwg.mxu0
  %1168 = vmatpush.msra.mxu0 0.0
  %1169 = vmatpush.msra.mxu0 0.0
  %1170 = vmatpush.msra.mxu0 0.0
  %1171 = vmatpush.msra.mxu0 0.0
  %1172 = vmatpush.msra.mxu0 0.0
  %1173 = vmatpush.msra.mxu0 0.0
  %1174 = vmatpush.msra.mxu0 0.0
  %1175 = vmatpush.msra.mxu0 0.0
  %1176 = vmatpush.msra.mxu0 %v402
  %1177 = vmatpush.msra.mxu0 %v386
  %1178 = vmatpush.msra.mxu0 %v370
  %1179 = vmatpush.msra.mxu0 %v354
  %1180 = vmatpush.msra.mxu0 %v338
  %1181 = vmatpush.msra.mxu0 %v322
  %1182 = vmatpush.msra.mxu0 %v306
  %1183 = vmatpush.msra.mxu0 %v290
  %1184 = vmatmul.f32.gmra.mxu0 %v432
  %v1185 = vpop.f32.mrf.mxu0
  %v1186 = vadd.f32 %v1157, %v1185
  %1187 = vmatmul.f32.gmra.mxu0 %v435
  %v1188 = vpop.f32.mrf.mxu0
  %v1189 = vadd.f32 %v1160, %v1188
  %1190 = vmatmul.f32.gmra.mxu0 %v438
  %v1191 = vpop.f32.mrf.mxu0
  %v1192 = vadd.f32 %v1163, %v1191
  %1193 = vmatmul.f32.gmra.mxu0 %v441
  %v1194 = vpop.f32.mrf.mxu0
  %v1195 = vadd.f32 %v1166, %v1194
  %1196 = vdwg.mxu0
  %1197 = vmatpush.msra.mxu0 %v275
  %1198 = vmatpush.msra.mxu0 %v259
  %1199 = vmatpush.msra.mxu0 %v243
  %1200 = vmatpush.msra.mxu0 %v227
  %1201 = vmatpush.msra.mxu0 %v211
  %1202 = vmatpush.msra.mxu0 %v195
  %1203 = vmatpush.msra.mxu0 %v179
  %1204 = vmatpush.msra.mxu0 %v163
  %1205 = vmatpush.msra.mxu0 %v147
  %1206 = vmatpush.msra.mxu0 %v131
  %1207 = vmatpush.msra.mxu0 %v115
  %1208 = vmatpush.msra.mxu0 %v99
  %1209 = vmatpush.msra.mxu0 %v83
  %1210 = vmatpush.msra.mxu0 %v67
  %1211 = vmatpush.msra.mxu0 %v51
  %1212 = vmatpush.msra.mxu0 %v35
  %1213 = vmatmul.f32.gmra.mxu0 %v14
  %v1214 = vpop.f32.mrf.mxu0
  %v1215 = vadd.f32 %v413, %v1214
  %1216 = vmatmul.f32.gmra.mxu0 %v16
  %v1217 = vpop.f32.mrf.mxu0
  %v1218 = vadd.f32 %v418, %v1217
  %1219 = vmatmul.f32.gmra.mxu0 %v18
  %v1220 = vpop.f32.mrf.mxu0
  %v1221 = vadd.f32 %v423, %v1220
  %1222 = vmatmul.f32.gmra.mxu0 %v20
  %v1223 = vpop.f32.mrf.mxu0
  %v1224 = vadd.f32 %v428, %v1223
  %1225 = vdwg.mxu0
  %1226 = vmatpush.msra.mxu0 0.0
  %1227 = vmatpush.msra.mxu0 0.0
  %1228 = vmatpush.msra.mxu0 0.0
  %1229 = vmatpush.msra.mxu0 0.0
  %1230 = vmatpush.msra.mxu0 0.0
  %1231 = vmatpush.msra.mxu0 0.0
  %1232 = vmatpush.msra.mxu0 0.0
  %1233 = vmatpush.msra.mxu0 0.0
  %1234 = vmatpush.msra.mxu0 %v403
  %1235 = vmatpush.msra.mxu0 %v387
  %1236 = vmatpush.msra.mxu0 %v371
  %1237 = vmatpush.msra.mxu0 %v355
  %1238 = vmatpush.msra.mxu0 %v339
  %1239 = vmatpush.msra.mxu0 %v323
  %1240 = vmatpush.msra.mxu0 %v307
  %1241 = vmatpush.msra.mxu0 %v291
  %1242 = vmatmul.f32.gmra.mxu0 %v432
  %v1243 = vpop.f32.mrf.mxu0
  %v1244 = vadd.f32 %v1215, %v1243
  %1245 = vmatmul.f32.gmra.mxu0 %v435
  %v1246 = vpop.f32.mrf.mxu0
  %v1247 = vadd.f32 %v1218, %v1246
  %1248 = vmatmul.f32.gmra.mxu0 %v438
  %v1249 = vpop.f32.mrf.mxu0
  %v1250 = vadd.f32 %v1221, %v1249
  %1251 = vmatmul.f32.gmra.mxu0 %v441
  %v1252 = vpop.f32.mrf.mxu0
  %v1253 = vadd.f32 %v1224, %v1252
  %1254 = vdwg.mxu0
  %1255 = vmatpush.msra.mxu0 %v276
  %1256 = vmatpush.msra.mxu0 %v260
  %1257 = vmatpush.msra.mxu0 %v244
  %1258 = vmatpush.msra.mxu0 %v228
  %1259 = vmatpush.msra.mxu0 %v212
  %1260 = vmatpush.msra.mxu0 %v196
  %1261 = vmatpush.msra.mxu0 %v180
  %1262 = vmatpush.msra.mxu0 %v164
  %1263 = vmatpush.msra.mxu0 %v148
  %1264 = vmatpush.msra.mxu0 %v132
  %1265 = vmatpush.msra.mxu0 %v116
  %1266 = vmatpush.msra.mxu0 %v100
  %1267 = vmatpush.msra.mxu0 %v84
  %1268 = vmatpush.msra.mxu0 %v68
  %1269 = vmatpush.msra.mxu0 %v52
  %1270 = vmatpush.msra.mxu0 %v36
  %1271 = vmatmul.f32.gmra.mxu0 %v14
  %v1272 = vpop.f32.mrf.mxu0
  %v1273 = vadd.f32 %v413, %v1272
  %1274 = vmatmul.f32.gmra.mxu0 %v16
  %v1275 = vpop.f32.mrf.mxu0
  %v1276 = vadd.f32 %v418, %v1275
  %1277 = vmatmul.f32.gmra.mxu0 %v18
  %v1278 = vpop.f32.mrf.mxu0
  %v1279 = vadd.f32 %v423, %v1278
  %1280 = vmatmul.f32.gmra.mxu0 %v20
  %v1281 = vpop.f32.mrf.mxu0
  %v1282 = vadd.f32 %v428, %v1281
  %1283 = vdwg.mxu0
  %1284 = vmatpush.msra.mxu0 0.0
  %1285 = vmatpush.msra.mxu0 0.0
  %1286 = vmatpush.msra.mxu0 0.0
  %1287 = vmatpush.msra.mxu0 0.0
  %1288 = vmatpush.msra.mxu0 0.0
  %1289 = vmatpush.msra.mxu0 0.0
  %1290 = vmatpush.msra.mxu0 0.0
  %1291 = vmatpush.msra.mxu0 0.0
  %1292 = vmatpush.msra.mxu0 %v404
  %1293 = vmatpush.msra.mxu0 %v388
  %1294 = vmatpush.msra.mxu0 %v372
  %1295 = vmatpush.msra.mxu0 %v356
  %1296 = vmatpush.msra.mxu0 %v340
  %1297 = vmatpush.msra.mxu0 %v324
  %1298 = vmatpush.msra.mxu0 %v308
  %1299 = vmatpush.msra.mxu0 %v292
  %1300 = vmatmul.f32.gmra.mxu0 %v432
  %v1301 = vpop.f32.mrf.mxu0
  %v1302 = vadd.f32 %v1273, %v1301
  %1303 = vmatmul.f32.gmra.mxu0 %v435
  %v1304 = vpop.f32.mrf.mxu0
  %v1305 = vadd.f32 %v1276, %v1304
  %1306 = vmatmul.f32.gmra.mxu0 %v438
  %v1307 = vpop.f32.mrf.mxu0
  %v1308 = vadd.f32 %v1279, %v1307
  %1309 = vmatmul.f32.gmra.mxu0 %v441
  %v1310 = vpop.f32.mrf.mxu0
  %v1311 = vadd.f32 %v1282, %v1310
  %1312 = vdwg.mxu0
  %1313 = vmatpush.msra.mxu0 %v277
  %1314 = vmatpush.msra.mxu0 %v261
  %1315 = vmatpush.msra.mxu0 %v245
  %1316 = vmatpush.msra.mxu0 %v229
  %1317 = vmatpush.msra.mxu0 %v213
  %1318 = vmatpush.msra.mxu0 %v197
  %1319 = vmatpush.msra.mxu0 %v181
  %1320 = vmatpush.msra.mxu0 %v165
  %1321 = vmatpush.msra.mxu0 %v149
  %1322 = vmatpush.msra.mxu0 %v133
  %1323 = vmatpush.msra.mxu0 %v117
  %1324 = vmatpush.msra.mxu0 %v101
  %1325 = vmatpush.msra.mxu0 %v85
  %1326 = vmatpush.msra.mxu0 %v69
  %1327 = vmatpush.msra.mxu0 %v53
  %1328 = vmatpush.msra.mxu0 %v37
  %1329 = vmatmul.f32.gmra.mxu0 %v14
  %v1330 = vpop.f32.mrf.mxu0
  %v1331 = vadd.f32 %v413, %v1330
  %1332 = vmatmul.f32.gmra.mxu0 %v16
  %v1333 = vpop.f32.mrf.mxu0
  %v1334 = vadd.f32 %v418, %v1333
  %1335 = vmatmul.f32.gmra.mxu0 %v18
  %v1336 = vpop.f32.mrf.mxu0
  %v1337 = vadd.f32 %v423, %v1336
  %1338 = vmatmul.f32.gmra.mxu0 %v20
  %v1339 = vpop.f32.mrf.mxu0
  %v1340 = vadd.f32 %v428, %v1339
  %1341 = vdwg.mxu0
  %1342 = vmatpush.msra.mxu0 0.0
  %1343 = vmatpush.msra.mxu0 0.0
  %1344 = vmatpush.msra.mxu0 0.0
  %1345 = vmatpush.msra.mxu0 0.0
  %1346 = vmatpush.msra.mxu0 0.0
  %1347 = vmatpush.msra.mxu0 0.0
  %1348 = vmatpush.msra.mxu0 0.0
  %1349 = vmatpush.msra.mxu0 0.0
  %1350 = vmatpush.msra.mxu0 %v405
  %1351 = vmatpush.msra.mxu0 %v389
  %1352 = vmatpush.msra.mxu0 %v373
  %1353 = vmatpush.msra.mxu0 %v357
  %1354 = vmatpush.msra.mxu0 %v341
  %1355 = vmatpush.msra.mxu0 %v325
  %1356 = vmatpush.msra.mxu0 %v309
  %1357 = vmatpush.msra.mxu0 %v293
  %1358 = vmatmul.f32.gmra.mxu0 %v432
  %v1359 = vpop.f32.mrf.mxu0
  %v1360 = vadd.f32 %v1331, %v1359
  %1361 = vmatmul.f32.gmra.mxu0 %v435
  %v1362 = vpop.f32.mrf.mxu0
  %v1363 = vadd.f32 %v1334, %v1362
  %1364 = vmatmul.f32.gmra.mxu0 %v438
  %v1365 = vpop.f32.mrf.mxu0
  %v1366 = vadd.f32 %v1337, %v1365
  %1367 = vmatmul.f32.gmra.mxu0 %v441
  %v1368 = vpop.f32.mrf.mxu0
  %v1369 = vadd.f32 %v1340, %v1368
  %1370 = vdwg.mxu0
  %v1371 = vmax.f32 %v490, 0.0
  %v1372 = vmax.f32 %v548, 0.0
  %v1373 = vmax.f32 %v606, 0.0
  %v1374 = vmax.f32 %v664, 0.0
  %v1375 = vmax.f32 %v722, 0.0
  %v1376 = vmax.f32 %v780, 0.0
  %v1377 = vmax.f32 %v838, 0.0
  %v1378 = vmax.f32 %v896, 0.0
  %v1379 = vmax.f32 %v954, 0.0
  %v1380 = vmax.f32 %v1012, 0.0
  %v1381 = vmax.f32 %v1070, 0.0
  %v1382 = vmax.f32 %v1128, 0.0
  %v1383 = vmax.f32 %v1186, 0.0
  %v1384 = vmax.f32 %v1244, 0.0
  %v1385 = vmax.f32 %v1302, 0.0
  %v1386 = vmax.f32 %v1360, 0.0
  %v1387 = vmax.f32 %v493, 0.0
  %v1388 = vmax.f32 %v551, 0.0
  %v1389 = vmax.f32 %v609, 0.0
  %v1390 = vmax.f32 %v667, 0.0
  %v1391 = vmax.f32 %v725, 0.0
  %v1392 = vmax.f32 %v783, 0.0
  %v1393 = vmax.f32 %v841, 0.0
  %v1394 = vmax.f32 %v899, 0.0
  %v1395 = vmax.f32 %v957, 0.0
  %v1396 = vmax.f32 %v1015, 0.0
  %v1397 = vmax.f32 %v1073, 0.0
  %v1398 = vmax.f32 %v1131, 0.0
  %v1399 = vmax.f32 %v1189, 0.0
  %v1400 = vmax.f32 %v1247, 0.0
  %v1401 = vmax.f32 %v1305, 0.0
  %v1402 = vmax.f32 %v1363, 0.0
  %v1403 = vmax.f32 %v496, 0.0
  %v1404 = vmax.f32 %v554, 0.0
  %v1405 = vmax.f32 %v612, 0.0
  %v1406 = vmax.f32 %v670, 0.0
  %v1407 = vmax.f32 %v728, 0.0
  %v1408 = vmax.f32 %v786, 0.0
  %v1409 = vmax.f32 %v844, 0.0
  %v1410 = vmax.f32 %v902, 0.0
  %v1411 = vmax.f32 %v960, 0.0
  %v1412 = vmax.f32 %v1018, 0.0
  %v1413 = vmax.f32 %v1076, 0.0
  %v1414 = vmax.f32 %v1134, 0.0
  %v1415 = vmax.f32 %v1192, 0.0
  %v1416 = vmax.f32 %v1250, 0.0
  %v1417 = vmax.f32 %v1308, 0.0
  %v1418 = vmax.f32 %v1366, 0.0
  %v1419 = vmax.f32 %v499, 0.0
  %v1420 = vmax.f32 %v557, 0.0
  %v1421 = vmax.f32 %v615, 0.0
  %v1422 = vmax.f32 %v673, 0.0
  %v1423 = vmax.f32 %v731, 0.0
  %v1424 = vmax.f32 %v789, 0.0
  %v1425 = vmax.f32 %v847, 0.0
  %v1426 = vmax.f32 %v905, 0.0
  %v1427 = vmax.f32 %v963, 0.0
  %v1428 = vmax.f32 %v1021, 0.0
  %v1429 = vmax.f32 %v1079, 0.0
  %v1430 = vmax.f32 %v1137, 0.0
  %v1431 = vmax.f32 %v1195, 0.0
  %v1432 = vmax.f32 %v1253, 0.0
  %v1433 = vmax.f32 %v1311, 0.0
  %v1434 = vmax.f32 %v1369, 0.0
  %1435 = vst [vmem:[%s3] sm:$0xff] %v1371
  %1436 = vst [vmem:[%s3 + $0x8] sm:$0xff] %v1372
  %1437 = vst [vmem:[%s3 + $0x10] sm:$0xff] %v1373
  %1438 = vst [vmem:[%s3 + $0x18] sm:$0xff] %v1374
  %1439 = vst [vmem:[%s3 + $0x20] sm:$0xff] %v1375
  %1440 = vst [vmem:[%s3 + $0x28] sm:$0xff] %v1376
  %1441 = vst [vmem:[%s3 + $0x30] sm:$0xff] %v1377
  %1442 = vst [vmem:[%s3 + $0x38] sm:$0xff] %v1378
  %1443 = vst [vmem:[%s3 + $0x40] sm:$0xff] %v1379
  %1444 = vst [vmem:[%s3 + $0x48] sm:$0xff] %v1380
  %1445 = vst [vmem:[%s3 + $0x50] sm:$0xff] %v1381
  %1446 = vst [vmem:[%s3 + $0x58] sm:$0xff] %v1382
  %1447 = vst [vmem:[%s3 + $0x60] sm:$0xff] %v1383
  %1448 = vst [vmem:[%s3 + $0x68] sm:$0xff] %v1384
  %1449 = vst [vmem:[%s3 + $0x70] sm:$0xff] %v1385
  %vm1450 = vcmask 564224
  %1451 = vst.msk [vmem:[%s3 + $0x78] sm:$0xff] %vm1450, %v1386
  %1452 = vst [vmem:[%s3 + $0x80] sm:$0xff] %v1387
  %1453 = vst [vmem:[%s3 + $0x88] sm:$0xff] %v1388
  %1454 = vst [vmem:[%s3 + $0x90] sm:$0xff] %v1389
  %1455 = vst [vmem:[%s3 + $0x98] sm:$0xff] %v1390
  %1456 = vst [vmem:[%s3 + $0xa0] sm:$0xff] %v1391
  %1457 = vst [vmem:[%s3 + $0xa8] sm:$0xff] %v1392
  %1458 = vst [vmem:[%s3 + $0xb0] sm:$0xff] %v1393
  %1459 = vst [vmem:[%s3 + $0xb8] sm:$0xff] %v1394
  %1460 = vst [vmem:[%s3 + $0xc0] sm:$0xff] %v1395
  %1461 = vst [vmem:[%s3 + $0xc8] sm:$0xff] %v1396
  %1462 = vst [vmem:[%s3 + $0xd0] sm:$0xff] %v1397
  %1463 = vst [vmem:[%s3 + $0xd8] sm:$0xff] %v1398
  %1464 = vst [vmem:[%s3 + $0xe0] sm:$0xff] %v1399
  %1465 = vst [vmem:[%s3 + $0xe8] sm:$0xff] %v1400
  %1466 = vst [vmem:[%s3 + $0xf0] sm:$0xff] %v1401
  %1467 = vst.msk [vmem:[%s3 + $0xf8] sm:$0xff] %vm1450, %v1402
  %1468 = vst [vmem:[%s3 + $0x100] sm:$0xff] %v1403
  %1469 = vst [vmem:[%s3 + $0x108] sm:$0xff] %v1404
  %1470 = vst [vmem:[%s3 + $0x110] sm:$0xff] %v1405
  %1471 = vst [vmem:[%s3 + $0x118] sm:$0xff] %v1406
  %1472 = vst [vmem:[%s3 + $0x120] sm:$0xff] %v1407
  %1473 = vst [vmem:[%s3 + $0x128] sm:$0xff] %v1408
  %1474 = vst [vmem:[%s3 + $0x130] sm:$0xff] %v1409
  %1475 = vst [vmem:[%s3 + $0x138] sm:$0xff] %v1410
  %1476 = vst [vmem:[%s3 + $0x140] sm:$0xff] %v1411
  %1477 = vst [vmem:[%s3 + $0x148] sm:$0xff] %v1412
  %1478 = vst [vmem:[%s3 + $0x150] sm:$0xff] %v1413
  %1479 = vst [vmem:[%s3 + $0x158] sm:$0xff] %v1414
  %1480 = vst [vmem:[%s3 + $0x160] sm:$0xff] %v1415
  %1481 = vst [vmem:[%s3 + $0x168] sm:$0xff] %v1416
  %1482 = vst [vmem:[%s3 + $0x170] sm:$0xff] %v1417
  %1483 = vst.msk [vmem:[%s3 + $0x178] sm:$0xff] %vm1450, %v1418
  %1484 = vst [vmem:[%s3 + $0x180] sm:$0xff] %v1419
  %1485 = vst [vmem:[%s3 + $0x188] sm:$0xff] %v1420
  %1486 = vst [vmem:[%s3 + $0x190] sm:$0xff] %v1421
  %1487 = vst [vmem:[%s3 + $0x198] sm:$0xff] %v1422
  %1488 = vst [vmem:[%s3 + $0x1a0] sm:$0xff] %v1423
  %1489 = vst [vmem:[%s3 + $0x1a8] sm:$0xff] %v1424
  %1490 = vst [vmem:[%s3 + $0x1b0] sm:$0xff] %v1425
  %1491 = vst [vmem:[%s3 + $0x1b8] sm:$0xff] %v1426
  %1492 = vst [vmem:[%s3 + $0x1c0] sm:$0xff] %v1427
  %1493 = vst [vmem:[%s3 + $0x1c8] sm:$0xff] %v1428
  %1494 = vst [vmem:[%s3 + $0x1d0] sm:$0xff] %v1429
  %1495 = vst [vmem:[%s3 + $0x1d8] sm:$0xff] %v1430
  %1496 = vst [vmem:[%s3 + $0x1e0] sm:$0xff] %v1431
  %1497 = vst [vmem:[%s3 + $0x1e8] sm:$0xff] %v1432
  %1498 = vst [vmem:[%s3 + $0x1f0] sm:$0xff] %v1433
  %1499 = vst.msk [vmem:[%s3 + $0x1f8] sm:$0xff] %vm1450, %v1434
  // Predicated region
  $region14: #{qnetwork_cnn_forward.4} parent=0 // pred_check
    _
  $region15: #{qnetwork_cnn_forward.4} parent=0 // pred_check_branch
    %1501 = sbr.rel (0) target = $region17
  $region16: #{qnetwork_cnn_forward.4} parent=0 // pred_region
    _
  $region17: #{qnetwork_cnn_forward.4} parent=0 // pred_fallthru
    _
  // Predicated region
  $region18: #{qnetwork_cnn_forward.4} parent=0 // pred_check
    _
  $region19: #{qnetwork_cnn_forward.4} parent=0 // pred_check_branch
    %1503 = sbr.rel (0) target = $region21
  $region20: #{qnetwork_cnn_forward.4} parent=0 // pred_region
    _
  $region21: #{qnetwork_cnn_forward.4} parent=0 // pred_fallthru
    _

// kernel: qnetwork_cnn_forward.5
$region0: #{qnetwork_cnn_forward.5}
  #allocation0 [shape = 'u32[]', space=smem, size = 0x4, offset = 0x4, fixed_abs, tag = 'smem constant byte address 0x4 - core index']
  #allocation1 [shape = 'u32[72,128]{1,0:T(1,128)}', space=vmem, size = 0x9000, scoped, tag = 'internal scratch']
  %s0 = inlined_call_operand.vmem [shape: f32[64,512], index: 0, kind: input, shape index: {}]
  %s1 = inlined_call_operand.vmem [shape: f32[512,192], index: 1, kind: input, shape index: {}]
  %s2 = inlined_call_operand.vmem [shape: f32[64,1], index: 2, kind: input, shape index: {}]
  %s3 = inlined_call_operand.vmem [shape: f32[64,192], index: 3, kind: output, shape index: {}]
  %s4 = sld [smem:[#allocation0]]
  $region22: #{qnetwork_cnn_forward.5} parent=0
    _
  %s6 = ssub.s32 1, %s4
  %s7 = scalar_select 0, %s6, %s4
  // Predicated region
  $region2: #{qnetwork_cnn_forward.5} parent=0 // pred_check
    _
  $region3: #{qnetwork_cnn_forward.5} parent=0 // pred_check_branch
    %9 = sbr.rel (0) target = $region5
  $region4: #{qnetwork_cnn_forward.5} parent=0 // pred_region
    _
  $region5: #{qnetwork_cnn_forward.5} parent=0 // pred_fallthru
    _
  // Predicated region
  $region6: #{qnetwork_cnn_forward.5} parent=0 // pred_check
    _
  $region7: #{qnetwork_cnn_forward.5} parent=0 // pred_check_branch
    %11 = sbr.rel (0) target = $region9
  $region8: #{qnetwork_cnn_forward.5} parent=0 // pred_region
    _
  $region9: #{qnetwork_cnn_forward.5} parent=0 // pred_fallthru
    _
  // Predicated region
  $region10: #{qnetwork_cnn_forward.5} parent=0 // pred_check
    _
  $region11: #{qnetwork_cnn_forward.5} parent=0 // pred_check_branch
    %13 = sbr.rel (0) target = $region13
  $region12: #{qnetwork_cnn_forward.5} parent=0 // pred_region
    _
  $region13: #{qnetwork_cnn_forward.5} parent=0 // pred_fallthru
    _
  %v14 = vld [vmem:[%s0] sm:$0xff]
  %v15 = vld [vmem:[%s0 + $0x8] sm:$0xff]
  %v16 = vld [vmem:[%s0 + $0x10] sm:$0xff]
  %v17 = vld [vmem:[%s0 + $0x18] sm:$0xff]
  %v18 = vld [vmem:[%s0 + $0x20] sm:$0xff]
  %v19 = vld [vmem:[%s0 + $0x28] sm:$0xff]
  %v20 = vld [vmem:[%s0 + $0x30] sm:$0xff]
  %v21 = vld [vmem:[%s0 + $0x38] sm:$0xff]
  %v22 = vld [vmem:[%s0 + $0x40] sm:$0xff]
  %v23 = vld [vmem:[%s0 + $0x48] sm:$0xff]
  %v24 = vld [vmem:[%s0 + $0x50] sm:$0xff]
  %v25 = vld [vmem:[%s0 + $0x58] sm:$0xff]
  %v26 = vld [vmem:[%s0 + $0x60] sm:$0xff]
  %v27 = vld [vmem:[%s0 + $0x68] sm:$0xff]
  %v28 = vld [vmem:[%s0 + $0x70] sm:$0xff]
  %v29 = vld [vmem:[%s0 + $0x78] sm:$0xff]
  %v30 = vld [vmem:[%s0 + $0x80] sm:$0xff]
  %v31 = vld [vmem:[%s0 + $0x88] sm:$0xff]
  %v32 = vld [vmem:[%s0 + $0x90] sm:$0xff]
  %v33 = vld [vmem:[%s0 + $0x98] sm:$0xff]
  %v34 = vld [vmem:[%s0 + $0xa0] sm:$0xff]
  %v35 = vld [vmem:[%s0 + $0xa8] sm:$0xff]
  %v36 = vld [vmem:[%s0 + $0xb0] sm:$0xff]
  %v37 = vld [vmem:[%s0 + $0xb8] sm:$0xff]
  %v38 = vld [vmem:[%s0 + $0xc0] sm:$0xff]
  %v39 = vld [vmem:[%s0 + $0xc8] sm:$0xff]
  %v40 = vld [vmem:[%s0 + $0xd0] sm:$0xff]
  %v41 = vld [vmem:[%s0 + $0xd8] sm:$0xff]
  %v42 = vld [vmem:[%s0 + $0xe0] sm:$0xff]
  %v43 = vld [vmem:[%s0 + $0xe8] sm:$0xff]
  %v44 = vld [vmem:[%s0 + $0xf0] sm:$0xff]
  %v45 = vld [vmem:[%s0 + $0xf8] sm:$0xff]
  %v46 = vld [vmem:[%s1] sm:$0xff]
  %v47 = vld [vmem:[%s1 + $0x8] sm:$0xff]
  %v48 = vld [vmem:[%s1 + $0x10] sm:$0xff]
  %v49 = vld [vmem:[%s1 + $0x18] sm:$0xff]
  %v50 = vld [vmem:[%s1 + $0x20] sm:$0xff]
  %v51 = vld [vmem:[%s1 + $0x28] sm:$0xff]
  %v52 = vld [vmem:[%s1 + $0x30] sm:$0xff]
  %v53 = vld [vmem:[%s1 + $0x38] sm:$0xff]
  %v54 = vld [vmem:[%s1 + $0x40] sm:$0xff]
  %v55 = vld [vmem:[%s1 + $0x48] sm:$0xff]
  %v56 = vld [vmem:[%s1 + $0x50] sm:$0xff]
  %v57 = vld [vmem:[%s1 + $0x58] sm:$0xff]
  %v58 = vld [vmem:[%s1 + $0x60] sm:$0xff]
  %v59 = vld [vmem:[%s1 + $0x68] sm:$0xff]
  %v60 = vld [vmem:[%s1 + $0x70] sm:$0xff]
  %v61 = vld [vmem:[%s1 + $0x78] sm:$0xff]
  %v62 = vld [vmem:[%s1 + $0x80] sm:$0xff]
  %v63 = vld [vmem:[%s1 + $0x88] sm:$0xff]
  %v64 = vld [vmem:[%s1 + $0x90] sm:$0xff]
  %v65 = vld [vmem:[%s1 + $0x98] sm:$0xff]
  %v66 = vld [vmem:[%s1 + $0xa0] sm:$0xff]
  %v67 = vld [vmem:[%s1 + $0xa8] sm:$0xff]
  %v68 = vld [vmem:[%s1 + $0xb0] sm:$0xff]
  %v69 = vld [vmem:[%s1 + $0xb8] sm:$0xff]
  %v70 = vld [vmem:[%s1 + $0xc0] sm:$0xff]
  %v71 = vld [vmem:[%s1 + $0xc8] sm:$0xff]
  %v72 = vld [vmem:[%s1 + $0xd0] sm:$0xff]
  %v73 = vld [vmem:[%s1 + $0xd8] sm:$0xff]
  %v74 = vld [vmem:[%s1 + $0xe0] sm:$0xff]
  %v75 = vld [vmem:[%s1 + $0xe8] sm:$0xff]
  %v76 = vld [vmem:[%s1 + $0xf0] sm:$0xff]
  %v77 = vld [vmem:[%s1 + $0xf8] sm:$0xff]
  %v78 = vld [vmem:[%s1 + $0x100] sm:$0xff]
  %v79 = vld [vmem:[%s1 + $0x108] sm:$0xff]
  %v80 = vld [vmem:[%s1 + $0x110] sm:$0xff]
  %v81 = vld [vmem:[%s1 + $0x118] sm:$0xff]
  %v82 = vld [vmem:[%s1 + $0x120] sm:$0xff]
  %v83 = vld [vmem:[%s1 + $0x128] sm:$0xff]
  %v84 = vld [vmem:[%s1 + $0x130] sm:$0xff]
  %v85 = vld [vmem:[%s1 + $0x138] sm:$0xff]
  %v86 = vld [vmem:[%s1 + $0x140] sm:$0xff]
  %v87 = vld [vmem:[%s1 + $0x148] sm:$0xff]
  %v88 = vld [vmem:[%s1 + $0x150] sm:$0xff]
  %v89 = vld [vmem:[%s1 + $0x158] sm:$0xff]
  %v90 = vld [vmem:[%s1 + $0x160] sm:$0xff]
  %v91 = vld [vmem:[%s1 + $0x168] sm:$0xff]
  %v92 = vld [vmem:[%s1 + $0x170] sm:$0xff]
  %v93 = vld [vmem:[%s1 + $0x178] sm:$0xff]
  %v94 = vld [vmem:[%s1 + $0x180] sm:$0xff]
  %v95 = vld [vmem:[%s1 + $0x188] sm:$0xff]
  %v96 = vld [vmem:[%s1 + $0x190] sm:$0xff]
  %v97 = vld [vmem:[%s1 + $0x198] sm:$0xff]
  %v98 = vld [vmem:[%s1 + $0x1a0] sm:$0xff]
  %v99 = vld [vmem:[%s1 + $0x1a8] sm:$0xff]
  %v100 = vld [vmem:[%s1 + $0x1b0] sm:$0xff]
  %v101 = vld [vmem:[%s1 + $0x1b8] sm:$0xff]
  %v102 = vld [vmem:[%s1 + $0x1c0] sm:$0xff]
  %v103 = vld [vmem:[%s1 + $0x1c8] sm:$0xff]
  %v104 = vld [vmem:[%s1 + $0x1d0] sm:$0xff]
  %v105 = vld [vmem:[%s1 + $0x1d8] sm:$0xff]
  %v106 = vld [vmem:[%s1 + $0x1e0] sm:$0xff]
  %v107 = vld [vmem:[%s1 + $0x1e8] sm:$0xff]
  %v108 = vld [vmem:[%s1 + $0x1f0] sm:$0xff]
  %v109 = vld [vmem:[%s1 + $0x1f8] sm:$0xff]
  %v110 = vld [vmem:[%s1 + $0x200] sm:$0xff]
  %v111 = vld [vmem:[%s1 + $0x208] sm:$0xff]
  %v112 = vld [vmem:[%s1 + $0x210] sm:$0xff]
  %v113 = vld [vmem:[%s1 + $0x218] sm:$0xff]
  %v114 = vld [vmem:[%s1 + $0x220] sm:$0xff]
  %v115 = vld [vmem:[%s1 + $0x228] sm:$0xff]
  %v116 = vld [vmem:[%s1 + $0x230] sm:$0xff]
  %v117 = vld [vmem:[%s1 + $0x238] sm:$0xff]
  %v118 = vld [vmem:[%s1 + $0x240] sm:$0xff]
  %v119 = vld [vmem:[%s1 + $0x248] sm:$0xff]
  %v120 = vld [vmem:[%s1 + $0x250] sm:$0xff]
  %v121 = vld [vmem:[%s1 + $0x258] sm:$0xff]
  %v122 = vld [vmem:[%s1 + $0x260] sm:$0xff]
  %v123 = vld [vmem:[%s1 + $0x268] sm:$0xff]
  %v124 = vld [vmem:[%s1 + $0x270] sm:$0xff]
  %v125 = vld [vmem:[%s1 + $0x278] sm:$0xff]
  %v126 = vld [vmem:[%s1 + $0x280] sm:$0xff]
  %v127 = vld [vmem:[%s1 + $0x288] sm:$0xff]
  %v128 = vld [vmem:[%s1 + $0x290] sm:$0xff]
  %v129 = vld [vmem:[%s1 + $0x298] sm:$0xff]
  %v130 = vld [vmem:[%s1 + $0x2a0] sm:$0xff]
  %v131 = vld [vmem:[%s1 + $0x2a8] sm:$0xff]
  %v132 = vld [vmem:[%s1 + $0x2b0] sm:$0xff]
  %v133 = vld [vmem:[%s1 + $0x2b8] sm:$0xff]
  %v134 = vld [vmem:[%s1 + $0x2c0] sm:$0xff]
  %v135 = vld [vmem:[%s1 + $0x2c8] sm:$0xff]
  %v136 = vld [vmem:[%s1 + $0x2d0] sm:$0xff]
  %v137 = vld [vmem:[%s1 + $0x2d8] sm:$0xff]
  %v138 = vld [vmem:[%s1 + $0x2e0] sm:$0xff]
  %v139 = vld [vmem:[%s1 + $0x2e8] sm:$0xff]
  %v140 = vld [vmem:[%s1 + $0x2f0] sm:$0xff]
  %v141 = vld [vmem:[%s1 + $0x2f8] sm:$0xff]
  %v142 = vld [vmem:[%s1 + $0x300] sm:$0xff]
  %v143 = vld [vmem:[%s1 + $0x308] sm:$0xff]
  %v144 = vld [vmem:[%s1 + $0x310] sm:$0xff]
  %v145 = vld [vmem:[%s1 + $0x318] sm:$0xff]
  %v146 = vld [vmem:[%s1 + $0x320] sm:$0xff]
  %v147 = vld [vmem:[%s1 + $0x328] sm:$0xff]
  %v148 = vld [vmem:[%s1 + $0x330] sm:$0xff]
  %v149 = vld [vmem:[%s1 + $0x338] sm:$0xff]
  %v150 = vld [vmem:[%s1 + $0x340] sm:$0xff]
  %v151 = vld [vmem:[%s1 + $0x348] sm:$0xff]
  %v152 = vld [vmem:[%s1 + $0x350] sm:$0xff]
  %v153 = vld [vmem:[%s1 + $0x358] sm:$0xff]
  %v154 = vld [vmem:[%s1 + $0x360] sm:$0xff]
  %v155 = vld [vmem:[%s1 + $0x368] sm:$0xff]
  %v156 = vld [vmem:[%s1 + $0x370] sm:$0xff]
  %v157 = vld [vmem:[%s1 + $0x378] sm:$0xff]
  %v158 = vld [vmem:[%s1 + $0x380] sm:$0xff]
  %v159 = vld [vmem:[%s1 + $0x388] sm:$0xff]
  %v160 = vld [vmem:[%s1 + $0x390] sm:$0xff]
  %v161 = vld [vmem:[%s1 + $0x398] sm:$0xff]
  %v162 = vld [vmem:[%s1 + $0x3a0] sm:$0xff]
  %v163 = vld [vmem:[%s1 + $0x3a8] sm:$0xff]
  %v164 = vld [vmem:[%s1 + $0x3b0] sm:$0xff]
  %v165 = vld [vmem:[%s1 + $0x3b8] sm:$0xff]
  %v166 = vld [vmem:[%s1 + $0x3c0] sm:$0xff]
  %v167 = vld [vmem:[%s1 + $0x3c8] sm:$0xff]
  %v168 = vld [vmem:[%s1 + $0x3d0] sm:$0xff]
  %v169 = vld [vmem:[%s1 + $0x3d8] sm:$0xff]
  %v170 = vld [vmem:[%s1 + $0x3e0] sm:$0xff]
  %v171 = vld [vmem:[%s1 + $0x3e8] sm:$0xff]
  %v172 = vld [vmem:[%s1 + $0x3f0] sm:$0xff]
  %v173 = vld [vmem:[%s1 + $0x3f8] sm:$0xff]
  %v174 = vld [vmem:[%s2] sm:$0xff]
  %v175 = vld [vmem:[%s2 + $0x8] sm:$0xff]
  %v176 = vld [vmem:[%s2 + $0x10] sm:$0xff]
  %v177 = vld [vmem:[%s2 + $0x18] sm:$0xff]
  %v178 = vld [vmem:[%s2 + $0x20] sm:$0xff]
  %v179 = vld [vmem:[%s2 + $0x28] sm:$0xff]
  %v180 = vld [vmem:[%s2 + $0x30] sm:$0xff]
  %v181 = vld [vmem:[%s2 + $0x38] sm:$0xff]
  %183 = vset.pattern.permute.xlu0 0
  %184 = vperm.xlu0 %183, %v174
  %v185 = vpop.permute.xlu0 %184
  %188 = vset.pattern.permute.xlu0 0
  %189 = vperm.xlu0 %188, %v175
  %v190 = vpop.permute.xlu0 %189
  %193 = vset.pattern.permute.xlu0 0
  %194 = vperm.xlu0 %193, %v176
  %v195 = vpop.permute.xlu0 %194
  %198 = vset.pattern.permute.xlu0 0
  %199 = vperm.xlu0 %198, %v177
  %v200 = vpop.permute.xlu0 %199
  %203 = vset.pattern.permute.xlu0 0
  %204 = vperm.xlu0 %203, %v178
  %v205 = vpop.permute.xlu0 %204
  %208 = vset.pattern.permute.xlu0 0
  %209 = vperm.xlu0 %208, %v179
  %v210 = vpop.permute.xlu0 %209
  %213 = vset.pattern.permute.xlu0 0
  %214 = vperm.xlu0 %213, %v180
  %v215 = vpop.permute.xlu0 %214
  %218 = vset.pattern.permute.xlu0 0
  %219 = vperm.xlu0 %218, %v181
  %v220 = vpop.permute.xlu0 %219
  %222 = vmatpush.msra.mxu0 %v76
  %223 = vmatpush.msra.mxu0 %v74
  %224 = vmatpush.msra.mxu0 %v72
  %225 = vmatpush.msra.mxu0 %v70
  %226 = vmatpush.msra.mxu0 %v68
  %227 = vmatpush.msra.mxu0 %v66
  %228 = vmatpush.msra.mxu0 %v64
  %229 = vmatpush.msra.mxu0 %v62
  %230 = vmatpush.msra.mxu0 %v60
  %231 = vmatpush.msra.mxu0 %v58
  %232 = vmatpush.msra.mxu0 %v56
  %233 = vmatpush.msra.mxu0 %v54
  %234 = vmatpush.msra.mxu0 %v52
  %235 = vmatpush.msra.mxu0 %v50
  %236 = vmatpush.msra.mxu0 %v48
  %237 = vmatpush.msra.mxu0 %v46
  %238 = vmatmul.f32.gmra.mxu0 %v14
  %v239 = vpop.f32.mrf.mxu0
  %v240 = vadd.f32 %v185, %v239
  %241 = vmatmul.f32.gmra.mxu0 %v18
  %v242 = vpop.f32.mrf.mxu0
  %v243 = vadd.f32 %v190, %v242
  %244 = vmatmul.f32.gmra.mxu0 %v22
  %v245 = vpop.f32.mrf.mxu0
  %v246 = vadd.f32 %v195, %v245
  %247 = vmatmul.f32.gmra.mxu0 %v26
  %v248 = vpop.f32.mrf.mxu0
  %v249 = vadd.f32 %v200, %v248
  %250 = vmatmul.f32.gmra.mxu0 %v30
  %v251 = vpop.f32.mrf.mxu0
  %v252 = vadd.f32 %v205, %v251
  %253 = vmatmul.f32.gmra.mxu0 %v34
  %v254 = vpop.f32.mrf.mxu0
  %v255 = vadd.f32 %v210, %v254
  %256 = vmatmul.f32.gmra.mxu0 %v38
  %v257 = vpop.f32.mrf.mxu0
  %v258 = vadd.f32 %v215, %v257
  %259 = vmatmul.f32.gmra.mxu0 %v42
  %v260 = vpop.f32.mrf.mxu0
  %v261 = vadd.f32 %v220, %v260
  %262 = vdwg.mxu0
  %263 = vmatpush.msra.mxu0 %v108
  %264 = vmatpush.msra.mxu0 %v106
  %265 = vmatpush.msra.mxu0 %v104
  %266 = vmatpush.msra.mxu0 %v102
  %267 = vmatpush.msra.mxu0 %v100
  %268 = vmatpush.msra.mxu0 %v98
  %269 = vmatpush.msra.mxu0 %v96
  %270 = vmatpush.msra.mxu0 %v94
  %271 = vmatpush.msra.mxu0 %v92
  %272 = vmatpush.msra.mxu0 %v90
  %273 = vmatpush.msra.mxu0 %v88
  %274 = vmatpush.msra.mxu0 %v86
  %275 = vmatpush.msra.mxu0 %v84
  %276 = vmatpush.msra.mxu0 %v82
  %277 = vmatpush.msra.mxu0 %v80
  %278 = vmatpush.msra.mxu0 %v78
  %279 = vmatmul.f32.gmra.mxu0 %v15
  %v280 = vpop.f32.mrf.mxu0
  %v281 = vadd.f32 %v240, %v280
  %282 = vmatmul.f32.gmra.mxu0 %v19
  %v283 = vpop.f32.mrf.mxu0
  %v284 = vadd.f32 %v243, %v283
  %285 = vmatmul.f32.gmra.mxu0 %v23
  %v286 = vpop.f32.mrf.mxu0
  %v287 = vadd.f32 %v246, %v286
  %288 = vmatmul.f32.gmra.mxu0 %v27
  %v289 = vpop.f32.mrf.mxu0
  %v290 = vadd.f32 %v249, %v289
  %291 = vmatmul.f32.gmra.mxu0 %v31
  %v292 = vpop.f32.mrf.mxu0
  %v293 = vadd.f32 %v252, %v292
  %294 = vmatmul.f32.gmra.mxu0 %v35
  %v295 = vpop.f32.mrf.mxu0
  %v296 = vadd.f32 %v255, %v295
  %297 = vmatmul.f32.gmra.mxu0 %v39
  %v298 = vpop.f32.mrf.mxu0
  %v299 = vadd.f32 %v258, %v298
  %300 = vmatmul.f32.gmra.mxu0 %v43
  %v301 = vpop.f32.mrf.mxu0
  %v302 = vadd.f32 %v261, %v301
  %303 = vdwg.mxu0
  %304 = vmatpush.msra.mxu0 %v140
  %305 = vmatpush.msra.mxu0 %v138
  %306 = vmatpush.msra.mxu0 %v136
  %307 = vmatpush.msra.mxu0 %v134
  %308 = vmatpush.msra.mxu0 %v132
  %309 = vmatpush.msra.mxu0 %v130
  %310 = vmatpush.msra.mxu0 %v128
  %311 = vmatpush.msra.mxu0 %v126
  %312 = vmatpush.msra.mxu0 %v124
  %313 = vmatpush.msra.mxu0 %v122
  %314 = vmatpush.msra.mxu0 %v120
  %315 = vmatpush.msra.mxu0 %v118
  %316 = vmatpush.msra.mxu0 %v116
  %317 = vmatpush.msra.mxu0 %v114
  %318 = vmatpush.msra.mxu0 %v112
  %319 = vmatpush.msra.mxu0 %v110
  %320 = vmatmul.f32.gmra.mxu0 %v16
  %v321 = vpop.f32.mrf.mxu0
  %v322 = vadd.f32 %v281, %v321
  %323 = vmatmul.f32.gmra.mxu0 %v20
  %v324 = vpop.f32.mrf.mxu0
  %v325 = vadd.f32 %v284, %v324
  %326 = vmatmul.f32.gmra.mxu0 %v24
  %v327 = vpop.f32.mrf.mxu0
  %v328 = vadd.f32 %v287, %v327
  %329 = vmatmul.f32.gmra.mxu0 %v28
  %v330 = vpop.f32.mrf.mxu0
  %v331 = vadd.f32 %v290, %v330
  %332 = vmatmul.f32.gmra.mxu0 %v32
  %v333 = vpop.f32.mrf.mxu0
  %v334 = vadd.f32 %v293, %v333
  %335 = vmatmul.f32.gmra.mxu0 %v36
  %v336 = vpop.f32.mrf.mxu0
  %v337 = vadd.f32 %v296, %v336
  %338 = vmatmul.f32.gmra.mxu0 %v40
  %v339 = vpop.f32.mrf.mxu0
  %v340 = vadd.f32 %v299, %v339
  %341 = vmatmul.f32.gmra.mxu0 %v44
  %v342 = vpop.f32.mrf.mxu0
  %v343 = vadd.f32 %v302, %v342
  %344 = vdwg.mxu0
  %345 = vmatpush.msra.mxu0 %v172
  %346 = vmatpush.msra.mxu0 %v170
  %347 = vmatpush.msra.mxu0 %v168
  %348 = vmatpush.msra.mxu0 %v166
  %349 = vmatpush.msra.mxu0 %v164
  %350 = vmatpush.msra.mxu0 %v162
  %351 = vmatpush.msra.mxu0 %v160
  %352 = vmatpush.msra.mxu0 %v158
  %353 = vmatpush.msra.mxu0 %v156
  %354 = vmatpush.msra.mxu0 %v154
  %355 = vmatpush.msra.mxu0 %v152
  %356 = vmatpush.msra.mxu0 %v150
  %357 = vmatpush.msra.mxu0 %v148
  %358 = vmatpush.msra.mxu0 %v146
  %359 = vmatpush.msra.mxu0 %v144
  %360 = vmatpush.msra.mxu0 %v142
  %361 = vmatmul.f32.gmra.mxu0 %v17
  %v362 = vpop.f32.mrf.mxu0
  %v363 = vadd.f32 %v322, %v362
  %364 = vmatmul.f32.gmra.mxu0 %v21
  %v365 = vpop.f32.mrf.mxu0
  %v366 = vadd.f32 %v325, %v365
  %367 = vmatmul.f32.gmra.mxu0 %v25
  %v368 = vpop.f32.mrf.mxu0
  %v369 = vadd.f32 %v328, %v368
  %370 = vmatmul.f32.gmra.mxu0 %v29
  %v371 = vpop.f32.mrf.mxu0
  %v372 = vadd.f32 %v331, %v371
  %373 = vmatmul.f32.gmra.mxu0 %v33
  %v374 = vpop.f32.mrf.mxu0
  %v375 = vadd.f32 %v334, %v374
  %376 = vmatmul.f32.gmra.mxu0 %v37
  %v377 = vpop.f32.mrf.mxu0
  %v378 = vadd.f32 %v337, %v377
  %379 = vmatmul.f32.gmra.mxu0 %v41
  %v380 = vpop.f32.mrf.mxu0
  %v381 = vadd.f32 %v340, %v380
  %382 = vmatmul.f32.gmra.mxu0 %v45
  %v383 = vpop.f32.mrf.mxu0
  %v384 = vadd.f32 %v343, %v383
  %385 = vdwg.mxu0
  %386 = vmatpush.msra.mxu0 %v77
  %387 = vmatpush.msra.mxu0 %v75
  %388 = vmatpush.msra.mxu0 %v73
  %389 = vmatpush.msra.mxu0 %v71
  %390 = vmatpush.msra.mxu0 %v69
  %391 = vmatpush.msra.mxu0 %v67
  %392 = vmatpush.msra.mxu0 %v65
  %393 = vmatpush.msra.mxu0 %v63
  %394 = vmatpush.msra.mxu0 %v61
  %395 = vmatpush.msra.mxu0 %v59
  %396 = vmatpush.msra.mxu0 %v57
  %397 = vmatpush.msra.mxu0 %v55
  %398 = vmatpush.msra.mxu0 %v53
  %399 = vmatpush.msra.mxu0 %v51
  %400 = vmatpush.msra.mxu0 %v49
  %401 = vmatpush.msra.mxu0 %v47
  %402 = vmatmul.f32.gmra.mxu0 %v14
  %v403 = vpop.f32.mrf.mxu0
  %v404 = vadd.f32 %v185, %v403
  %405 = vmatmul.f32.gmra.mxu0 %v18
  %v406 = vpop.f32.mrf.mxu0
  %v407 = vadd.f32 %v190, %v406
  %408 = vmatmul.f32.gmra.mxu0 %v22
  %v409 = vpop.f32.mrf.mxu0
  %v410 = vadd.f32 %v195, %v409
  %411 = vmatmul.f32.gmra.mxu0 %v26
  %v412 = vpop.f32.mrf.mxu0
  %v413 = vadd.f32 %v200, %v412
  %414 = vmatmul.f32.gmra.mxu0 %v30
  %v415 = vpop.f32.mrf.mxu0
  %v416 = vadd.f32 %v205, %v415
  %417 = vmatmul.f32.gmra.mxu0 %v34
  %v418 = vpop.f32.mrf.mxu0
  %v419 = vadd.f32 %v210, %v418
  %420 = vmatmul.f32.gmra.mxu0 %v38
  %v421 = vpop.f32.mrf.mxu0
  %v422 = vadd.f32 %v215, %v421
  %423 = vmatmul.f32.gmra.mxu0 %v42
  %v424 = vpop.f32.mrf.mxu0
  %v425 = vadd.f32 %v220, %v424
  %426 = vdwg.mxu0
  %427 = vmatpush.msra.mxu0 %v109
  %428 = vmatpush.msra.mxu0 %v107
  %429 = vmatpush.msra.mxu0 %v105
  %430 = vmatpush.msra.mxu0 %v103
  %431 = vmatpush.msra.mxu0 %v101
  %432 = vmatpush.msra.mxu0 %v99
  %433 = vmatpush.msra.mxu0 %v97
  %434 = vmatpush.msra.mxu0 %v95
  %435 = vmatpush.msra.mxu0 %v93
  %436 = vmatpush.msra.mxu0 %v91
  %437 = vmatpush.msra.mxu0 %v89
  %438 = vmatpush.msra.mxu0 %v87
  %439 = vmatpush.msra.mxu0 %v85
  %440 = vmatpush.msra.mxu0 %v83
  %441 = vmatpush.msra.mxu0 %v81
  %442 = vmatpush.msra.mxu0 %v79
  %443 = vmatmul.f32.gmra.mxu0 %v15
  %v444 = vpop.f32.mrf.mxu0
  %v445 = vadd.f32 %v404, %v444
  %446 = vmatmul.f32.gmra.mxu0 %v19
  %v447 = vpop.f32.mrf.mxu0
  %v448 = vadd.f32 %v407, %v447
  %449 = vmatmul.f32.gmra.mxu0 %v23
  %v450 = vpop.f32.mrf.mxu0
  %v451 = vadd.f32 %v410, %v450
  %452 = vmatmul.f32.gmra.mxu0 %v27
  %v453 = vpop.f32.mrf.mxu0
  %v454 = vadd.f32 %v413, %v453
  %455 = vmatmul.f32.gmra.mxu0 %v31
  %v456 = vpop.f32.mrf.mxu0
  %v457 = vadd.f32 %v416, %v456
  %458 = vmatmul.f32.gmra.mxu0 %v35
  %v459 = vpop.f32.mrf.mxu0
  %v460 = vadd.f32 %v419, %v459
  %461 = vmatmul.f32.gmra.mxu0 %v39
  %v462 = vpop.f32.mrf.mxu0
  %v463 = vadd.f32 %v422, %v462
  %464 = vmatmul.f32.gmra.mxu0 %v43
  %v465 = vpop.f32.mrf.mxu0
  %v466 = vadd.f32 %v425, %v465
  %467 = vdwg.mxu0
  %468 = vmatpush.msra.mxu0 %v141
  %469 = vmatpush.msra.mxu0 %v139
  %470 = vmatpush.msra.mxu0 %v137
  %471 = vmatpush.msra.mxu0 %v135
  %472 = vmatpush.msra.mxu0 %v133
  %473 = vmatpush.msra.mxu0 %v131
  %474 = vmatpush.msra.mxu0 %v129
  %475 = vmatpush.msra.mxu0 %v127
  %476 = vmatpush.msra.mxu0 %v125
  %477 = vmatpush.msra.mxu0 %v123
  %478 = vmatpush.msra.mxu0 %v121
  %479 = vmatpush.msra.mxu0 %v119
  %480 = vmatpush.msra.mxu0 %v117
  %481 = vmatpush.msra.mxu0 %v115
  %482 = vmatpush.msra.mxu0 %v113
  %483 = vmatpush.msra.mxu0 %v111
  %484 = vmatmul.f32.gmra.mxu0 %v16
  %v485 = vpop.f32.mrf.mxu0
  %v486 = vadd.f32 %v445, %v485
  %487 = vmatmul.f32.gmra.mxu0 %v20
  %v488 = vpop.f32.mrf.mxu0
  %v489 = vadd.f32 %v448, %v488
  %490 = vmatmul.f32.gmra.mxu0 %v24
  %v491 = vpop.f32.mrf.mxu0
  %v492 = vadd.f32 %v451, %v491
  %493 = vmatmul.f32.gmra.mxu0 %v28
  %v494 = vpop.f32.mrf.mxu0
  %v495 = vadd.f32 %v454, %v494
  %496 = vmatmul.f32.gmra.mxu0 %v32
  %v497 = vpop.f32.mrf.mxu0
  %v498 = vadd.f32 %v457, %v497
  %499 = vmatmul.f32.gmra.mxu0 %v36
  %v500 = vpop.f32.mrf.mxu0
  %v501 = vadd.f32 %v460, %v500
  %502 = vmatmul.f32.gmra.mxu0 %v40
  %v503 = vpop.f32.mrf.mxu0
  %v504 = vadd.f32 %v463, %v503
  %505 = vmatmul.f32.gmra.mxu0 %v44
  %v506 = vpop.f32.mrf.mxu0
  %v507 = vadd.f32 %v466, %v506
  %508 = vdwg.mxu0
  %509 = vmatpush.msra.mxu0 %v173
  %510 = vmatpush.msra.mxu0 %v171
  %511 = vmatpush.msra.mxu0 %v169
  %512 = vmatpush.msra.mxu0 %v167
  %513 = vmatpush.msra.mxu0 %v165
  %514 = vmatpush.msra.mxu0 %v163
  %515 = vmatpush.msra.mxu0 %v161
  %516 = vmatpush.msra.mxu0 %v159
  %517 = vmatpush.msra.mxu0 %v157
  %518 = vmatpush.msra.mxu0 %v155
  %519 = vmatpush.msra.mxu0 %v153
  %520 = vmatpush.msra.mxu0 %v151
  %521 = vmatpush.msra.mxu0 %v149
  %522 = vmatpush.msra.mxu0 %v147
  %523 = vmatpush.msra.mxu0 %v145
  %524 = vmatpush.msra.mxu0 %v143
  %525 = vmatmul.f32.gmra.mxu0 %v17
  %v526 = vpop.f32.mrf.mxu0
  %v527 = vadd.f32 %v486, %v526
  %528 = vmatmul.f32.gmra.mxu0 %v21
  %v529 = vpop.f32.mrf.mxu0
  %v530 = vadd.f32 %v489, %v529
  %531 = vmatmul.f32.gmra.mxu0 %v25
  %v532 = vpop.f32.mrf.mxu0
  %v533 = vadd.f32 %v492, %v532
  %534 = vmatmul.f32.gmra.mxu0 %v29
  %v535 = vpop.f32.mrf.mxu0
  %v536 = vadd.f32 %v495, %v535
  %537 = vmatmul.f32.gmra.mxu0 %v33
  %v538 = vpop.f32.mrf.mxu0
  %v539 = vadd.f32 %v498, %v538
  %540 = vmatmul.f32.gmra.mxu0 %v37
  %v541 = vpop.f32.mrf.mxu0
  %v542 = vadd.f32 %v501, %v541
  %543 = vmatmul.f32.gmra.mxu0 %v41
  %v544 = vpop.f32.mrf.mxu0
  %v545 = vadd.f32 %v504, %v544
  %546 = vmatmul.f32.gmra.mxu0 %v45
  %v547 = vpop.f32.mrf.mxu0
  %v548 = vadd.f32 %v507, %v547
  %549 = vdwg.mxu0
  %v550 = vmax.f32 %v363, 0.0
  %v551 = vmax.f32 %v527, 0.0
  %v552 = vmax.f32 %v366, 0.0
  %v553 = vmax.f32 %v530, 0.0
  %v554 = vmax.f32 %v369, 0.0
  %v555 = vmax.f32 %v533, 0.0
  %v556 = vmax.f32 %v372, 0.0
  %v557 = vmax.f32 %v536, 0.0
  %v558 = vmax.f32 %v375, 0.0
  %v559 = vmax.f32 %v539, 0.0
  %v560 = vmax.f32 %v378, 0.0
  %v561 = vmax.f32 %v542, 0.0
  %v562 = vmax.f32 %v381, 0.0
  %v563 = vmax.f32 %v545, 0.0
  %v564 = vmax.f32 %v384, 0.0
  %v565 = vmax.f32 %v548, 0.0
  %566 = vst [vmem:[%s3] sm:$0xff] %v550
  %vm567 = vcmask 523264
  %568 = vst.msk [vmem:[%s3 + $0x8] sm:$0xff] %vm567, %v551
  %569 = vst [vmem:[%s3 + $0x10] sm:$0xff] %v552
  %570 = vst.msk [vmem:[%s3 + $0x18] sm:$0xff] %vm567, %v553
  %571 = vst [vmem:[%s3 + $0x20] sm:$0xff] %v554
  %572 = vst.msk [vmem:[%s3 + $0x28] sm:$0xff] %vm567, %v555
  %573 = vst [vmem:[%s3 + $0x30] sm:$0xff] %v556
  %574 = vst.msk [vmem:[%s3 + $0x38] sm:$0xff] %vm567, %v557
  %575 = vst [vmem:[%s3 + $0x40] sm:$0xff] %v558
  %576 = vst.msk [vmem:[%s3 + $0x48] sm:$0xff] %vm567, %v559
  %577 = vst [vmem:[%s3 + $0x50] sm:$0xff] %v560
  %578 = vst.msk [vmem:[%s3 + $0x58] sm:$0xff] %vm567, %v561
  %579 = vst [vmem:[%s3 + $0x60] sm:$0xff] %v562
  %580 = vst.msk [vmem:[%s3 + $0x68] sm:$0xff] %vm567, %v563
  %581 = vst [vmem:[%s3 + $0x70] sm:$0xff] %v564
  %582 = vst.msk [vmem:[%s3 + $0x78] sm:$0xff] %vm567, %v565
  // Predicated region
  $region14: #{qnetwork_cnn_forward.5} parent=0 // pred_check
    _
  $region15: #{qnetwork_cnn_forward.5} parent=0 // pred_check_branch
    %584 = sbr.rel (0) target = $region17
  $region16: #{qnetwork_cnn_forward.5} parent=0 // pred_region
    _
  $region17: #{qnetwork_cnn_forward.5} parent=0 // pred_fallthru
    _
  // Predicated region
  $region18: #{qnetwork_cnn_forward.5} parent=0 // pred_check
    _
  $region19: #{qnetwork_cnn_forward.5} parent=0 // pred_check_branch
    %586 = sbr.rel (0) target = $region21
  $region20: #{qnetwork_cnn_forward.5} parent=0 // pred_region
    _
  $region21: #{qnetwork_cnn_forward.5} parent=0 // pred_fallthru
    _

// kernel: qnetwork_cnn_forward.6
$region0: #{qnetwork_cnn_forward.6}
  #allocation0 [shape = 'u32[]', space=smem, size = 0x4, offset = 0x4, fixed_abs, tag = 'smem constant byte address 0x4 - core index']
  #allocation1 [shape = 'u32[72,128]{1,0:T(1,128)}', space=vmem, size = 0x9000, scoped, tag = 'internal scratch']
  %s0 = inlined_call_operand.vmem [shape: f32[64,576], index: 0, kind: input, shape index: {}]
  %s1 = inlined_call_operand.vmem [shape: f32[576,140], index: 1, kind: input, shape index: {}]
  %s2 = inlined_call_operand.vmem [shape: f32[64,1], index: 2, kind: input, shape index: {}]
  %s3 = inlined_call_operand.vmem [shape: f32[64,140], index: 3, kind: output, shape index: {}]
  %s4 = sld [smem:[#allocation0]]
  $region22: #{qnetwork_cnn_forward.6} parent=0
    _
  %s6 = ssub.s32 1, %s4
  %s7 = scalar_select 0, %s6, %s4
  // Predicated region
  $region2: #{qnetwork_cnn_forward.6} parent=0 // pred_check
    _
  $region3: #{qnetwork_cnn_forward.6} parent=0 // pred_check_branch
    %9 = sbr.rel (0) target = $region5
  $region4: #{qnetwork_cnn_forward.6} parent=0 // pred_region
    _
  $region5: #{qnetwork_cnn_forward.6} parent=0 // pred_fallthru
    _
  // Predicated region
  $region6: #{qnetwork_cnn_forward.6} parent=0 // pred_check
    _
  $region7: #{qnetwork_cnn_forward.6} parent=0 // pred_check_branch
    %11 = sbr.rel (0) target = $region9
  $region8: #{qnetwork_cnn_forward.6} parent=0 // pred_region
    _
  $region9: #{qnetwork_cnn_forward.6} parent=0 // pred_fallthru
    _
  // Predicated region
  $region10: #{qnetwork_cnn_forward.6} parent=0 // pred_check
    _
  $region11: #{qnetwork_cnn_forward.6} parent=0 // pred_check_branch
    %13 = sbr.rel (0) target = $region13
  $region12: #{qnetwork_cnn_forward.6} parent=0 // pred_region
    _
  $region13: #{qnetwork_cnn_forward.6} parent=0 // pred_fallthru
    _
  %v14 = vld [vmem:[%s0] sm:$0xff]
  %v15 = vld [vmem:[%s0 + $0x8] sm:$0xff]
  %v16 = vld [vmem:[%s0 + $0x10] sm:$0xff]
  %v17 = vld [vmem:[%s0 + $0x18] sm:$0xff]
  %v18 = vld [vmem:[%s0 + $0x20] sm:$0xff]
  %v19 = vld [vmem:[%s0 + $0x28] sm:$0xff]
  %v20 = vld [vmem:[%s0 + $0x30] sm:$0xff]
  %v21 = vld [vmem:[%s0 + $0x38] sm:$0xff]
  %v22 = vld [vmem:[%s0 + $0x40] sm:$0xff]
  %v23 = vld [vmem:[%s0 + $0x48] sm:$0xff]
  %v24 = vld [vmem:[%s0 + $0x50] sm:$0xff]
  %v25 = vld [vmem:[%s0 + $0x58] sm:$0xff]
  %v26 = vld [vmem:[%s0 + $0x60] sm:$0xff]
  %v27 = vld [vmem:[%s0 + $0x68] sm:$0xff]
  %v28 = vld [vmem:[%s0 + $0x70] sm:$0xff]
  %v29 = vld [vmem:[%s0 + $0x78] sm:$0xff]
  %v30 = vld [vmem:[%s0 + $0x80] sm:$0xff]
  %v31 = vld [vmem:[%s0 + $0x88] sm:$0xff]
  %v32 = vld [vmem:[%s0 + $0x90] sm:$0xff]
  %v33 = vld [vmem:[%s0 + $0x98] sm:$0xff]
  %v34 = vld [vmem:[%s0 + $0xa0] sm:$0xff]
  %v35 = vld [vmem:[%s0 + $0xa8] sm:$0xff]
  %v36 = vld [vmem:[%s0 + $0xb0] sm:$0xff]
  %v37 = vld [vmem:[%s0 + $0xb8] sm:$0xff]
  %v38 = vld [vmem:[%s0 + $0xc0] sm:$0xff]
  %v39 = vld [vmem:[%s0 + $0xc8] sm:$0xff]
  %v40 = vld [vmem:[%s0 + $0xd0] sm:$0xff]
  %v41 = vld [vmem:[%s0 + $0xd8] sm:$0xff]
  %v42 = vld [vmem:[%s0 + $0xe0] sm:$0xff]
  %v43 = vld [vmem:[%s0 + $0xe8] sm:$0xff]
  %v44 = vld [vmem:[%s0 + $0xf0] sm:$0xff]
  %v45 = vld [vmem:[%s0 + $0xf8] sm:$0xff]
  %v46 = vld [vmem:[%s0 + $0x100] sm:$0xff]
  %v47 = vld [vmem:[%s0 + $0x108] sm:$0xff]
  %v48 = vld [vmem:[%s0 + $0x110] sm:$0xff]
  %v49 = vld [vmem:[%s0 + $0x118] sm:$0xff]
  %v50 = vld [vmem:[%s0 + $0x120] sm:$0xff]
  %v51 = vld [vmem:[%s0 + $0x128] sm:$0xff]
  %v52 = vld [vmem:[%s0 + $0x130] sm:$0xff]
  %v53 = vld [vmem:[%s0 + $0x138] sm:$0xff]
  %v54 = vld [vmem:[%s1] sm:$0xff]
  %v55 = vld [vmem:[%s1 + $0x8] sm:$0xff]
  %v56 = vld [vmem:[%s1 + $0x10] sm:$0xff]
  %v57 = vld [vmem:[%s1 + $0x18] sm:$0xff]
  %v58 = vld [vmem:[%s1 + $0x20] sm:$0xff]
  %v59 = vld [vmem:[%s1 + $0x28] sm:$0xff]
  %v60 = vld [vmem:[%s1 + $0x30] sm:$0xff]
  %v61 = vld [vmem:[%s1 + $0x38] sm:$0xff]
  %v62 = vld [vmem:[%s1 + $0x40] sm:$0xff]
  %v63 = vld [vmem:[%s1 + $0x48] sm:$0xff]
  %v64 = vld [vmem:[%s1 + $0x50] sm:$0xff]
  %v65 = vld [vmem:[%s1 + $0x58] sm:$0xff]
  %v66 = vld [vmem:[%s1 + $0x60] sm:$0xff]
  %v67 = vld [vmem:[%s1 + $0x68] sm:$0xff]
  %v68 = vld [vmem:[%s1 + $0x70] sm:$0xff]
  %v69 = vld [vmem:[%s1 + $0x78] sm:$0xff]
  %v70 = vld [vmem:[%s1 + $0x80] sm:$0xff]
  %v71 = vld [vmem:[%s1 + $0x88] sm:$0xff]
  %v72 = vld [vmem:[%s1 + $0x90] sm:$0xff]
  %v73 = vld [vmem:[%s1 + $0x98] sm:$0xff]
  %v74 = vld [vmem:[%s1 + $0xa0] sm:$0xff]
  %v75 = vld [vmem:[%s1 + $0xa8] sm:$0xff]
  %v76 = vld [vmem:[%s1 + $0xb0] sm:$0xff]
  %v77 = vld [vmem:[%s1 + $0xb8] sm:$0xff]
  %v78 = vld [vmem:[%s1 + $0xc0] sm:$0xff]
  %v79 = vld [vmem:[%s1 + $0xc8] sm:$0xff]
  %v80 = vld [vmem:[%s1 + $0xd0] sm:$0xff]
  %v81 = vld [vmem:[%s1 + $0xd8] sm:$0xff]
  %v82 = vld [vmem:[%s1 + $0xe0] sm:$0xff]
  %v83 = vld [vmem:[%s1 + $0xe8] sm:$0xff]
  %v84 = vld [vmem:[%s1 + $0xf0] sm:$0xff]
  %v85 = vld [vmem:[%s1 + $0xf8] sm:$0xff]
  %v86 = vld [vmem:[%s1 + $0x100] sm:$0xff]
  %v87 = vld [vmem:[%s1 + $0x108] sm:$0xff]
  %v88 = vld [vmem:[%s1 + $0x110] sm:$0xff]
  %v89 = vld [vmem:[%s1 + $0x118] sm:$0xff]
  %v90 = vld [vmem:[%s1 + $0x120] sm:$0xff]
  %v91 = vld [vmem:[%s1 + $0x128] sm:$0xff]
  %v92 = vld [vmem:[%s1 + $0x130] sm:$0xff]
  %v93 = vld [vmem:[%s1 + $0x138] sm:$0xff]
  %v94 = vld [vmem:[%s1 + $0x140] sm:$0xff]
  %v95 = vld [vmem:[%s1 + $0x148] sm:$0xff]
  %v96 = vld [vmem:[%s1 + $0x150] sm:$0xff]
  %v97 = vld [vmem:[%s1 + $0x158] sm:$0xff]
  %v98 = vld [vmem:[%s1 + $0x160] sm:$0xff]
  %v99 = vld [vmem:[%s1 + $0x168] sm:$0xff]
  %v100 = vld [vmem:[%s1 + $0x170] sm:$0xff]
  %v101 = vld [vmem:[%s1 + $0x178] sm:$0xff]
  %v102 = vld [vmem:[%s1 + $0x180] sm:$0xff]
  %v103 = vld [vmem:[%s1 + $0x188] sm:$0xff]
  %v104 = vld [vmem:[%s1 + $0x190] sm:$0xff]
  %v105 = vld [vmem:[%s1 + $0x198] sm:$0xff]
  %v106 = vld [vmem:[%s1 + $0x1a0] sm:$0xff]
  %v107 = vld [vmem:[%s1 + $0x1a8] sm:$0xff]
  %v108 = vld [vmem:[%s1 + $0x1b0] sm:$0xff]
  %v109 = vld [vmem:[%s1 + $0x1b8] sm:$0xff]
  %v110 = vld [vmem:[%s1 + $0x1c0] sm:$0xff]
  %v111 = vld [vmem:[%s1 + $0x1c8] sm:$0xff]
  %v112 = vld [vmem:[%s1 + $0x1d0] sm:$0xff]
  %v113 = vld [vmem:[%s1 + $0x1d8] sm:$0xff]
  %v114 = vld [vmem:[%s1 + $0x1e0] sm:$0xff]
  %v115 = vld [vmem:[%s1 + $0x1e8] sm:$0xff]
  %v116 = vld [vmem:[%s1 + $0x1f0] sm:$0xff]
  %v117 = vld [vmem:[%s1 + $0x1f8] sm:$0xff]
  %v118 = vld [vmem:[%s1 + $0x200] sm:$0xff]
  %v119 = vld [vmem:[%s1 + $0x208] sm:$0xff]
  %v120 = vld [vmem:[%s1 + $0x210] sm:$0xff]
  %v121 = vld [vmem:[%s1 + $0x218] sm:$0xff]
  %v122 = vld [vmem:[%s1 + $0x220] sm:$0xff]
  %v123 = vld [vmem:[%s1 + $0x228] sm:$0xff]
  %v124 = vld [vmem:[%s1 + $0x230] sm:$0xff]
  %v125 = vld [vmem:[%s1 + $0x238] sm:$0xff]
  %v126 = vld [vmem:[%s1 + $0x240] sm:$0xff]
  %v127 = vld [vmem:[%s1 + $0x248] sm:$0xff]
  %v128 = vld [vmem:[%s1 + $0x250] sm:$0xff]
  %v129 = vld [vmem:[%s1 + $0x258] sm:$0xff]
  %v130 = vld [vmem:[%s1 + $0x260] sm:$0xff]
  %v131 = vld [vmem:[%s1 + $0x268] sm:$0xff]
  %v132 = vld [vmem:[%s1 + $0x270] sm:$0xff]
  %v133 = vld [vmem:[%s1 + $0x278] sm:$0xff]
  %v134 = vld [vmem:[%s1 + $0x280] sm:$0xff]
  %v135 = vld [vmem:[%s1 + $0x288] sm:$0xff]
  %v136 = vld [vmem:[%s1 + $0x290] sm:$0xff]
  %v137 = vld [vmem:[%s1 + $0x298] sm:$0xff]
  %v138 = vld [vmem:[%s1 + $0x2a0] sm:$0xff]
  %v139 = vld [vmem:[%s1 + $0x2a8] sm:$0xff]
  %v140 = vld [vmem:[%s1 + $0x2b0] sm:$0xff]
  %v141 = vld [vmem:[%s1 + $0x2b8] sm:$0xff]
  %v142 = vld [vmem:[%s1 + $0x2c0] sm:$0xff]
  %v143 = vld [vmem:[%s1 + $0x2c8] sm:$0xff]
  %v144 = vld [vmem:[%s1 + $0x2d0] sm:$0xff]
  %v145 = vld [vmem:[%s1 + $0x2d8] sm:$0xff]
  %v146 = vld [vmem:[%s1 + $0x2e0] sm:$0xff]
  %v147 = vld [vmem:[%s1 + $0x2e8] sm:$0xff]
  %v148 = vld [vmem:[%s1 + $0x2f0] sm:$0xff]
  %v149 = vld [vmem:[%s1 + $0x2f8] sm:$0xff]
  %v150 = vld [vmem:[%s1 + $0x300] sm:$0xff]
  %v151 = vld [vmem:[%s1 + $0x308] sm:$0xff]
  %v152 = vld [vmem:[%s1 + $0x310] sm:$0xff]
  %v153 = vld [vmem:[%s1 + $0x318] sm:$0xff]
  %v154 = vld [vmem:[%s1 + $0x320] sm:$0xff]
  %v155 = vld [vmem:[%s1 + $0x328] sm:$0xff]
  %v156 = vld [vmem:[%s1 + $0x330] sm:$0xff]
  %v157 = vld [vmem:[%s1 + $0x338] sm:$0xff]
  %v158 = vld [vmem:[%s1 + $0x340] sm:$0xff]
  %v159 = vld [vmem:[%s1 + $0x348] sm:$0xff]
  %v160 = vld [vmem:[%s1 + $0x350] sm:$0xff]
  %v161 = vld [vmem:[%s1 + $0x358] sm:$0xff]
  %v162 = vld [vmem:[%s1 + $0x360] sm:$0xff]
  %v163 = vld [vmem:[%s1 + $0x368] sm:$0xff]
  %v164 = vld [vmem:[%s1 + $0x370] sm:$0xff]
  %v165 = vld [vmem:[%s1 + $0x378] sm:$0xff]
  %v166 = vld [vmem:[%s1 + $0x380] sm:$0xff]
  %v167 = vld [vmem:[%s1 + $0x388] sm:$0xff]
  %v168 = vld [vmem:[%s1 + $0x390] sm:$0xff]
  %v169 = vld [vmem:[%s1 + $0x398] sm:$0xff]
  %v170 = vld [vmem:[%s1 + $0x3a0] sm:$0xff]
  %v171 = vld [vmem:[%s1 + $0x3a8] sm:$0xff]
  %v172 = vld [vmem:[%s1 + $0x3b0] sm:$0xff]
  %v173 = vld [vmem:[%s1 + $0x3b8] sm:$0xff]
  %v174 = vld [vmem:[%s1 + $0x3c0] sm:$0xff]
  %v175 = vld [vmem:[%s1 + $0x3c8] sm:$0xff]
  %v176 = vld [vmem:[%s1 + $0x3d0] sm:$0xff]
  %v177 = vld [vmem:[%s1 + $0x3d8] sm:$0xff]
  %v178 = vld [vmem:[%s1 + $0x3e0] sm:$0xff]
  %v179 = vld [vmem:[%s1 + $0x3e8] sm:$0xff]
  %v180 = vld [vmem:[%s1 + $0x3f0] sm:$0xff]
  %v181 = vld [vmem:[%s1 + $0x3f8] sm:$0xff]
  %v182 = vld [vmem:[%s1 + $0x400] sm:$0xff]
  %v183 = vld [vmem:[%s1 + $0x408] sm:$0xff]
  %v184 = vld [vmem:[%s1 + $0x410] sm:$0xff]
  %v185 = vld [vmem:[%s1 + $0x418] sm:$0xff]
  %v186 = vld [vmem:[%s1 + $0x420] sm:$0xff]
  %v187 = vld [vmem:[%s1 + $0x428] sm:$0xff]
  %v188 = vld [vmem:[%s1 + $0x430] sm:$0xff]
  %v189 = vld [vmem:[%s1 + $0x438] sm:$0xff]
  %v190 = vld [vmem:[%s1 + $0x440] sm:$0xff]
  %v191 = vld [vmem:[%s1 + $0x448] sm:$0xff]
  %v192 = vld [vmem:[%s1 + $0x450] sm:$0xff]
  %v193 = vld [vmem:[%s1 + $0x458] sm:$0xff]
  %v194 = vld [vmem:[%s1 + $0x460] sm:$0xff]
  %v195 = vld [vmem:[%s1 + $0x468] sm:$0xff]
  %v196 = vld [vmem:[%s1 + $0x470] sm:$0xff]
  %v197 = vld [vmem:[%s1 + $0x478] sm:$0xff]
  %v198 = vld [vmem:[%s2] sm:$0xff]
  %v199 = vld [vmem:[%s2 + $0x8] sm:$0xff]
  %v200 = vld [vmem:[%s2 + $0x10] sm:$0xff]
  %v201 = vld [vmem:[%s2 + $0x18] sm:$0xff]
  %v202 = vld [vmem:[%s2 + $0x20] sm:$0xff]
  %v203 = vld [vmem:[%s2 + $0x28] sm:$0xff]
  %v204 = vld [vmem:[%s2 + $0x30] sm:$0xff]
  %v205 = vld [vmem:[%s2 + $0x38] sm:$0xff]
  %207 = vset.pattern.permute.xlu0 0
  %208 = vperm.xlu0 %207, %v198
  %v209 = vpop.permute.xlu0 %208
  %212 = vset.pattern.permute.xlu0 0
  %213 = vperm.xlu0 %212, %v199
  %v214 = vpop.permute.xlu0 %213
  %217 = vset.pattern.permute.xlu0 0
  %218 = vperm.xlu0 %217, %v200
  %v219 = vpop.permute.xlu0 %218
  %222 = vset.pattern.permute.xlu0 0
  %223 = vperm.xlu0 %222, %v201
  %v224 = vpop.permute.xlu0 %223
  %227 = vset.pattern.permute.xlu0 0
  %228 = vperm.xlu0 %227, %v202
  %v229 = vpop.permute.xlu0 %228
  %232 = vset.pattern.permute.xlu0 0
  %233 = vperm.xlu0 %232, %v203
  %v234 = vpop.permute.xlu0 %233
  %237 = vset.pattern.permute.xlu0 0
  %238 = vperm.xlu0 %237, %v204
  %v239 = vpop.permute.xlu0 %238
  %242 = vset.pattern.permute.xlu0 0
  %243 = vperm.xlu0 %242, %v205
  %v244 = vpop.permute.xlu0 %243
  %vm246 = vcmask 523264
  %v248 = vsel %vm246, %v18, 0
  %v251 = vsel %vm246, %v23, 0
  %v254 = vsel %vm246, %v28, 0
  %v257 = vsel %vm246, %v33, 0
  %v260 = vsel %vm246, %v38, 0
  %v263 = vsel %vm246, %v43, 0
  %v266 = vsel %vm246, %v48, 0
  %v269 = vsel %vm246, %v53, 0
  %271 = vmatpush.msra.mxu0 %v84
  %272 = vmatpush.msra.mxu0 %v82
  %273 = vmatpush.msra.mxu0 %v80
  %274 = vmatpush.msra.mxu0 %v78
  %275 = vmatpush.msra.mxu0 %v76
  %276 = vmatpush.msra.mxu0 %v74
  %277 = vmatpush.msra.mxu0 %v72
  %278 = vmatpush.msra.mxu0 %v70
  %279 = vmatpush.msra.mxu0 %v68
  %280 = vmatpush.msra.mxu0 %v66
  %281 = vmatpush.msra.mxu0 %v64
  %282 = vmatpush.msra.mxu0 %v62
  %283 = vmatpush.msra.mxu0 %v60
  %284 = vmatpush.msra.mxu0 %v58
  %285 = vmatpush.msra.mxu0 %v56
  %286 = vmatpush.msra.mxu0 %v54
  %287 = vmatmul.f32.gmra.mxu0 %v14
  %v288 = vpop.f32.mrf.mxu0
  %v289 = vadd.f32 %v209, %v288
  %290 = vmatmul.f32.gmra.mxu0 %v19
  %v291 = vpop.f32.mrf.mxu0
  %v292 = vadd.f32 %v214, %v291
  %293 = vmatmul.f32.gmra.mxu0 %v24
  %v294 = vpop.f32.mrf.mxu0
  %v295 = vadd.f32 %v219, %v294
  %296 = vmatmul.f32.gmra.mxu0 %v29
  %v297 = vpop.f32.mrf.mxu0
  %v298 = vadd.f32 %v224, %v297
  %299 = vmatmul.f32.gmra.mxu0 %v34
  %v300 = vpop.f32.mrf.mxu0
  %v301 = vadd.f32 %v229, %v300
  %302 = vmatmul.f32.gmra.mxu0 %v39
  %v303 = vpop.f32.mrf.mxu0
  %v304 = vadd.f32 %v234, %v303
  %305 = vmatmul.f32.gmra.mxu0 %v44
  %v306 = vpop.f32.mrf.mxu0
  %v307 = vadd.f32 %v239, %v306
  %308 = vmatmul.f32.gmra.mxu0 %v49
  %v309 = vpop.f32.mrf.mxu0
  %v310 = vadd.f32 %v244, %v309
  %311 = vdwg.mxu0
  %312 = vmatpush.msra.mxu0 %v116
  %313 = vmatpush.msra.mxu0 %v114
  %314 = vmatpush.msra.mxu0 %v112
  %315 = vmatpush.msra.mxu0 %v110
  %316 = vmatpush.msra.mxu0 %v108
  %317 = vmatpush.msra.mxu0 %v106
  %318 = vmatpush.msra.mxu0 %v104
  %319 = vmatpush.msra.mxu0 %v102
  %320 = vmatpush.msra.mxu0 %v100
  %321 = vmatpush.msra.mxu0 %v98
  %322 = vmatpush.msra.mxu0 %v96
  %323 = vmatpush.msra.mxu0 %v94
  %324 = vmatpush.msra.mxu0 %v92
  %325 = vmatpush.msra.mxu0 %v90
  %326 = vmatpush.msra.mxu0 %v88
  %327 = vmatpush.msra.mxu0 %v86
  %328 = vmatmul.f32.gmra.mxu0 %v15
  %v329 = vpop.f32.mrf.mxu0
  %v330 = vadd.f32 %v289, %v329
  %331 = vmatmul.f32.gmra.mxu0 %v20
  %v332 = vpop.f32.mrf.mxu0
  %v333 = vadd.f32 %v292, %v332
  %334 = vmatmul.f32.gmra.mxu0 %v25
  %v335 = vpop.f32.mrf.mxu0
  %v336 = vadd.f32 %v295, %v335
  %337 = vmatmul.f32.gmra.mxu0 %v30
  %v338 = vpop.f32.mrf.mxu0
  %v339 = vadd.f32 %v298, %v338
  %340 = vmatmul.f32.gmra.mxu0 %v35
  %v341 = vpop.f32.mrf.mxu0
  %v342 = vadd.f32 %v301, %v341
  %343 = vmatmul.f32.gmra.mxu0 %v40
  %v344 = vpop.f32.mrf.mxu0
  %v345 = vadd.f32 %v304, %v344
  %346 = vmatmul.f32.gmra.mxu0 %v45
  %v347 = vpop.f32.mrf.mxu0
  %v348 = vadd.f32 %v307, %v347
  %349 = vmatmul.f32.gmra.mxu0 %v50
  %v350 = vpop.f32.mrf.mxu0
  %v351 = vadd.f32 %v310, %v350
  %352 = vdwg.mxu0
  %353 = vmatpush.msra.mxu0 %v148
  %354 = vmatpush.msra.mxu0 %v146
  %355 = vmatpush.msra.mxu0 %v144
  %356 = vmatpush.msra.mxu0 %v142
  %357 = vmatpush.msra.mxu0 %v140
  %358 = vmatpush.msra.mxu0 %v138
  %359 = vmatpush.msra.mxu0 %v136
  %360 = vmatpush.msra.mxu0 %v134
  %361 = vmatpush.msra.mxu0 %v132
  %362 = vmatpush.msra.mxu0 %v130
  %363 = vmatpush.msra.mxu0 %v128
  %364 = vmatpush.msra.mxu0 %v126
  %365 = vmatpush.msra.mxu0 %v124
  %366 = vmatpush.msra.mxu0 %v122
  %367 = vmatpush.msra.mxu0 %v120
  %368 = vmatpush.msra.mxu0 %v118
  %369 = vmatmul.f32.gmra.mxu0 %v16
  %v370 = vpop.f32.mrf.mxu0
  %v371 = vadd.f32 %v330, %v370
  %372 = vmatmul.f32.gmra.mxu0 %v21
  %v373 = vpop.f32.mrf.mxu0
  %v374 = vadd.f32 %v333, %v373
  %375 = vmatmul.f32.gmra.mxu0 %v26
  %v376 = vpop.f32.mrf.mxu0
  %v377 = vadd.f32 %v336, %v376
  %378 = vmatmul.f32.gmra.mxu0 %v31
  %v379 = vpop.f32.mrf.mxu0
  %v380 = vadd.f32 %v339, %v379
  %381 = vmatmul.f32.gmra.mxu0 %v36
  %v382 = vpop.f32.mrf.mxu0
  %v383 = vadd.f32 %v342, %v382
  %384 = vmatmul.f32.gmra.mxu0 %v41
  %v385 = vpop.f32.mrf.mxu0
  %v386 = vadd.f32 %v345, %v385
  %387 = vmatmul.f32.gmra.mxu0 %v46
  %v388 = vpop.f32.mrf.mxu0
  %v389 = vadd.f32 %v348, %v388
  %390 = vmatmul.f32.gmra.mxu0 %v51
  %v391 = vpop.f32.mrf.mxu0
  %v392 = vadd.f32 %v351, %v391
  %393 = vdwg.mxu0
  %394 = vmatpush.msra.mxu0 %v180
  %395 = vmatpush.msra.mxu0 %v178
  %396 = vmatpush.msra.mxu0 %v176
  %397 = vmatpush.msra.mxu0 %v174
  %398 = vmatpush.msra.mxu0 %v172
  %399 = vmatpush.msra.mxu0 %v170
  %400 = vmatpush.msra.mxu0 %v168
  %401 = vmatpush.msra.mxu0 %v166
  %402 = vmatpush.msra.mxu0 %v164
  %403 = vmatpush.msra.mxu0 %v162
  %404 = vmatpush.msra.mxu0 %v160
  %405 = vmatpush.msra.mxu0 %v158
  %406 = vmatpush.msra.mxu0 %v156
  %407 = vmatpush.msra.mxu0 %v154
  %408 = vmatpush.msra.mxu0 %v152
  %409 = vmatpush.msra.mxu0 %v150
  %410 = vmatmul.f32.gmra.mxu0 %v17
  %v411 = vpop.f32.mrf.mxu0
  %v412 = vadd.f32 %v371, %v411
  %413 = vmatmul.f32.gmra.mxu0 %v22
  %v414 = vpop.f32.mrf.mxu0
  %v415 = vadd.f32 %v374, %v414
  %416 = vmatmul.f32.gmra.mxu0 %v27
  %v417 = vpop.f32.mrf.mxu0
  %v418 = vadd.f32 %v377, %v417
  %419 = vmatmul.f32.gmra.mxu0 %v32
  %v420 = vpop.f32.mrf.mxu0
  %v421 = vadd.f32 %v380, %v420
  %422 = vmatmul.f32.gmra.mxu0 %v37
  %v423 = vpop.f32.mrf.mxu0
  %v424 = vadd.f32 %v383, %v423
  %425 = vmatmul.f32.gmra.mxu0 %v42
  %v426 = vpop.f32.mrf.mxu0
  %v427 = vadd.f32 %v386, %v426
  %428 = vmatmul.f32.gmra.mxu0 %v47
  %v429 = vpop.f32.mrf.mxu0
  %v430 = vadd.f32 %v389, %v429
  %431 = vmatmul.f32.gmra.mxu0 %v52
  %v432 = vpop.f32.mrf.mxu0
  %v433 = vadd.f32 %v392, %v432
  %434 = vdwg.mxu0
  %435 = vmatpush.msra.mxu0 0.0
  %436 = vmatpush.msra.mxu0 0.0
  %437 = vmatpush.msra.mxu0 0.0
  %438 = vmatpush.msra.mxu0 0.0
  %439 = vmatpush.msra.mxu0 0.0
  %440 = vmatpush.msra.mxu0 0.0
  %441 = vmatpush.msra.mxu0 0.0
  %442 = vmatpush.msra.mxu0 0.0
  %443 = vmatpush.msra.mxu0 %v196
  %444 = vmatpush.msra.mxu0 %v194
  %445 = vmatpush.msra.mxu0 %v192
  %446 = vmatpush.msra.mxu0 %v190
  %447 = vmatpush.msra.mxu0 %v188
  %448 = vmatpush.msra.mxu0 %v186
  %449 = vmatpush.msra.mxu0 %v184
  %450 = vmatpush.msra.mxu0 %v182
  %451 = vmatmul.f32.gmra.mxu0 %v248
  %v452 = vpop.f32.mrf.mxu0
  %v453 = vadd.f32 %v412, %v452
  %454 = vmatmul.f32.gmra.mxu0 %v251
  %v455 = vpop.f32.mrf.mxu0
  %v456 = vadd.f32 %v415, %v455
  %457 = vmatmul.f32.gmra.mxu0 %v254
  %v458 = vpop.f32.mrf.mxu0
  %v459 = vadd.f32 %v418, %v458
  %460 = vmatmul.f32.gmra.mxu0 %v257
  %v461 = vpop.f32.mrf.mxu0
  %v462 = vadd.f32 %v421, %v461
  %463 = vmatmul.f32.gmra.mxu0 %v260
  %v464 = vpop.f32.mrf.mxu0
  %v465 = vadd.f32 %v424, %v464
  %466 = vmatmul.f32.gmra.mxu0 %v263
  %v467 = vpop.f32.mrf.mxu0
  %v468 = vadd.f32 %v427, %v467
  %469 = vmatmul.f32.gmra.mxu0 %v266
  %v470 = vpop.f32.mrf.mxu0
  %v471 = vadd.f32 %v430, %v470
  %472 = vmatmul.f32.gmra.mxu0 %v269
  %v473 = vpop.f32.mrf.mxu0
  %v474 = vadd.f32 %v433, %v473
  %475 = vdwg.mxu0
  %476 = vmatpush.msra.mxu0 %v85
  %477 = vmatpush.msra.mxu0 %v83
  %478 = vmatpush.msra.mxu0 %v81
  %479 = vmatpush.msra.mxu0 %v79
  %480 = vmatpush.msra.mxu0 %v77
  %481 = vmatpush.msra.mxu0 %v75
  %482 = vmatpush.msra.mxu0 %v73
  %483 = vmatpush.msra.mxu0 %v71
  %484 = vmatpush.msra.mxu0 %v69
  %485 = vmatpush.msra.mxu0 %v67
  %486 = vmatpush.msra.mxu0 %v65
  %487 = vmatpush.msra.mxu0 %v63
  %488 = vmatpush.msra.mxu0 %v61
  %489 = vmatpush.msra.mxu0 %v59
  %490 = vmatpush.msra.mxu0 %v57
  %491 = vmatpush.msra.mxu0 %v55
  %492 = vmatmul.f32.gmra.mxu0 %v14
  %v493 = vpop.f32.mrf.mxu0
  %v494 = vadd.f32 %v209, %v493
  %495 = vmatmul.f32.gmra.mxu0 %v19
  %v496 = vpop.f32.mrf.mxu0
  %v497 = vadd.f32 %v214, %v496
  %498 = vmatmul.f32.gmra.mxu0 %v24
  %v499 = vpop.f32.mrf.mxu0
  %v500 = vadd.f32 %v219, %v499
  %501 = vmatmul.f32.gmra.mxu0 %v29
  %v502 = vpop.f32.mrf.mxu0
  %v503 = vadd.f32 %v224, %v502
  %504 = vmatmul.f32.gmra.mxu0 %v34
  %v505 = vpop.f32.mrf.mxu0
  %v506 = vadd.f32 %v229, %v505
  %507 = vmatmul.f32.gmra.mxu0 %v39
  %v508 = vpop.f32.mrf.mxu0
  %v509 = vadd.f32 %v234, %v508
  %510 = vmatmul.f32.gmra.mxu0 %v44
  %v511 = vpop.f32.mrf.mxu0
  %v512 = vadd.f32 %v239, %v511
  %513 = vmatmul.f32.gmra.mxu0 %v49
  %v514 = vpop.f32.mrf.mxu0
  %v515 = vadd.f32 %v244, %v514
  %516 = vdwg.mxu0
  %517 = vmatpush.msra.mxu0 %v117
  %518 = vmatpush.msra.mxu0 %v115
  %519 = vmatpush.msra.mxu0 %v113
  %520 = vmatpush.msra.mxu0 %v111
  %521 = vmatpush.msra.mxu0 %v109
  %522 = vmatpush.msra.mxu0 %v107
  %523 = vmatpush.msra.mxu0 %v105
  %524 = vmatpush.msra.mxu0 %v103
  %525 = vmatpush.msra.mxu0 %v101
  %526 = vmatpush.msra.mxu0 %v99
  %527 = vmatpush.msra.mxu0 %v97
  %528 = vmatpush.msra.mxu0 %v95
  %529 = vmatpush.msra.mxu0 %v93
  %530 = vmatpush.msra.mxu0 %v91
  %531 = vmatpush.msra.mxu0 %v89
  %532 = vmatpush.msra.mxu0 %v87
  %533 = vmatmul.f32.gmra.mxu0 %v15
  %v534 = vpop.f32.mrf.mxu0
  %v535 = vadd.f32 %v494, %v534
  %536 = vmatmul.f32.gmra.mxu0 %v20
  %v537 = vpop.f32.mrf.mxu0
  %v538 = vadd.f32 %v497, %v537
  %539 = vmatmul.f32.gmra.mxu0 %v25
  %v540 = vpop.f32.mrf.mxu0
  %v541 = vadd.f32 %v500, %v540
  %542 = vmatmul.f32.gmra.mxu0 %v30
  %v543 = vpop.f32.mrf.mxu0
  %v544 = vadd.f32 %v503, %v543
  %545 = vmatmul.f32.gmra.mxu0 %v35
  %v546 = vpop.f32.mrf.mxu0
  %v547 = vadd.f32 %v506, %v546
  %548 = vmatmul.f32.gmra.mxu0 %v40
  %v549 = vpop.f32.mrf.mxu0
  %v550 = vadd.f32 %v509, %v549
  %551 = vmatmul.f32.gmra.mxu0 %v45
  %v552 = vpop.f32.mrf.mxu0
  %v553 = vadd.f32 %v512, %v552
  %554 = vmatmul.f32.gmra.mxu0 %v50
  %v555 = vpop.f32.mrf.mxu0
  %v556 = vadd.f32 %v515, %v555
  %557 = vdwg.mxu0
  %558 = vmatpush.msra.mxu0 %v149
  %559 = vmatpush.msra.mxu0 %v147
  %560 = vmatpush.msra.mxu0 %v145
  %561 = vmatpush.msra.mxu0 %v143
  %562 = vmatpush.msra.mxu0 %v141
  %563 = vmatpush.msra.mxu0 %v139
  %564 = vmatpush.msra.mxu0 %v137
  %565 = vmatpush.msra.mxu0 %v135
  %566 = vmatpush.msra.mxu0 %v133
  %567 = vmatpush.msra.mxu0 %v131
  %568 = vmatpush.msra.mxu0 %v129
  %569 = vmatpush.msra.mxu0 %v127
  %570 = vmatpush.msra.mxu0 %v125
  %571 = vmatpush.msra.mxu0 %v123
  %572 = vmatpush.msra.mxu0 %v121
  %573 = vmatpush.msra.mxu0 %v119
  %574 = vmatmul.f32.gmra.mxu0 %v16
  %v575 = vpop.f32.mrf.mxu0
  %v576 = vadd.f32 %v535, %v575
  %577 = vmatmul.f32.gmra.mxu0 %v21
  %v578 = vpop.f32.mrf.mxu0
  %v579 = vadd.f32 %v538, %v578
  %580 = vmatmul.f32.gmra.mxu0 %v26
  %v581 = vpop.f32.mrf.mxu0
  %v582 = vadd.f32 %v541, %v581
  %583 = vmatmul.f32.gmra.mxu0 %v31
  %v584 = vpop.f32.mrf.mxu0
  %v585 = vadd.f32 %v544, %v584
  %586 = vmatmul.f32.gmra.mxu0 %v36
  %v587 = vpop.f32.mrf.mxu0
  %v588 = vadd.f32 %v547, %v587
  %589 = vmatmul.f32.gmra.mxu0 %v41
  %v590 = vpop.f32.mrf.mxu0
  %v591 = vadd.f32 %v550, %v590
  %592 = vmatmul.f32.gmra.mxu0 %v46
  %v593 = vpop.f32.mrf.mxu0
  %v594 = vadd.f32 %v553, %v593
  %595 = vmatmul.f32.gmra.mxu0 %v51
  %v596 = vpop.f32.mrf.mxu0
  %v597 = vadd.f32 %v556, %v596
  %598 = vdwg.mxu0
  %599 = vmatpush.msra.mxu0 %v181
  %600 = vmatpush.msra.mxu0 %v179
  %601 = vmatpush.msra.mxu0 %v177
  %602 = vmatpush.msra.mxu0 %v175
  %603 = vmatpush.msra.mxu0 %v173
  %604 = vmatpush.msra.mxu0 %v171
  %605 = vmatpush.msra.mxu0 %v169
  %606 = vmatpush.msra.mxu0 %v167
  %607 = vmatpush.msra.mxu0 %v165
  %608 = vmatpush.msra.mxu0 %v163
  %609 = vmatpush.msra.mxu0 %v161
  %610 = vmatpush.msra.mxu0 %v159
  %611 = vmatpush.msra.mxu0 %v157
  %612 = vmatpush.msra.mxu0 %v155
  %613 = vmatpush.msra.mxu0 %v153
  %614 = vmatpush.msra.mxu0 %v151
  %615 = vmatmul.f32.gmra.mxu0 %v17
  %v616 = vpop.f32.mrf.mxu0
  %v617 = vadd.f32 %v576, %v616
  %618 = vmatmul.f32.gmra.mxu0 %v22
  %v619 = vpop.f32.mrf.mxu0
  %v620 = vadd.f32 %v579, %v619
  %621 = vmatmul.f32.gmra.mxu0 %v27
  %v622 = vpop.f32.mrf.mxu0
  %v623 = vadd.f32 %v582, %v622
  %624 = vmatmul.f32.gmra.mxu0 %v32
  %v625 = vpop.f32.mrf.mxu0
  %v626 = vadd.f32 %v585, %v625
  %627 = vmatmul.f32.gmra.mxu0 %v37
  %v628 = vpop.f32.mrf.mxu0
  %v629 = vadd.f32 %v588, %v628
  %630 = vmatmul.f32.gmra.mxu0 %v42
  %v631 = vpop.f32.mrf.mxu0
  %v632 = vadd.f32 %v591, %v631
  %633 = vmatmul.f32.gmra.mxu0 %v47
  %v634 = vpop.f32.mrf.mxu0
  %v635 = vadd.f32 %v594, %v634
  %636 = vmatmul.f32.gmra.mxu0 %v52
  %v637 = vpop.f32.mrf.mxu0
  %v638 = vadd.f32 %v597, %v637
  %639 = vdwg.mxu0
  %640 = vmatpush.msra.mxu0 0.0
  %641 = vmatpush.msra.mxu0 0.0
  %642 = vmatpush.msra.mxu0 0.0
  %643 = vmatpush.msra.mxu0 0.0
  %644 = vmatpush.msra.mxu0 0.0
  %645 = vmatpush.msra.mxu0 0.0
  %646 = vmatpush.msra.mxu0 0.0
  %647 = vmatpush.msra.mxu0 0.0
  %648 = vmatpush.msra.mxu0 %v197
  %649 = vmatpush.msra.mxu0 %v195
  %650 = vmatpush.msra.mxu0 %v193
  %651 = vmatpush.msra.mxu0 %v191
  %652 = vmatpush.msra.mxu0 %v189
  %653 = vmatpush.msra.mxu0 %v187
  %654 = vmatpush.msra.mxu0 %v185
  %655 = vmatpush.msra.mxu0 %v183
  %656 = vmatmul.f32.gmra.mxu0 %v248
  %v657 = vpop.f32.mrf.mxu0
  %v658 = vadd.f32 %v617, %v657
  %659 = vmatmul.f32.gmra.mxu0 %v251
  %v660 = vpop.f32.mrf.mxu0
  %v661 = vadd.f32 %v620, %v660
  %662 = vmatmul.f32.gmra.mxu0 %v254
  %v663 = vpop.f32.mrf.mxu0
  %v664 = vadd.f32 %v623, %v663
  %665 = vmatmul.f32.gmra.mxu0 %v257
  %v666 = vpop.f32.mrf.mxu0
  %v667 = vadd.f32 %v626, %v666
  %668 = vmatmul.f32.gmra.mxu0 %v260
  %v669 = vpop.f32.mrf.mxu0
  %v670 = vadd.f32 %v629, %v669
  %671 = vmatmul.f32.gmra.mxu0 %v263
  %v672 = vpop.f32.mrf.mxu0
  %v673 = vadd.f32 %v632, %v672
  %674 = vmatmul.f32.gmra.mxu0 %v266
  %v675 = vpop.f32.mrf.mxu0
  %v676 = vadd.f32 %v635, %v675
  %677 = vmatmul.f32.gmra.mxu0 %v269
  %v678 = vpop.f32.mrf.mxu0
  %v679 = vadd.f32 %v638, %v678
  %680 = vdwg.mxu0
  %v681 = vmax.f32 %v453, 0.0
  %v682 = vmax.f32 %v658, 0.0
  %v683 = vmax.f32 %v456, 0.0
  %v684 = vmax.f32 %v661, 0.0
  %v685 = vmax.f32 %v459, 0.0
  %v686 = vmax.f32 %v664, 0.0
  %v687 = vmax.f32 %v462, 0.0
  %v688 = vmax.f32 %v667, 0.0
  %v689 = vmax.f32 %v465, 0.0
  %v690 = vmax.f32 %v670, 0.0
  %v691 = vmax.f32 %v468, 0.0
  %v692 = vmax.f32 %v673, 0.0
  %v693 = vmax.f32 %v471, 0.0
  %v694 = vmax.f32 %v676, 0.0
  %v695 = vmax.f32 %v474, 0.0
  %v696 = vmax.f32 %v679, 0.0
  %697 = vst [vmem:[%s3] sm:$0xff] %v681
  %vm698 = vcmask 97280
  %699 = vst.msk [vmem:[%s3 + $0x8] sm:$0xff] %vm698, %v682
  %700 = vst [vmem:[%s3 + $0x10] sm:$0xff] %v683
  %701 = vst.msk [vmem:[%s3 + $0x18] sm:$0xff] %vm698, %v684
  %702 = vst [vmem:[%s3 + $0x20] sm:$0xff] %v685
  %703 = vst.msk [vmem:[%s3 + $0x28] sm:$0xff] %vm698, %v686
  %704 = vst [vmem:[%s3 + $0x30] sm:$0xff] %v687
  %705 = vst.msk [vmem:[%s3 + $0x38] sm:$0xff] %vm698, %v688
  %706 = vst [vmem:[%s3 + $0x40] sm:$0xff] %v689
  %707 = vst.msk [vmem:[%s3 + $0x48] sm:$0xff] %vm698, %v690
  %708 = vst [vmem:[%s3 + $0x50] sm:$0xff] %v691
  %709 = vst.msk [vmem:[%s3 + $0x58] sm:$0xff] %vm698, %v692
  %710 = vst [vmem:[%s3 + $0x60] sm:$0xff] %v693
  %711 = vst.msk [vmem:[%s3 + $0x68] sm:$0xff] %vm698, %v694
  %712 = vst [vmem:[%s3 + $0x70] sm:$0xff] %v695
  %713 = vst.msk [vmem:[%s3 + $0x78] sm:$0xff] %vm698, %v696
  // Predicated region
  $region14: #{qnetwork_cnn_forward.6} parent=0 // pred_check
    _
  $region15: #{qnetwork_cnn_forward.6} parent=0 // pred_check_branch
    %715 = sbr.rel (0) target = $region17
  $region16: #{qnetwork_cnn_forward.6} parent=0 // pred_region
    _
  $region17: #{qnetwork_cnn_forward.6} parent=0 // pred_fallthru
    _
  // Predicated region
  $region18: #{qnetwork_cnn_forward.6} parent=0 // pred_check
    _
  $region19: #{qnetwork_cnn_forward.6} parent=0 // pred_check_branch
    %717 = sbr.rel (0) target = $region21
  $region20: #{qnetwork_cnn_forward.6} parent=0 // pred_region
    _
  $region21: #{qnetwork_cnn_forward.6} parent=0 // pred_fallthru
    _

// kernel: qnetwork_cnn_forward.7
$region0: #{qnetwork_cnn_forward.7}
  #allocation0 [shape = 'u32[]', space=smem, size = 0x4, offset = 0x4, fixed_abs, tag = 'smem constant byte address 0x4 - core index']
  #allocation1 [shape = 'u32[72,128]{1,0:T(1,128)}', space=vmem, size = 0x9000, scoped, tag = 'internal scratch']
  #allocation2 [shape = 'f32[1,512]{1,0:T(1,128)}', space=vmem, size = 0x800, scoped, tag = 'scratch operand']
  %s0 = inlined_call_operand.vmem [shape: f32[1,8960], index: 0, kind: input, shape index: {}]
  %s1 = inlined_call_operand.vmem [shape: bf16[8960,512], index: 1, kind: input, shape index: {}]
  %s2 = inlined_call_operand.vmem [shape: f32[1,512], index: 2, kind: input, shape index: {}]
  %s3 = inlined_call_operand.vmem [shape: f32[512,6], index: 3, kind: input, shape index: {}]
  %s4 = inlined_call_operand.vmem [shape: f32[1,6], index: 4, kind: input, shape index: {}]
  %s5 = inlined_call_operand.hbm [shape: f32[1,6], index: 5, kind: output, shape index: {}]
  %s6 = sld [smem:[#allocation0]]
  $region61: #{qnetwork_cnn_forward.7} parent=0
    _
  %s8 = ssub.s32 1, %s6
  %s9 = scalar_select 0, %s8, %s6
  $region1: #{qnetwork_cnn_forward.7} parent=0
    #allocation3 [shape = 'u8[512]{0}', space=vmem, size = 0x400, scoped, tag = 'output window, operand 0, single buffered']
    #allocation4 [shape = 's32[2]{0}', space=sflag, size = 0x8, scoped, tag = 'scoped memory for qnetwork_cnn_forward.7']
    %10 = vsyncpa [#allocation4], 0
    loop: start=0, step=1, limit=7
    $region2: #{qnetwork_cnn_forward.7} parent=1 // loop_pre_header
      _
    $region3: #{qnetwork_cnn_forward.7} parent=1 // loop_header
      %s12 = sphi 0, %s16
      %p13 = scmp.ge.s32.totalorder %s12, 7
      %s22 = sphi 0, %s24
      %s25 = sphi 0, %s22
      %s26 = sphi 0, %s25
      %s42 = sphi 0, %s26
      %s48 = sphi 0, %s50
      %s51 = sphi 0, %s48
      %s52 = sphi 0, %s51
      %s68 = sphi 0, %s52
      %s72 = sphi 0, %s72
      %s74 = sphi 0, %s72
      %s75 = sphi 0, %s74
      %s89 = sphi 0, %s75
      %s93 = sphi 0, %s93
      %s95 = sphi 0, %s93
      %s96 = sphi 0, %s95
      %s110 = sphi 0, %s96
      %s114 = sphi 0, %s114
      %s116 = sphi 0, %s114
      %s117 = sphi 0, %s116
      %s131 = sphi 0, %s117
      %s135 = sphi 0, %s135
      %s137 = sphi 0, %s135
      %s138 = sphi 0, %s137
      %s152 = sphi 0, %s138
    $region4: #{qnetwork_cnn_forward.7} parent=1 // loop_header_branch
      %15 = sbr.rel (%p13) target = $region8
    $region5: #{qnetwork_cnn_forward.7} parent=1 // loop_body
      %s17 = ssub.s32 %s12, 1
      %s18 = ssub.s32 %s12, 2
      %s19 = sadd.s32 %s12, 1
      %s20 = ssub.s32 %s12, %s19
      %p21 = scmp.eq.s32.totalorder %s20, 0
      %s23 = sadd.s32 %s22, 1
      %s24 = scalar_select %p21, %s22, %s23
      %p27 = pneg %p21
      %p28 = scmp.eq.s32.totalorder %s12, 4
      %p29 = por %p27, %p28
      %p30 = scmp.ne.s32.totalorder %s22, %s25
      %p31 = scmp.eq.s32.totalorder %s12, 0
      %p32 = por %p30, %p31
      %p33 = scmp.ne.s32.totalorder %s22, %s25
      %p34 = scmp.eq.s32.totalorder %s17, 4
      %p35 = por %p33, %p34
      %p36 = scmp.ne.s32.totalorder %s25, %s26
      %p37 = scmp.eq.s32.totalorder %s17, 0
      %p38 = por %p36, %p37
      %p39 = scmp.ne.s32.totalorder %s25, %s26
      %p40 = scmp.eq.s32.totalorder %s18, 4
      %p41 = por %p39, %p40
      %p43 = scmp.ne.s32.totalorder %s26, %s42
      %p44 = scmp.eq.s32.totalorder %s18, 0
      %p45 = por %p43, %p44
      %s46 = ssub.s32 %s12, %s19
      %p47 = scmp.eq.s32.totalorder %s46, 0
      %s49 = sadd.s32 %s48, 1
      %s50 = scalar_select %p47, %s48, %s49
      %p53 = pneg %p47
      %p54 = scmp.eq.s32.totalorder %s12, 4
      %p55 = por %p53, %p54
      %p56 = scmp.ne.s32.totalorder %s48, %s51
      %p57 = scmp.eq.s32.totalorder %s12, 0
      %p58 = por %p56, %p57
      %p59 = scmp.ne.s32.totalorder %s48, %s51
      %p60 = scmp.eq.s32.totalorder %s17, 4
      %p61 = por %p59, %p60
      %p62 = scmp.ne.s32.totalorder %s51, %s52
      %p63 = scmp.eq.s32.totalorder %s17, 0
      %p64 = por %p62, %p63
      %p65 = scmp.ne.s32.totalorder %s51, %s52
      %p66 = scmp.eq.s32.totalorder %s18, 4
      %p67 = por %p65, %p66
      %p69 = scmp.ne.s32.totalorder %s52, %s68
      %p70 = scmp.eq.s32.totalorder %s18, 0
      %p71 = por %p69, %p70
      %s73 = sadd.s32 %s72, 1
      %p76 = scmp.eq.s32.totalorder %s12, 4
      %p77 = scmp.ne.s32.totalorder %s72, %s74
      %p78 = scmp.eq.s32.totalorder %s12, 0
      %p79 = por %p77, %p78
      %p80 = scmp.ne.s32.totalorder %s72, %s74
      %p81 = scmp.eq.s32.totalorder %s17, 4
      %p82 = por %p80, %p81
      %p83 = scmp.ne.s32.totalorder %s74, %s75
      %p84 = scmp.eq.s32.totalorder %s17, 0
      %p85 = por %p83, %p84
      %p86 = scmp.ne.s32.totalorder %s74, %s75
      %p87 = scmp.eq.s32.totalorder %s18, 4
      %p88 = por %p86, %p87
      %p90 = scmp.ne.s32.totalorder %s75, %s89
      %p91 = scmp.eq.s32.totalorder %s18, 0
      %p92 = por %p90, %p91
      %s94 = sadd.s32 %s93, 1
      %p97 = scmp.eq.s32.totalorder %s12, 4
      %p98 = scmp.ne.s32.totalorder %s93, %s95
      %p99 = scmp.eq.s32.totalorder %s12, 0
      %p100 = por %p98, %p99
      %p101 = scmp.ne.s32.totalorder %s93, %s95
      %p102 = scmp.eq.s32.totalorder %s17, 4
      %p103 = por %p101, %p102
      %p104 = scmp.ne.s32.totalorder %s95, %s96
      %p105 = scmp.eq.s32.totalorder %s17, 0
      %p106 = por %p104, %p105
      %p107 = scmp.ne.s32.totalorder %s95, %s96
      %p108 = scmp.eq.s32.totalorder %s18, 4
      %p109 = por %p107, %p108
      %p111 = scmp.ne.s32.totalorder %s96, %s110
      %p112 = scmp.eq.s32.totalorder %s18, 0
      %p113 = por %p111, %p112
      %s115 = sadd.s32 %s114, 1
      %p118 = scmp.eq.s32.totalorder %s12, 4
      %p119 = scmp.ne.s32.totalorder %s114, %s116
      %p120 = scmp.eq.s32.totalorder %s12, 0
      %p121 = por %p119, %p120
      %p122 = scmp.ne.s32.totalorder %s114, %s116
      %p123 = scmp.eq.s32.totalorder %s17, 4
      %p124 = por %p122, %p123
      %p125 = scmp.ne.s32.totalorder %s116, %s117
      %p126 = scmp.eq.s32.totalorder %s17, 0
      %p127 = por %p125, %p126
      %p128 = scmp.ne.s32.totalorder %s116, %s117
      %p129 = scmp.eq.s32.totalorder %s18, 4
      %p130 = por %p128, %p129
      %p132 = scmp.ne.s32.totalorder %s117, %s131
      %p133 = scmp.eq.s32.totalorder %s18, 0
      %p134 = por %p132, %p133
      %s136 = sadd.s32 %s135, 1
      %p139 = scmp.eq.s32.totalorder %s12, 4
      %p140 = scmp.ne.s32.totalorder %s135, %s137
      %p141 = scmp.eq.s32.totalorder %s12, 0
      %p142 = por %p140, %p141
      %p143 = scmp.ne.s32.totalorder %s135, %s137
      %p144 = scmp.eq.s32.totalorder %s17, 4
      %p145 = por %p143, %p144
      %p146 = scmp.ne.s32.totalorder %s137, %s138
      %p147 = scmp.eq.s32.totalorder %s17, 0
      %p148 = por %p146, %p147
      %p149 = scmp.ne.s32.totalorder %s137, %s138
      %p150 = scmp.eq.s32.totalorder %s18, 4
      %p151 = por %p149, %p150
      %p153 = scmp.ne.s32.totalorder %s138, %s152
      %p154 = scmp.eq.s32.totalorder %s18, 0
      %p155 = por %p153, %p154
      %p156 = scmp.le.s32.totalorder 1, %s12
      %p157 = scmp.lt.s32.totalorder %s12, 6
      %p158 = pnand %p156, %p157
      %p159 = pneg %p158
      // Predicated region
      $region9: #{qnetwork_cnn_forward.7} parent=5 // pred_check
        _
      $region10: #{qnetwork_cnn_forward.7} parent=5 // pred_check_branch
        %161 = sbr.rel (%p158) target = $region12
      $region11: #{qnetwork_cnn_forward.7} parent=5 // pred_region
        %s162 = ssub.s32 %s12, 1
        // Predicated region
        $region13: #{qnetwork_cnn_forward.7} parent=11 // pred_check
          %p163 = pneg %p85
        $region14: #{qnetwork_cnn_forward.7} parent=11 // pred_check_branch
          %165 = sbr.rel (%p163) target = $region16
        $region15: #{qnetwork_cnn_forward.7} parent=11 // pred_region
          _
        $region16: #{qnetwork_cnn_forward.7} parent=11 // pred_fallthru
          _
        // Predicated region
        $region17: #{qnetwork_cnn_forward.7} parent=11 // pred_check
          %p166 = pneg %p106
        $region18: #{qnetwork_cnn_forward.7} parent=11 // pred_check_branch
          %168 = sbr.rel (%p166) target = $region20
        $region19: #{qnetwork_cnn_forward.7} parent=11 // pred_region
          _
        $region20: #{qnetwork_cnn_forward.7} parent=11 // pred_fallthru
          _
        // Predicated region
        $region21: #{qnetwork_cnn_forward.7} parent=11 // pred_check
          %p169 = pneg %p127
        $region22: #{qnetwork_cnn_forward.7} parent=11 // pred_check_branch
          %171 = sbr.rel (%p169) target = $region24
        $region23: #{qnetwork_cnn_forward.7} parent=11 // pred_region
          _
        $region24: #{qnetwork_cnn_forward.7} parent=11 // pred_fallthru
          _
      $region12: #{qnetwork_cnn_forward.7} parent=5 // pred_fallthru
        _
      %p172 = scmp.lt.s32.totalorder %s12, 5
      // Predicated region
      $region25: #{qnetwork_cnn_forward.7} parent=5 // pred_check
        %p173 = pneg %p172
      $region26: #{qnetwork_cnn_forward.7} parent=5 // pred_check_branch
        %175 = sbr.rel (%p173) target = $region28
      $region27: #{qnetwork_cnn_forward.7} parent=5 // pred_region
        // Predicated region
        $region29: #{qnetwork_cnn_forward.7} parent=27 // pred_check
          %p176 = pneg %p32
        $region30: #{qnetwork_cnn_forward.7} parent=27 // pred_check_branch
          %178 = sbr.rel (%p176) target = $region32
        $region31: #{qnetwork_cnn_forward.7} parent=27 // pred_region
          %s179 = smul.u32 14, %s12
          %p180 = scmp.lt.s32.totalorder %s179, 69
          %s181 = scalar_select %p180, %s179, 69
          %s182 = scalar_lea.vmem %s0, %s181
          %s183 = smul.u32 14, %s12
        $region32: #{qnetwork_cnn_forward.7} parent=27 // pred_fallthru
          _
        // Predicated region
        $region33: #{qnetwork_cnn_forward.7} parent=27 // pred_check
          %p184 = pneg %p58
        $region34: #{qnetwork_cnn_forward.7} parent=27 // pred_check_branch
          %186 = sbr.rel (%p184) target = $region36
        $region35: #{qnetwork_cnn_forward.7} parent=27 // pred_region
          %s187 = smul.u32 224, %s12
          %p188 = scmp.lt.s32.totalorder %s187, 1119
          %s189 = scalar_select %p188, %s187, 1119
          %s190 = smul.addr %s189, 4
          %s191 = smul.addr %s190, 4
          %s192 = scalar_lea.vmem %s1, %s191
          %s193 = smul.u32 224, %s12
        $region36: #{qnetwork_cnn_forward.7} parent=27 // pred_fallthru
          _
      $region28: #{qnetwork_cnn_forward.7} parent=5 // pred_fallthru
        _
      %p194 = scmp.le.s32.totalorder 1, %s12
      %p195 = scmp.lt.s32.totalorder %s12, 6
      %p196 = pnand %p194, %p195
      %p197 = pneg %p196
      // Predicated region
      $region37: #{qnetwork_cnn_forward.7} parent=5 // pred_check
        _
      $region38: #{qnetwork_cnn_forward.7} parent=5 // pred_check_branch
        %199 = sbr.rel (%p196) target = $region40
      $region39: #{qnetwork_cnn_forward.7} parent=5 // pred_region
        %s200 = ssub.s32 %s12, 1
        %s201 = smul.u32 14, %s17
        %p202 = scmp.lt.s32.totalorder %s201, 69
        %s203 = scalar_select %p202, %s201, 69
        %s204 = scalar_lea.vmem %s0, %s203
        %p205 = pneg %p38
        %p206 = pneg %p35
        %s207 = smul.u32 224, %s17
        %p208 = scmp.lt.s32.totalorder %s207, 1119
        %s209 = scalar_select %p208, %s207, 1119
        %s210 = smul.addr %s209, 4
        %s211 = smul.addr %s210, 4
        %s212 = scalar_lea.vmem %s1, %s211
        %p213 = pneg %p64
        %p214 = pneg %p61
        %p215 = pneg %p85
        %p216 = pneg %p82
        %p217 = pneg %p106
        %p218 = pneg %p103
        %p219 = pneg %p127
        %p220 = pneg %p124
        %p221 = pneg %p148
        %p222 = pneg %p145
        %s223 = smul.u32 14, %s17
        %p224 = scmp.lt.s32.totalorder %s223, 69
        %s225 = scalar_select %p224, %s223, 69
        %s226 = scalar_lea.vmem %s0, %s225
        %s227 = smul.u32 14, %s17
        %s228 = smul.u32 224, %s17
        %p229 = scmp.lt.s32.totalorder %s228, 1119
        %s230 = scalar_select %p229, %s228, 1119
        %s231 = smul.addr %s230, 4
        %s232 = smul.addr %s231, 4
        %s233 = scalar_lea.vmem %s1, %s232
        %s234 = smul.u32 224, %s17
        %p235 = scmp.eq.s32.totalorder %s17, 0
        // Predicated region
        $region41: #{qnetwork_cnn_forward.7} parent=39 // pred_check
          %p236 = pneg %p235
        $region42: #{qnetwork_cnn_forward.7} parent=39 // pred_check_branch
          %238 = sbr.rel (%p236) target = $region44
        $region43: #{qnetwork_cnn_forward.7} parent=39 // pred_region
          %v239 = vlaneseq
          %vm240 = vcmp.ge.s32.totalorder %v239, 0
          %vm241 = vcmp.lt.s32.totalorder %v239, 512
          %vm242 = vmand %vm240, %vm241
          %243 = vst.msk [vmem:[#allocation2] sm:$0xf] %vm242, 0.0
        $region44: #{qnetwork_cnn_forward.7} parent=39 // pred_fallthru
          _
        %v244 = vld [vmem:[#allocation2] sm:$0xf]
        %v245 = vld [vmem:[%s226] sm:$0xff]
        %v246 = vld [vmem:[%s226 + $0x8] sm:$0x3f]
        %v249 = vperm.slane %v245, 0
        %v250 = vperm.slane %v245, 1
        %v251 = vperm.slane %v245, 2
        %v252 = vperm.slane %v245, 3
        %v253 = vperm.slane %v245, 4
        %v254 = vperm.slane %v245, 5
        %v255 = vperm.slane %v245, 6
        %v256 = vperm.slane %v245, 7
        %v257 = vperm.slane %v246, 0
        %v258 = vperm.slane %v246, 1
        %v259 = vperm.slane %v246, 2
        %v260 = vperm.slane %v246, 3
        %v261 = vperm.slane %v246, 4
        %v262 = vperm.slane %v246, 5
        %v277 = vpack.c.bf16 %v249, %v249
        %v278 = vpack.c.bf16 %v250, %v250
        %v279 = vpack.c.bf16 %v251, %v251
        %v280 = vpack.c.bf16 %v252, %v252
        %v281 = vpack.c.bf16 %v253, %v253
        %v282 = vpack.c.bf16 %v254, %v254
        %v283 = vpack.c.bf16 %v255, %v255
        %v284 = vpack.c.bf16 %v256, %v256
        %v285 = vpack.c.bf16 %v257, %v257
        %v286 = vpack.c.bf16 %v258, %v258
        %v287 = vpack.c.bf16 %v259, %v259
        %v288 = vpack.c.bf16 %v260, %v260
        %v289 = vpack.c.bf16 %v261, %v261
        %v290 = vpack.c.bf16 %v262, %v262
        %v291 = vld [vmem:[%s233] sm:$0xff]
        %v292 = vld [vmem:[%s233 + $0x8] sm:$0xff]
        %v293 = vld [vmem:[%s233 + $0x10] sm:$0xff]
        %v294 = vld [vmem:[%s233 + $0x18] sm:$0xff]
        %v295 = vld [vmem:[%s233 + $0x20] sm:$0xff]
        %v296 = vld [vmem:[%s233 + $0x28] sm:$0xff]
        %v297 = vld [vmem:[%s233 + $0x30] sm:$0xff]
        %v298 = vld [vmem:[%s233 + $0x38] sm:$0xff]
        %v299 = vld [vmem:[%s233 + $0x40] sm:$0xff]
        %v300 = vld [vmem:[%s233 + $0x48] sm:$0xff]
        %v301 = vld [vmem:[%s233 + $0x50] sm:$0xff]
        %v302 = vld [vmem:[%s233 + $0x58] sm:$0xff]
        %v303 = vld [vmem:[%s233 + $0x60] sm:$0xff]
        %v304 = vld [vmem:[%s233 + $0x68] sm:$0xff]
        %v305 = vld [vmem:[%s233 + $0x70] sm:$0xff]
        %v306 = vld [vmem:[%s233 + $0x78] sm:$0xff]
        %v307 = vld [vmem:[%s233 + $0x80] sm:$0xff]
        %v308 = vld [vmem:[%s233 + $0x88] sm:$0xff]
        %v309 = vld [vmem:[%s233 + $0x90] sm:$0xff]
        %v310 = vld [vmem:[%s233 + $0x98] sm:$0xff]
        %v311 = vld [vmem:[%s233 + $0xa0] sm:$0xff]
        %v312 = vld [vmem:[%s233 + $0xa8] sm:$0xff]
        %v313 = vld [vmem:[%s233 + $0xb0] sm:$0xff]
        %v314 = vld [vmem:[%s233 + $0xb8] sm:$0xff]
        %v315 = vld [vmem:[%s233 + $0xc0] sm:$0xff]
        %v316 = vld [vmem:[%s233 + $0xc8] sm:$0xff]
        %v317 = vld [vmem:[%s233 + $0xd0] sm:$0xff]
        %v318 = vld [vmem:[%s233 + $0xd8] sm:$0xff]
        %v319 = vld [vmem:[%s233 + $0xe0] sm:$0xff]
        %v320 = vld [vmem:[%s233 + $0xe8] sm:$0xff]
        %v321 = vld [vmem:[%s233 + $0xf0] sm:$0xff]
        %v322 = vld [vmem:[%s233 + $0xf8] sm:$0xff]
        %v323 = vld [vmem:[%s233 + $0x100] sm:$0xff]
        %v324 = vld [vmem:[%s233 + $0x108] sm:$0xff]
        %v325 = vld [vmem:[%s233 + $0x110] sm:$0xff]
        %v326 = vld [vmem:[%s233 + $0x118] sm:$0xff]
        %v327 = vld [vmem:[%s233 + $0x120] sm:$0xff]
        %v328 = vld [vmem:[%s233 + $0x128] sm:$0xff]
        %v329 = vld [vmem:[%s233 + $0x130] sm:$0xff]
        %v330 = vld [vmem:[%s233 + $0x138] sm:$0xff]
        %v331 = vld [vmem:[%s233 + $0x140] sm:$0xff]
        %v332 = vld [vmem:[%s233 + $0x148] sm:$0xff]
        %v333 = vld [vmem:[%s233 + $0x150] sm:$0xff]
        %v334 = vld [vmem:[%s233 + $0x158] sm:$0xff]
        %v335 = vld [vmem:[%s233 + $0x160] sm:$0xff]
        %v336 = vld [vmem:[%s233 + $0x168] sm:$0xff]
        %v337 = vld [vmem:[%s233 + $0x170] sm:$0xff]
        %v338 = vld [vmem:[%s233 + $0x178] sm:$0xff]
        %v339 = vld [vmem:[%s233 + $0x180] sm:$0xff]
        %v340 = vld [vmem:[%s233 + $0x188] sm:$0xff]
        %v341 = vld [vmem:[%s233 + $0x190] sm:$0xff]
        %v342 = vld [vmem:[%s233 + $0x198] sm:$0xff]
        %v343 = vld [vmem:[%s233 + $0x1a0] sm:$0xff]
        %v344 = vld [vmem:[%s233 + $0x1a8] sm:$0xff]
        %v345 = vld [vmem:[%s233 + $0x1b0] sm:$0xff]
        %v346 = vld [vmem:[%s233 + $0x1b8] sm:$0xff]
        %v347 = vld [vmem:[%s233 + $0x1c0] sm:$0xff]
        %v348 = vld [vmem:[%s233 + $0x1c8] sm:$0xff]
        %v349 = vld [vmem:[%s233 + $0x1d0] sm:$0xff]
        %v350 = vld [vmem:[%s233 + $0x1d8] sm:$0xff]
        %v351 = vld [vmem:[%s233 + $0x1e0] sm:$0xff]
        %v352 = vld [vmem:[%s233 + $0x1e8] sm:$0xff]
        %v353 = vld [vmem:[%s233 + $0x1f0] sm:$0xff]
        %v354 = vld [vmem:[%s233 + $0x1f8] sm:$0xff]
        %v355 = vld [vmem:[%s233 + $0x200] sm:$0xff]
        %v356 = vld [vmem:[%s233 + $0x208] sm:$0xff]
        %v357 = vld [vmem:[%s233 + $0x210] sm:$0xff]
        %v358 = vld [vmem:[%s233 + $0x218] sm:$0xff]
        %v359 = vld [vmem:[%s233 + $0x220] sm:$0xff]
        %v360 = vld [vmem:[%s233 + $0x228] sm:$0xff]
        %v361 = vld [vmem:[%s233 + $0x230] sm:$0xff]
        %v362 = vld [vmem:[%s233 + $0x238] sm:$0xff]
        %v363 = vld [vmem:[%s233 + $0x240] sm:$0xff]
        %v364 = vld [vmem:[%s233 + $0x248] sm:$0xff]
        %v365 = vld [vmem:[%s233 + $0x250] sm:$0xff]
        %v366 = vld [vmem:[%s233 + $0x258] sm:$0xff]
        %v367 = vld [vmem:[%s233 + $0x260] sm:$0xff]
        %v368 = vld [vmem:[%s233 + $0x268] sm:$0xff]
        %v369 = vld [vmem:[%s233 + $0x270] sm:$0xff]
        %v370 = vld [vmem:[%s233 + $0x278] sm:$0xff]
        %v371 = vld [vmem:[%s233 + $0x280] sm:$0xff]
        %v372 = vld [vmem:[%s233 + $0x288] sm:$0xff]
        %v373 = vld [vmem:[%s233 + $0x290] sm:$0xff]
        %v374 = vld [vmem:[%s233 + $0x298] sm:$0xff]
        %v375 = vld [vmem:[%s233 + $0x2a0] sm:$0xff]
        %v376 = vld [vmem:[%s233 + $0x2a8] sm:$0xff]
        %v377 = vld [vmem:[%s233 + $0x2b0] sm:$0xff]
        %v378 = vld [vmem:[%s233 + $0x2b8] sm:$0xff]
        %v379 = vld [vmem:[%s233 + $0x2c0] sm:$0xff]
        %v380 = vld [vmem:[%s233 + $0x2c8] sm:$0xff]
        %v381 = vld [vmem:[%s233 + $0x2d0] sm:$0xff]
        %v382 = vld [vmem:[%s233 + $0x2d8] sm:$0xff]
        %v383 = vld [vmem:[%s233 + $0x2e0] sm:$0xff]
        %v384 = vld [vmem:[%s233 + $0x2e8] sm:$0xff]
        %v385 = vld [vmem:[%s233 + $0x2f0] sm:$0xff]
        %v386 = vld [vmem:[%s233 + $0x2f8] sm:$0xff]
        %v387 = vld [vmem:[%s233 + $0x300] sm:$0xff]
        %v388 = vld [vmem:[%s233 + $0x308] sm:$0xff]
        %v389 = vld [vmem:[%s233 + $0x310] sm:$0xff]
        %v390 = vld [vmem:[%s233 + $0x318] sm:$0xff]
        %v391 = vld [vmem:[%s233 + $0x320] sm:$0xff]
        %v392 = vld [vmem:[%s233 + $0x328] sm:$0xff]
        %v393 = vld [vmem:[%s233 + $0x330] sm:$0xff]
        %v394 = vld [vmem:[%s233 + $0x338] sm:$0xff]
        %v395 = vld [vmem:[%s233 + $0x340] sm:$0xff]
        %v396 = vld [vmem:[%s233 + $0x348] sm:$0xff]
        %v397 = vld [vmem:[%s233 + $0x350] sm:$0xff]
        %v398 = vld [vmem:[%s233 + $0x358] sm:$0xff]
        %v399 = vld [vmem:[%s233 + $0x360] sm:$0xff]
        %v400 = vld [vmem:[%s233 + $0x368] sm:$0xff]
        %v401 = vld [vmem:[%s233 + $0x370] sm:$0xff]
        %v402 = vld [vmem:[%s233 + $0x378] sm:$0xff]
        %v403 = vld [vmem:[%s233 + $0x380] sm:$0xff]
        %v404 = vld [vmem:[%s233 + $0x388] sm:$0xff]
        %v405 = vld [vmem:[%s233 + $0x390] sm:$0xff]
        %v406 = vld [vmem:[%s233 + $0x398] sm:$0xff]
        %v407 = vld [vmem:[%s233 + $0x3a0] sm:$0xff]
        %v408 = vld [vmem:[%s233 + $0x3a8] sm:$0xff]
        %v409 = vld [vmem:[%s233 + $0x3b0] sm:$0xff]
        %v410 = vld [vmem:[%s233 + $0x3b8] sm:$0xff]
        %v411 = vld [vmem:[%s233 + $0x3c0] sm:$0xff]
        %v412 = vld [vmem:[%s233 + $0x3c8] sm:$0xff]
        %v413 = vld [vmem:[%s233 + $0x3d0] sm:$0xff]
        %v414 = vld [vmem:[%s233 + $0x3d8] sm:$0xff]
        %v415 = vld [vmem:[%s233 + $0x3e0] sm:$0xff]
        %v416 = vld [vmem:[%s233 + $0x3e8] sm:$0xff]
        %v417 = vld [vmem:[%s233 + $0x3f0] sm:$0xff]
        %v418 = vld [vmem:[%s233 + $0x3f8] sm:$0xff]
        %v419 = vld [vmem:[%s233 + $0x400] sm:$0xff]
        %v420 = vld [vmem:[%s233 + $0x408] sm:$0xff]
        %v421 = vld [vmem:[%s233 + $0x410] sm:$0xff]
        %v422 = vld [vmem:[%s233 + $0x418] sm:$0xff]
        %v423 = vld [vmem:[%s233 + $0x420] sm:$0xff]
        %v424 = vld [vmem:[%s233 + $0x428] sm:$0xff]
        %v425 = vld [vmem:[%s233 + $0x430] sm:$0xff]
        %v426 = vld [vmem:[%s233 + $0x438] sm:$0xff]
        %v427 = vld [vmem:[%s233 + $0x440] sm:$0xff]
        %v428 = vld [vmem:[%s233 + $0x448] sm:$0xff]
        %v429 = vld [vmem:[%s233 + $0x450] sm:$0xff]
        %v430 = vld [vmem:[%s233 + $0x458] sm:$0xff]
        %v431 = vld [vmem:[%s233 + $0x460] sm:$0xff]
        %v432 = vld [vmem:[%s233 + $0x468] sm:$0xff]
        %v433 = vld [vmem:[%s233 + $0x470] sm:$0xff]
        %v434 = vld [vmem:[%s233 + $0x478] sm:$0xff]
        %v435 = vld [vmem:[%s233 + $0x480] sm:$0xff]
        %v436 = vld [vmem:[%s233 + $0x488] sm:$0xff]
        %v437 = vld [vmem:[%s233 + $0x490] sm:$0xff]
        %v438 = vld [vmem:[%s233 + $0x498] sm:$0xff]
        %v439 = vld [vmem:[%s233 + $0x4a0] sm:$0xff]
        %v440 = vld [vmem:[%s233 + $0x4a8] sm:$0xff]
        %v441 = vld [vmem:[%s233 + $0x4b0] sm:$0xff]
        %v442 = vld [vmem:[%s233 + $0x4b8] sm:$0xff]
        %v443 = vld [vmem:[%s233 + $0x4c0] sm:$0xff]
        %v444 = vld [vmem:[%s233 + $0x4c8] sm:$0xff]
        %v445 = vld [vmem:[%s233 + $0x4d0] sm:$0xff]
        %v446 = vld [vmem:[%s233 + $0x4d8] sm:$0xff]
        %v447 = vld [vmem:[%s233 + $0x4e0] sm:$0xff]
        %v448 = vld [vmem:[%s233 + $0x4e8] sm:$0xff]
        %v449 = vld [vmem:[%s233 + $0x4f0] sm:$0xff]
        %v450 = vld [vmem:[%s233 + $0x4f8] sm:$0xff]
        %v451 = vld [vmem:[%s233 + $0x500] sm:$0xff]
        %v452 = vld [vmem:[%s233 + $0x508] sm:$0xff]
        %v453 = vld [vmem:[%s233 + $0x510] sm:$0xff]
        %v454 = vld [vmem:[%s233 + $0x518] sm:$0xff]
        %v455 = vld [vmem:[%s233 + $0x520] sm:$0xff]
        %v456 = vld [vmem:[%s233 + $0x528] sm:$0xff]
        %v457 = vld [vmem:[%s233 + $0x530] sm:$0xff]
        %v458 = vld [vmem:[%s233 + $0x538] sm:$0xff]
        %v459 = vld [vmem:[%s233 + $0x540] sm:$0xff]
        %v460 = vld [vmem:[%s233 + $0x548] sm:$0xff]
        %v461 = vld [vmem:[%s233 + $0x550] sm:$0xff]
        %v462 = vld [vmem:[%s233 + $0x558] sm:$0xff]
        %v463 = vld [vmem:[%s233 + $0x560] sm:$0xff]
        %v464 = vld [vmem:[%s233 + $0x568] sm:$0xff]
        %v465 = vld [vmem:[%s233 + $0x570] sm:$0xff]
        %v466 = vld [vmem:[%s233 + $0x578] sm:$0xff]
        %v467 = vld [vmem:[%s233 + $0x580] sm:$0xff]
        %v468 = vld [vmem:[%s233 + $0x588] sm:$0xff]
        %v469 = vld [vmem:[%s233 + $0x590] sm:$0xff]
        %v470 = vld [vmem:[%s233 + $0x598] sm:$0xff]
        %v471 = vld [vmem:[%s233 + $0x5a0] sm:$0xff]
        %v472 = vld [vmem:[%s233 + $0x5a8] sm:$0xff]
        %v473 = vld [vmem:[%s233 + $0x5b0] sm:$0xff]
        %v474 = vld [vmem:[%s233 + $0x5b8] sm:$0xff]
        %v475 = vld [vmem:[%s233 + $0x5c0] sm:$0xff]
        %v476 = vld [vmem:[%s233 + $0x5c8] sm:$0xff]
        %v477 = vld [vmem:[%s233 + $0x5d0] sm:$0xff]
        %v478 = vld [vmem:[%s233 + $0x5d8] sm:$0xff]
        %v479 = vld [vmem:[%s233 + $0x5e0] sm:$0xff]
        %v480 = vld [vmem:[%s233 + $0x5e8] sm:$0xff]
        %v481 = vld [vmem:[%s233 + $0x5f0] sm:$0xff]
        %v482 = vld [vmem:[%s233 + $0x5f8] sm:$0xff]
        %v483 = vld [vmem:[%s233 + $0x600] sm:$0xff]
        %v484 = vld [vmem:[%s233 + $0x608] sm:$0xff]
        %v485 = vld [vmem:[%s233 + $0x610] sm:$0xff]
        %v486 = vld [vmem:[%s233 + $0x618] sm:$0xff]
        %v487 = vld [vmem:[%s233 + $0x620] sm:$0xff]
        %v488 = vld [vmem:[%s233 + $0x628] sm:$0xff]
        %v489 = vld [vmem:[%s233 + $0x630] sm:$0xff]
        %v490 = vld [vmem:[%s233 + $0x638] sm:$0xff]
        %v491 = vld [vmem:[%s233 + $0x640] sm:$0xff]
        %v492 = vld [vmem:[%s233 + $0x648] sm:$0xff]
        %v493 = vld [vmem:[%s233 + $0x650] sm:$0xff]
        %v494 = vld [vmem:[%s233 + $0x658] sm:$0xff]
        %v495 = vld [vmem:[%s233 + $0x660] sm:$0xff]
        %v496 = vld [vmem:[%s233 + $0x668] sm:$0xff]
        %v497 = vld [vmem:[%s233 + $0x670] sm:$0xff]
        %v498 = vld [vmem:[%s233 + $0x678] sm:$0xff]
        %v499 = vld [vmem:[%s233 + $0x680] sm:$0xff]
        %v500 = vld [vmem:[%s233 + $0x688] sm:$0xff]
        %v501 = vld [vmem:[%s233 + $0x690] sm:$0xff]
        %v502 = vld [vmem:[%s233 + $0x698] sm:$0xff]
        %v503 = vld [vmem:[%s233 + $0x6a0] sm:$0xff]
        %v504 = vld [vmem:[%s233 + $0x6a8] sm:$0xff]
        %v505 = vld [vmem:[%s233 + $0x6b0] sm:$0xff]
        %v506 = vld [vmem:[%s233 + $0x6b8] sm:$0xff]
        %v507 = vld [vmem:[%s233 + $0x6c0] sm:$0xff]
        %v508 = vld [vmem:[%s233 + $0x6c8] sm:$0xff]
        %v509 = vld [vmem:[%s233 + $0x6d0] sm:$0xff]
        %v510 = vld [vmem:[%s233 + $0x6d8] sm:$0xff]
        %v511 = vld [vmem:[%s233 + $0x6e0] sm:$0xff]
        %v512 = vld [vmem:[%s233 + $0x6e8] sm:$0xff]
        %v513 = vld [vmem:[%s233 + $0x6f0] sm:$0xff]
        %v514 = vld [vmem:[%s233 + $0x6f8] sm:$0xff]
        %v515 = vld [vmem:[%s233 + $0x700] sm:$0xff]
        %v516 = vld [vmem:[%s233 + $0x708] sm:$0xff]
        %v517 = vld [vmem:[%s233 + $0x710] sm:$0xff]
        %v518 = vld [vmem:[%s233 + $0x718] sm:$0xff]
        %v519 = vld [vmem:[%s233 + $0x720] sm:$0xff]
        %v520 = vld [vmem:[%s233 + $0x728] sm:$0xff]
        %v521 = vld [vmem:[%s233 + $0x730] sm:$0xff]
        %v522 = vld [vmem:[%s233 + $0x738] sm:$0xff]
        %v523 = vld [vmem:[%s233 + $0x740] sm:$0xff]
        %v524 = vld [vmem:[%s233 + $0x748] sm:$0xff]
        %v525 = vld [vmem:[%s233 + $0x750] sm:$0xff]
        %v526 = vld [vmem:[%s233 + $0x758] sm:$0xff]
        %v527 = vld [vmem:[%s233 + $0x760] sm:$0xff]
        %v528 = vld [vmem:[%s233 + $0x768] sm:$0xff]
        %v529 = vld [vmem:[%s233 + $0x770] sm:$0xff]
        %v530 = vld [vmem:[%s233 + $0x778] sm:$0xff]
        %v531 = vld [vmem:[%s233 + $0x780] sm:$0xff]
        %v532 = vld [vmem:[%s233 + $0x788] sm:$0xff]
        %v533 = vld [vmem:[%s233 + $0x790] sm:$0xff]
        %v534 = vld [vmem:[%s233 + $0x798] sm:$0xff]
        %v535 = vld [vmem:[%s233 + $0x7a0] sm:$0xff]
        %v536 = vld [vmem:[%s233 + $0x7a8] sm:$0xff]
        %v537 = vld [vmem:[%s233 + $0x7b0] sm:$0xff]
        %v538 = vld [vmem:[%s233 + $0x7b8] sm:$0xff]
        %v539 = vld [vmem:[%s233 + $0x7c0] sm:$0xff]
        %v540 = vld [vmem:[%s233 + $0x7c8] sm:$0xff]
        %v541 = vld [vmem:[%s233 + $0x7d0] sm:$0xff]
        %v542 = vld [vmem:[%s233 + $0x7d8] sm:$0xff]
        %v543 = vld [vmem:[%s233 + $0x7e0] sm:$0xff]
        %v544 = vld [vmem:[%s233 + $0x7e8] sm:$0xff]
        %v545 = vld [vmem:[%s233 + $0x7f0] sm:$0xff]
        %v546 = vld [vmem:[%s233 + $0x7f8] sm:$0xff]
        %v547 = vld [vmem:[%s233 + $0x800] sm:$0xff]
        %v548 = vld [vmem:[%s233 + $0x808] sm:$0xff]
        %v549 = vld [vmem:[%s233 + $0x810] sm:$0xff]
        %v550 = vld [vmem:[%s233 + $0x818] sm:$0xff]
        %v551 = vld [vmem:[%s233 + $0x820] sm:$0xff]
        %v552 = vld [vmem:[%s233 + $0x828] sm:$0xff]
        %v553 = vld [vmem:[%s233 + $0x830] sm:$0xff]
        %v554 = vld [vmem:[%s233 + $0x838] sm:$0xff]
        %v555 = vld [vmem:[%s233 + $0x840] sm:$0xff]
        %v556 = vld [vmem:[%s233 + $0x848] sm:$0xff]
        %v557 = vld [vmem:[%s233 + $0x850] sm:$0xff]
        %v558 = vld [vmem:[%s233 + $0x858] sm:$0xff]
        %v559 = vld [vmem:[%s233 + $0x860] sm:$0xff]
        %v560 = vld [vmem:[%s233 + $0x868] sm:$0xff]
        %v561 = vld [vmem:[%s233 + $0x870] sm:$0xff]
        %v562 = vld [vmem:[%s233 + $0x878] sm:$0xff]
        %v563 = vld [vmem:[%s233 + $0x880] sm:$0xff]
        %v564 = vld [vmem:[%s233 + $0x888] sm:$0xff]
        %v565 = vld [vmem:[%s233 + $0x890] sm:$0xff]
        %v566 = vld [vmem:[%s233 + $0x898] sm:$0xff]
        %v567 = vld [vmem:[%s233 + $0x8a0] sm:$0xff]
        %v568 = vld [vmem:[%s233 + $0x8a8] sm:$0xff]
        %v569 = vld [vmem:[%s233 + $0x8b0] sm:$0xff]
        %v570 = vld [vmem:[%s233 + $0x8b8] sm:$0xff]
        %v571 = vld [vmem:[%s233 + $0x8c0] sm:$0xff]
        %v572 = vld [vmem:[%s233 + $0x8c8] sm:$0xff]
        %v573 = vld [vmem:[%s233 + $0x8d0] sm:$0xff]
        %v574 = vld [vmem:[%s233 + $0x8d8] sm:$0xff]
        %v575 = vld [vmem:[%s233 + $0x8e0] sm:$0xff]
        %v576 = vld [vmem:[%s233 + $0x8e8] sm:$0xff]
        %v577 = vld [vmem:[%s233 + $0x8f0] sm:$0xff]
        %v578 = vld [vmem:[%s233 + $0x8f8] sm:$0xff]
        %v579 = vld [vmem:[%s233 + $0x900] sm:$0xff]
        %v580 = vld [vmem:[%s233 + $0x908] sm:$0xff]
        %v581 = vld [vmem:[%s233 + $0x910] sm:$0xff]
        %v582 = vld [vmem:[%s233 + $0x918] sm:$0xff]
        %v583 = vld [vmem:[%s233 + $0x920] sm:$0xff]
        %v584 = vld [vmem:[%s233 + $0x928] sm:$0xff]
        %v585 = vld [vmem:[%s233 + $0x930] sm:$0xff]
        %v586 = vld [vmem:[%s233 + $0x938] sm:$0xff]
        %v587 = vld [vmem:[%s233 + $0x940] sm:$0xff]
        %v588 = vld [vmem:[%s233 + $0x948] sm:$0xff]
        %v589 = vld [vmem:[%s233 + $0x950] sm:$0xff]
        %v590 = vld [vmem:[%s233 + $0x958] sm:$0xff]
        %v591 = vld [vmem:[%s233 + $0x960] sm:$0xff]
        %v592 = vld [vmem:[%s233 + $0x968] sm:$0xff]
        %v593 = vld [vmem:[%s233 + $0x970] sm:$0xff]
        %v594 = vld [vmem:[%s233 + $0x978] sm:$0xff]
        %v595 = vld [vmem:[%s233 + $0x980] sm:$0xff]
        %v596 = vld [vmem:[%s233 + $0x988] sm:$0xff]
        %v597 = vld [vmem:[%s233 + $0x990] sm:$0xff]
        %v598 = vld [vmem:[%s233 + $0x998] sm:$0xff]
        %v599 = vld [vmem:[%s233 + $0x9a0] sm:$0xff]
        %v600 = vld [vmem:[%s233 + $0x9a8] sm:$0xff]
        %v601 = vld [vmem:[%s233 + $0x9b0] sm:$0xff]
        %v602 = vld [vmem:[%s233 + $0x9b8] sm:$0xff]
        %v603 = vld [vmem:[%s233 + $0x9c0] sm:$0xff]
        %v604 = vld [vmem:[%s233 + $0x9c8] sm:$0xff]
        %v605 = vld [vmem:[%s233 + $0x9d0] sm:$0xff]
        %v606 = vld [vmem:[%s233 + $0x9d8] sm:$0xff]
        %v607 = vld [vmem:[%s233 + $0x9e0] sm:$0xff]
        %v608 = vld [vmem:[%s233 + $0x9e8] sm:$0xff]
        %v609 = vld [vmem:[%s233 + $0x9f0] sm:$0xff]
        %v610 = vld [vmem:[%s233 + $0x9f8] sm:$0xff]
        %v611 = vld [vmem:[%s233 + $0xa00] sm:$0xff]
        %v612 = vld [vmem:[%s233 + $0xa08] sm:$0xff]
        %v613 = vld [vmem:[%s233 + $0xa10] sm:$0xff]
        %v614 = vld [vmem:[%s233 + $0xa18] sm:$0xff]
        %v615 = vld [vmem:[%s233 + $0xa20] sm:$0xff]
        %v616 = vld [vmem:[%s233 + $0xa28] sm:$0xff]
        %v617 = vld [vmem:[%s233 + $0xa30] sm:$0xff]
        %v618 = vld [vmem:[%s233 + $0xa38] sm:$0xff]
        %v619 = vld [vmem:[%s233 + $0xa40] sm:$0xff]
        %v620 = vld [vmem:[%s233 + $0xa48] sm:$0xff]
        %v621 = vld [vmem:[%s233 + $0xa50] sm:$0xff]
        %v622 = vld [vmem:[%s233 + $0xa58] sm:$0xff]
        %v623 = vld [vmem:[%s233 + $0xa60] sm:$0xff]
        %v624 = vld [vmem:[%s233 + $0xa68] sm:$0xff]
        %v625 = vld [vmem:[%s233 + $0xa70] sm:$0xff]
        %v626 = vld [vmem:[%s233 + $0xa78] sm:$0xff]
        %v627 = vld [vmem:[%s233 + $0xa80] sm:$0xff]
        %v628 = vld [vmem:[%s233 + $0xa88] sm:$0xff]
        %v629 = vld [vmem:[%s233 + $0xa90] sm:$0xff]
        %v630 = vld [vmem:[%s233 + $0xa98] sm:$0xff]
        %v631 = vld [vmem:[%s233 + $0xaa0] sm:$0xff]
        %v632 = vld [vmem:[%s233 + $0xaa8] sm:$0xff]
        %v633 = vld [vmem:[%s233 + $0xab0] sm:$0xff]
        %v634 = vld [vmem:[%s233 + $0xab8] sm:$0xff]
        %v635 = vld [vmem:[%s233 + $0xac0] sm:$0xff]
        %v636 = vld [vmem:[%s233 + $0xac8] sm:$0xff]
        %v637 = vld [vmem:[%s233 + $0xad0] sm:$0xff]
        %v638 = vld [vmem:[%s233 + $0xad8] sm:$0xff]
        %v639 = vld [vmem:[%s233 + $0xae0] sm:$0xff]
        %v640 = vld [vmem:[%s233 + $0xae8] sm:$0xff]
        %v641 = vld [vmem:[%s233 + $0xaf0] sm:$0xff]
        %v642 = vld [vmem:[%s233 + $0xaf8] sm:$0xff]
        %v643 = vld [vmem:[%s233 + $0xb00] sm:$0xff]
        %v644 = vld [vmem:[%s233 + $0xb08] sm:$0xff]
        %v645 = vld [vmem:[%s233 + $0xb10] sm:$0xff]
        %v646 = vld [vmem:[%s233 + $0xb18] sm:$0xff]
        %v647 = vld [vmem:[%s233 + $0xb20] sm:$0xff]
        %v648 = vld [vmem:[%s233 + $0xb28] sm:$0xff]
        %v649 = vld [vmem:[%s233 + $0xb30] sm:$0xff]
        %v650 = vld [vmem:[%s233 + $0xb38] sm:$0xff]
        %v651 = vld [vmem:[%s233 + $0xb40] sm:$0xff]
        %v652 = vld [vmem:[%s233 + $0xb48] sm:$0xff]
        %v653 = vld [vmem:[%s233 + $0xb50] sm:$0xff]
        %v654 = vld [vmem:[%s233 + $0xb58] sm:$0xff]
        %v655 = vld [vmem:[%s233 + $0xb60] sm:$0xff]
        %v656 = vld [vmem:[%s233 + $0xb68] sm:$0xff]
        %v657 = vld [vmem:[%s233 + $0xb70] sm:$0xff]
        %v658 = vld [vmem:[%s233 + $0xb78] sm:$0xff]
        %v659 = vld [vmem:[%s233 + $0xb80] sm:$0xff]
        %v660 = vld [vmem:[%s233 + $0xb88] sm:$0xff]
        %v661 = vld [vmem:[%s233 + $0xb90] sm:$0xff]
        %v662 = vld [vmem:[%s233 + $0xb98] sm:$0xff]
        %v663 = vld [vmem:[%s233 + $0xba0] sm:$0xff]
        %v664 = vld [vmem:[%s233 + $0xba8] sm:$0xff]
        %v665 = vld [vmem:[%s233 + $0xbb0] sm:$0xff]
        %v666 = vld [vmem:[%s233 + $0xbb8] sm:$0xff]
        %v667 = vld [vmem:[%s233 + $0xbc0] sm:$0xff]
        %v668 = vld [vmem:[%s233 + $0xbc8] sm:$0xff]
        %v669 = vld [vmem:[%s233 + $0xbd0] sm:$0xff]
        %v670 = vld [vmem:[%s233 + $0xbd8] sm:$0xff]
        %v671 = vld [vmem:[%s233 + $0xbe0] sm:$0xff]
        %v672 = vld [vmem:[%s233 + $0xbe8] sm:$0xff]
        %v673 = vld [vmem:[%s233 + $0xbf0] sm:$0xff]
        %v674 = vld [vmem:[%s233 + $0xbf8] sm:$0xff]
        %v675 = vld [vmem:[%s233 + $0xc00] sm:$0xff]
        %v676 = vld [vmem:[%s233 + $0xc08] sm:$0xff]
        %v677 = vld [vmem:[%s233 + $0xc10] sm:$0xff]
        %v678 = vld [vmem:[%s233 + $0xc18] sm:$0xff]
        %v679 = vld [vmem:[%s233 + $0xc20] sm:$0xff]
        %v680 = vld [vmem:[%s233 + $0xc28] sm:$0xff]
        %v681 = vld [vmem:[%s233 + $0xc30] sm:$0xff]
        %v682 = vld [vmem:[%s233 + $0xc38] sm:$0xff]
        %v683 = vld [vmem:[%s233 + $0xc40] sm:$0xff]
        %v684 = vld [vmem:[%s233 + $0xc48] sm:$0xff]
        %v685 = vld [vmem:[%s233 + $0xc50] sm:$0xff]
        %v686 = vld [vmem:[%s233 + $0xc58] sm:$0xff]
        %v687 = vld [vmem:[%s233 + $0xc60] sm:$0xff]
        %v688 = vld [vmem:[%s233 + $0xc68] sm:$0xff]
        %v689 = vld [vmem:[%s233 + $0xc70] sm:$0xff]
        %v690 = vld [vmem:[%s233 + $0xc78] sm:$0xff]
        %v691 = vld [vmem:[%s233 + $0xc80] sm:$0xff]
        %v692 = vld [vmem:[%s233 + $0xc88] sm:$0xff]
        %v693 = vld [vmem:[%s233 + $0xc90] sm:$0xff]
        %v694 = vld [vmem:[%s233 + $0xc98] sm:$0xff]
        %v695 = vld [vmem:[%s233 + $0xca0] sm:$0xff]
        %v696 = vld [vmem:[%s233 + $0xca8] sm:$0xff]
        %v697 = vld [vmem:[%s233 + $0xcb0] sm:$0xff]
        %v698 = vld [vmem:[%s233 + $0xcb8] sm:$0xff]
        %v699 = vld [vmem:[%s233 + $0xcc0] sm:$0xff]
        %v700 = vld [vmem:[%s233 + $0xcc8] sm:$0xff]
        %v701 = vld [vmem:[%s233 + $0xcd0] sm:$0xff]
        %v702 = vld [vmem:[%s233 + $0xcd8] sm:$0xff]
        %v703 = vld [vmem:[%s233 + $0xce0] sm:$0xff]
        %v704 = vld [vmem:[%s233 + $0xce8] sm:$0xff]
        %v705 = vld [vmem:[%s233 + $0xcf0] sm:$0xff]
        %v706 = vld [vmem:[%s233 + $0xcf8] sm:$0xff]
        %v707 = vld [vmem:[%s233 + $0xd00] sm:$0xff]
        %v708 = vld [vmem:[%s233 + $0xd08] sm:$0xff]
        %v709 = vld [vmem:[%s233 + $0xd10] sm:$0xff]
        %v710 = vld [vmem:[%s233 + $0xd18] sm:$0xff]
        %v711 = vld [vmem:[%s233 + $0xd20] sm:$0xff]
        %v712 = vld [vmem:[%s233 + $0xd28] sm:$0xff]
        %v713 = vld [vmem:[%s233 + $0xd30] sm:$0xff]
        %v714 = vld [vmem:[%s233 + $0xd38] sm:$0xff]
        %v715 = vld [vmem:[%s233 + $0xd40] sm:$0xff]
        %v716 = vld [vmem:[%s233 + $0xd48] sm:$0xff]
        %v717 = vld [vmem:[%s233 + $0xd50] sm:$0xff]
        %v718 = vld [vmem:[%s233 + $0xd58] sm:$0xff]
        %v719 = vld [vmem:[%s233 + $0xd60] sm:$0xff]
        %v720 = vld [vmem:[%s233 + $0xd68] sm:$0xff]
        %v721 = vld [vmem:[%s233 + $0xd70] sm:$0xff]
        %v722 = vld [vmem:[%s233 + $0xd78] sm:$0xff]
        %v723 = vld [vmem:[%s233 + $0xd80] sm:$0xff]
        %v724 = vld [vmem:[%s233 + $0xd88] sm:$0xff]
        %v725 = vld [vmem:[%s233 + $0xd90] sm:$0xff]
        %v726 = vld [vmem:[%s233 + $0xd98] sm:$0xff]
        %v727 = vld [vmem:[%s233 + $0xda0] sm:$0xff]
        %v728 = vld [vmem:[%s233 + $0xda8] sm:$0xff]
        %v729 = vld [vmem:[%s233 + $0xdb0] sm:$0xff]
        %v730 = vld [vmem:[%s233 + $0xdb8] sm:$0xff]
        %v731 = vld [vmem:[%s233 + $0xdc0] sm:$0xff]
        %v732 = vld [vmem:[%s233 + $0xdc8] sm:$0xff]
        %v733 = vld [vmem:[%s233 + $0xdd0] sm:$0xff]
        %v734 = vld [vmem:[%s233 + $0xdd8] sm:$0xff]
        %v735 = vld [vmem:[%s233 + $0xde0] sm:$0xff]
        %v736 = vld [vmem:[%s233 + $0xde8] sm:$0xff]
        %v737 = vld [vmem:[%s233 + $0xdf0] sm:$0xff]
        %v738 = vld [vmem:[%s233 + $0xdf8] sm:$0xff]
        %v1187 = vunpack.c.l.b16 %v291
        %v1188 = vunpack.c.h.b16 %v291
        %v1189 = vunpack.c.l.b16 %v292
        %v1190 = vunpack.c.h.b16 %v292
        %v1191 = vunpack.c.l.b16 %v293
        %v1192 = vunpack.c.h.b16 %v293
        %v1193 = vunpack.c.l.b16 %v294
        %v1194 = vunpack.c.h.b16 %v294
        %v1195 = vunpack.c.l.b16 %v295
        %v1196 = vunpack.c.h.b16 %v295
        %v1197 = vunpack.c.l.b16 %v296
        %v1198 = vunpack.c.h.b16 %v296
        %v1199 = vunpack.c.l.b16 %v297
        %v1200 = vunpack.c.h.b16 %v297
        %v1201 = vunpack.c.l.b16 %v298
        %v1202 = vunpack.c.h.b16 %v298
        %v1203 = vunpack.c.l.b16 %v299
        %v1204 = vunpack.c.h.b16 %v299
        %v1205 = vunpack.c.l.b16 %v300
        %v1206 = vunpack.c.h.b16 %v300
        %v1207 = vunpack.c.l.b16 %v301
        %v1208 = vunpack.c.h.b16 %v301
        %v1209 = vunpack.c.l.b16 %v302
        %v1210 = vunpack.c.h.b16 %v302
        %v1211 = vunpack.c.l.b16 %v303
        %v1212 = vunpack.c.h.b16 %v303
        %v1213 = vunpack.c.l.b16 %v304
        %v1214 = vunpack.c.h.b16 %v304
        %v1215 = vunpack.c.l.b16 %v305
        %v1216 = vunpack.c.h.b16 %v305
        %v1217 = vunpack.c.l.b16 %v306
        %v1218 = vunpack.c.h.b16 %v306
        %v1219 = vunpack.c.l.b16 %v307
        %v1220 = vunpack.c.h.b16 %v307
        %v1221 = vunpack.c.l.b16 %v308
        %v1222 = vunpack.c.h.b16 %v308
        %v1223 = vunpack.c.l.b16 %v309
        %v1224 = vunpack.c.h.b16 %v309
        %v1225 = vunpack.c.l.b16 %v310
        %v1226 = vunpack.c.h.b16 %v310
        %v1227 = vunpack.c.l.b16 %v311
        %v1228 = vunpack.c.h.b16 %v311
        %v1229 = vunpack.c.l.b16 %v312
        %v1230 = vunpack.c.h.b16 %v312
        %v1231 = vunpack.c.l.b16 %v313
        %v1232 = vunpack.c.h.b16 %v313
        %v1233 = vunpack.c.l.b16 %v314
        %v1234 = vunpack.c.h.b16 %v314
        %v1235 = vunpack.c.l.b16 %v315
        %v1236 = vunpack.c.h.b16 %v315
        %v1237 = vunpack.c.l.b16 %v316
        %v1238 = vunpack.c.h.b16 %v316
        %v1239 = vunpack.c.l.b16 %v317
        %v1240 = vunpack.c.h.b16 %v317
        %v1241 = vunpack.c.l.b16 %v318
        %v1242 = vunpack.c.h.b16 %v318
        %v1243 = vunpack.c.l.b16 %v319
        %v1244 = vunpack.c.h.b16 %v319
        %v1245 = vunpack.c.l.b16 %v320
        %v1246 = vunpack.c.h.b16 %v320
        %v1247 = vunpack.c.l.b16 %v321
        %v1248 = vunpack.c.h.b16 %v321
        %v1249 = vunpack.c.l.b16 %v322
        %v1250 = vunpack.c.h.b16 %v322
        %v1251 = vunpack.c.l.b16 %v323
        %v1252 = vunpack.c.h.b16 %v323
        %v1253 = vunpack.c.l.b16 %v324
        %v1254 = vunpack.c.h.b16 %v324
        %v1255 = vunpack.c.l.b16 %v325
        %v1256 = vunpack.c.h.b16 %v325
        %v1257 = vunpack.c.l.b16 %v326
        %v1258 = vunpack.c.h.b16 %v326
        %v1259 = vunpack.c.l.b16 %v327
        %v1260 = vunpack.c.h.b16 %v327
        %v1261 = vunpack.c.l.b16 %v328
        %v1262 = vunpack.c.h.b16 %v328
        %v1263 = vunpack.c.l.b16 %v329
        %v1264 = vunpack.c.h.b16 %v329
        %v1265 = vunpack.c.l.b16 %v330
        %v1266 = vunpack.c.h.b16 %v330
        %v1267 = vunpack.c.l.b16 %v331
        %v1268 = vunpack.c.h.b16 %v331
        %v1269 = vunpack.c.l.b16 %v332
        %v1270 = vunpack.c.h.b16 %v332
        %v1271 = vunpack.c.l.b16 %v333
        %v1272 = vunpack.c.h.b16 %v333
        %v1273 = vunpack.c.l.b16 %v334
        %v1274 = vunpack.c.h.b16 %v334
        %v1275 = vunpack.c.l.b16 %v335
        %v1276 = vunpack.c.h.b16 %v335
        %v1277 = vunpack.c.l.b16 %v336
        %v1278 = vunpack.c.h.b16 %v336
        %v1279 = vunpack.c.l.b16 %v337
        %v1280 = vunpack.c.h.b16 %v337
        %v1281 = vunpack.c.l.b16 %v338
        %v1282 = vunpack.c.h.b16 %v338
        %v1283 = vunpack.c.l.b16 %v339
        %v1284 = vunpack.c.h.b16 %v339
        %v1285 = vunpack.c.l.b16 %v340
        %v1286 = vunpack.c.h.b16 %v340
        %v1287 = vunpack.c.l.b16 %v341
        %v1288 = vunpack.c.h.b16 %v341
        %v1289 = vunpack.c.l.b16 %v342
        %v1290 = vunpack.c.h.b16 %v342
        %v1291 = vunpack.c.l.b16 %v343
        %v1292 = vunpack.c.h.b16 %v343
        %v1293 = vunpack.c.l.b16 %v344
        %v1294 = vunpack.c.h.b16 %v344
        %v1295 = vunpack.c.l.b16 %v345
        %v1296 = vunpack.c.h.b16 %v345
        %v1297 = vunpack.c.l.b16 %v346
        %v1298 = vunpack.c.h.b16 %v346
        %v1299 = vunpack.c.l.b16 %v347
        %v1300 = vunpack.c.h.b16 %v347
        %v1301 = vunpack.c.l.b16 %v348
        %v1302 = vunpack.c.h.b16 %v348
        %v1303 = vunpack.c.l.b16 %v349
        %v1304 = vunpack.c.h.b16 %v349
        %v1305 = vunpack.c.l.b16 %v350
        %v1306 = vunpack.c.h.b16 %v350
        %v1307 = vunpack.c.l.b16 %v351
        %v1308 = vunpack.c.h.b16 %v351
        %v1309 = vunpack.c.l.b16 %v352
        %v1310 = vunpack.c.h.b16 %v352
        %v1311 = vunpack.c.l.b16 %v353
        %v1312 = vunpack.c.h.b16 %v353
        %v1313 = vunpack.c.l.b16 %v354
        %v1314 = vunpack.c.h.b16 %v354
        %v1315 = vunpack.c.l.b16 %v355
        %v1316 = vunpack.c.h.b16 %v355
        %v1317 = vunpack.c.l.b16 %v356
        %v1318 = vunpack.c.h.b16 %v356
        %v1319 = vunpack.c.l.b16 %v357
        %v1320 = vunpack.c.h.b16 %v357
        %v1321 = vunpack.c.l.b16 %v358
        %v1322 = vunpack.c.h.b16 %v358
        %v1323 = vunpack.c.l.b16 %v359
        %v1324 = vunpack.c.h.b16 %v359
        %v1325 = vunpack.c.l.b16 %v360
        %v1326 = vunpack.c.h.b16 %v360
        %v1327 = vunpack.c.l.b16 %v361
        %v1328 = vunpack.c.h.b16 %v361
        %v1329 = vunpack.c.l.b16 %v362
        %v1330 = vunpack.c.h.b16 %v362
        %v1331 = vunpack.c.l.b16 %v363
        %v1332 = vunpack.c.h.b16 %v363
        %v1333 = vunpack.c.l.b16 %v364
        %v1334 = vunpack.c.h.b16 %v364
        %v1335 = vunpack.c.l.b16 %v365
        %v1336 = vunpack.c.h.b16 %v365
        %v1337 = vunpack.c.l.b16 %v366
        %v1338 = vunpack.c.h.b16 %v366
        %v1339 = vunpack.c.l.b16 %v367
        %v1340 = vunpack.c.h.b16 %v367
        %v1341 = vunpack.c.l.b16 %v368
        %v1342 = vunpack.c.h.b16 %v368
        %v1343 = vunpack.c.l.b16 %v369
        %v1344 = vunpack.c.h.b16 %v369
        %v1345 = vunpack.c.l.b16 %v370
        %v1346 = vunpack.c.h.b16 %v370
        %v1347 = vunpack.c.l.b16 %v371
        %v1348 = vunpack.c.h.b16 %v371
        %v1349 = vunpack.c.l.b16 %v372
        %v1350 = vunpack.c.h.b16 %v372
        %v1351 = vunpack.c.l.b16 %v373
        %v1352 = vunpack.c.h.b16 %v373
        %v1353 = vunpack.c.l.b16 %v374
        %v1354 = vunpack.c.h.b16 %v374
        %v1355 = vunpack.c.l.b16 %v375
        %v1356 = vunpack.c.h.b16 %v375
        %v1357 = vunpack.c.l.b16 %v376
        %v1358 = vunpack.c.h.b16 %v376
        %v1359 = vunpack.c.l.b16 %v377
        %v1360 = vunpack.c.h.b16 %v377
        %v1361 = vunpack.c.l.b16 %v378
        %v1362 = vunpack.c.h.b16 %v378
        %v1363 = vunpack.c.l.b16 %v379
        %v1364 = vunpack.c.h.b16 %v379
        %v1365 = vunpack.c.l.b16 %v380
        %v1366 = vunpack.c.h.b16 %v380
        %v1367 = vunpack.c.l.b16 %v381
        %v1368 = vunpack.c.h.b16 %v381
        %v1369 = vunpack.c.l.b16 %v382
        %v1370 = vunpack.c.h.b16 %v382
        %v1371 = vunpack.c.l.b16 %v383
        %v1372 = vunpack.c.h.b16 %v383
        %v1373 = vunpack.c.l.b16 %v384
        %v1374 = vunpack.c.h.b16 %v384
        %v1375 = vunpack.c.l.b16 %v385
        %v1376 = vunpack.c.h.b16 %v385
        %v1377 = vunpack.c.l.b16 %v386
        %v1378 = vunpack.c.h.b16 %v386
        %v1379 = vunpack.c.l.b16 %v387
        %v1380 = vunpack.c.h.b16 %v387
        %v1381 = vunpack.c.l.b16 %v388
        %v1382 = vunpack.c.h.b16 %v388
        %v1383 = vunpack.c.l.b16 %v389
        %v1384 = vunpack.c.h.b16 %v389
        %v1385 = vunpack.c.l.b16 %v390
        %v1386 = vunpack.c.h.b16 %v390
        %v1387 = vunpack.c.l.b16 %v391
        %v1388 = vunpack.c.h.b16 %v391
        %v1389 = vunpack.c.l.b16 %v392
        %v1390 = vunpack.c.h.b16 %v392
        %v1391 = vunpack.c.l.b16 %v393
        %v1392 = vunpack.c.h.b16 %v393
        %v1393 = vunpack.c.l.b16 %v394
        %v1394 = vunpack.c.h.b16 %v394
        %v1395 = vunpack.c.l.b16 %v395
        %v1396 = vunpack.c.h.b16 %v395
        %v1397 = vunpack.c.l.b16 %v396
        %v1398 = vunpack.c.h.b16 %v396
        %v1399 = vunpack.c.l.b16 %v397
        %v1400 = vunpack.c.h.b16 %v397
        %v1401 = vunpack.c.l.b16 %v398
        %v1402 = vunpack.c.h.b16 %v398
        %v1403 = vunpack.c.l.b16 %v399
        %v1404 = vunpack.c.h.b16 %v399
        %v1405 = vunpack.c.l.b16 %v400
        %v1406 = vunpack.c.h.b16 %v400
        %v1407 = vunpack.c.l.b16 %v401
        %v1408 = vunpack.c.h.b16 %v401
        %v1409 = vunpack.c.l.b16 %v402
        %v1410 = vunpack.c.h.b16 %v402
        %v1411 = vunpack.c.l.b16 %v403
        %v1412 = vunpack.c.h.b16 %v403
        %v1413 = vunpack.c.l.b16 %v404
        %v1414 = vunpack.c.h.b16 %v404
        %v1415 = vunpack.c.l.b16 %v405
        %v1416 = vunpack.c.h.b16 %v405
        %v1417 = vunpack.c.l.b16 %v406
        %v1418 = vunpack.c.h.b16 %v406
        %v1419 = vunpack.c.l.b16 %v407
        %v1420 = vunpack.c.h.b16 %v407
        %v1421 = vunpack.c.l.b16 %v408
        %v1422 = vunpack.c.h.b16 %v408
        %v1423 = vunpack.c.l.b16 %v409
        %v1424 = vunpack.c.h.b16 %v409
        %v1425 = vunpack.c.l.b16 %v410
        %v1426 = vunpack.c.h.b16 %v410
        %v1427 = vunpack.c.l.b16 %v411
        %v1428 = vunpack.c.h.b16 %v411
        %v1429 = vunpack.c.l.b16 %v412
        %v1430 = vunpack.c.h.b16 %v412
        %v1431 = vunpack.c.l.b16 %v413
        %v1432 = vunpack.c.h.b16 %v413
        %v1433 = vunpack.c.l.b16 %v414
        %v1434 = vunpack.c.h.b16 %v414
        %v1435 = vunpack.c.l.b16 %v415
        %v1436 = vunpack.c.h.b16 %v415
        %v1437 = vunpack.c.l.b16 %v416
        %v1438 = vunpack.c.h.b16 %v416
        %v1439 = vunpack.c.l.b16 %v417
        %v1440 = vunpack.c.h.b16 %v417
        %v1441 = vunpack.c.l.b16 %v418
        %v1442 = vunpack.c.h.b16 %v418
        %v1443 = vunpack.c.l.b16 %v419
        %v1444 = vunpack.c.h.b16 %v419
        %v1445 = vunpack.c.l.b16 %v420
        %v1446 = vunpack.c.h.b16 %v420
        %v1447 = vunpack.c.l.b16 %v421
        %v1448 = vunpack.c.h.b16 %v421
        %v1449 = vunpack.c.l.b16 %v422
        %v1450 = vunpack.c.h.b16 %v422
        %v1451 = vunpack.c.l.b16 %v423
        %v1452 = vunpack.c.h.b16 %v423
        %v1453 = vunpack.c.l.b16 %v424
        %v1454 = vunpack.c.h.b16 %v424
        %v1455 = vunpack.c.l.b16 %v425
        %v1456 = vunpack.c.h.b16 %v425
        %v1457 = vunpack.c.l.b16 %v426
        %v1458 = vunpack.c.h.b16 %v426
        %v1459 = vunpack.c.l.b16 %v427
        %v1460 = vunpack.c.h.b16 %v427
        %v1461 = vunpack.c.l.b16 %v428
        %v1462 = vunpack.c.h.b16 %v428
        %v1463 = vunpack.c.l.b16 %v429
        %v1464 = vunpack.c.h.b16 %v429
        %v1465 = vunpack.c.l.b16 %v430
        %v1466 = vunpack.c.h.b16 %v430
        %v1467 = vunpack.c.l.b16 %v431
        %v1468 = vunpack.c.h.b16 %v431
        %v1469 = vunpack.c.l.b16 %v432
        %v1470 = vunpack.c.h.b16 %v432
        %v1471 = vunpack.c.l.b16 %v433
        %v1472 = vunpack.c.h.b16 %v433
        %v1473 = vunpack.c.l.b16 %v434
        %v1474 = vunpack.c.h.b16 %v434
        %v1475 = vunpack.c.l.b16 %v435
        %v1476 = vunpack.c.h.b16 %v435
        %v1477 = vunpack.c.l.b16 %v436
        %v1478 = vunpack.c.h.b16 %v436
        %v1479 = vunpack.c.l.b16 %v437
        %v1480 = vunpack.c.h.b16 %v437
        %v1481 = vunpack.c.l.b16 %v438
        %v1482 = vunpack.c.h.b16 %v438
        %v1483 = vunpack.c.l.b16 %v439
        %v1484 = vunpack.c.h.b16 %v439
        %v1485 = vunpack.c.l.b16 %v440
        %v1486 = vunpack.c.h.b16 %v440
        %v1487 = vunpack.c.l.b16 %v441
        %v1488 = vunpack.c.h.b16 %v441
        %v1489 = vunpack.c.l.b16 %v442
        %v1490 = vunpack.c.h.b16 %v442
        %v1491 = vunpack.c.l.b16 %v443
        %v1492 = vunpack.c.h.b16 %v443
        %v1493 = vunpack.c.l.b16 %v444
        %v1494 = vunpack.c.h.b16 %v444
        %v1495 = vunpack.c.l.b16 %v445
        %v1496 = vunpack.c.h.b16 %v445
        %v1497 = vunpack.c.l.b16 %v446
        %v1498 = vunpack.c.h.b16 %v446
        %v1499 = vunpack.c.l.b16 %v447
        %v1500 = vunpack.c.h.b16 %v447
        %v1501 = vunpack.c.l.b16 %v448
        %v1502 = vunpack.c.h.b16 %v448
        %v1503 = vunpack.c.l.b16 %v449
        %v1504 = vunpack.c.h.b16 %v449
        %v1505 = vunpack.c.l.b16 %v450
        %v1506 = vunpack.c.h.b16 %v450
        %v1507 = vunpack.c.l.b16 %v451
        %v1508 = vunpack.c.h.b16 %v451
        %v1509 = vunpack.c.l.b16 %v452
        %v1510 = vunpack.c.h.b16 %v452
        %v1511 = vunpack.c.l.b16 %v453
        %v1512 = vunpack.c.h.b16 %v453
        %v1513 = vunpack.c.l.b16 %v454
        %v1514 = vunpack.c.h.b16 %v454
        %v1515 = vunpack.c.l.b16 %v455
        %v1516 = vunpack.c.h.b16 %v455
        %v1517 = vunpack.c.l.b16 %v456
        %v1518 = vunpack.c.h.b16 %v456
        %v1519 = vunpack.c.l.b16 %v457
        %v1520 = vunpack.c.h.b16 %v457
        %v1521 = vunpack.c.l.b16 %v458
        %v1522 = vunpack.c.h.b16 %v458
        %v1523 = vunpack.c.l.b16 %v459
        %v1524 = vunpack.c.h.b16 %v459
        %v1525 = vunpack.c.l.b16 %v460
        %v1526 = vunpack.c.h.b16 %v460
        %v1527 = vunpack.c.l.b16 %v461
        %v1528 = vunpack.c.h.b16 %v461
        %v1529 = vunpack.c.l.b16 %v462
        %v1530 = vunpack.c.h.b16 %v462
        %v1531 = vunpack.c.l.b16 %v463
        %v1532 = vunpack.c.h.b16 %v463
        %v1533 = vunpack.c.l.b16 %v464
        %v1534 = vunpack.c.h.b16 %v464
        %v1535 = vunpack.c.l.b16 %v465
        %v1536 = vunpack.c.h.b16 %v465
        %v1537 = vunpack.c.l.b16 %v466
        %v1538 = vunpack.c.h.b16 %v466
        %v1539 = vunpack.c.l.b16 %v467
        %v1540 = vunpack.c.h.b16 %v467
        %v1541 = vunpack.c.l.b16 %v468
        %v1542 = vunpack.c.h.b16 %v468
        %v1543 = vunpack.c.l.b16 %v469
        %v1544 = vunpack.c.h.b16 %v469
        %v1545 = vunpack.c.l.b16 %v470
        %v1546 = vunpack.c.h.b16 %v470
        %v1547 = vunpack.c.l.b16 %v471
        %v1548 = vunpack.c.h.b16 %v471
        %v1549 = vunpack.c.l.b16 %v472
        %v1550 = vunpack.c.h.b16 %v472
        %v1551 = vunpack.c.l.b16 %v473
        %v1552 = vunpack.c.h.b16 %v473
        %v1553 = vunpack.c.l.b16 %v474
        %v1554 = vunpack.c.h.b16 %v474
        %v1555 = vunpack.c.l.b16 %v475
        %v1556 = vunpack.c.h.b16 %v475
        %v1557 = vunpack.c.l.b16 %v476
        %v1558 = vunpack.c.h.b16 %v476
        %v1559 = vunpack.c.l.b16 %v477
        %v1560 = vunpack.c.h.b16 %v477
        %v1561 = vunpack.c.l.b16 %v478
        %v1562 = vunpack.c.h.b16 %v478
        %v1563 = vunpack.c.l.b16 %v479
        %v1564 = vunpack.c.h.b16 %v479
        %v1565 = vunpack.c.l.b16 %v480
        %v1566 = vunpack.c.h.b16 %v480
        %v1567 = vunpack.c.l.b16 %v481
        %v1568 = vunpack.c.h.b16 %v481
        %v1569 = vunpack.c.l.b16 %v482
        %v1570 = vunpack.c.h.b16 %v482
        %v1571 = vunpack.c.l.b16 %v483
        %v1572 = vunpack.c.h.b16 %v483
        %v1573 = vunpack.c.l.b16 %v484
        %v1574 = vunpack.c.h.b16 %v484
        %v1575 = vunpack.c.l.b16 %v485
        %v1576 = vunpack.c.h.b16 %v485
        %v1577 = vunpack.c.l.b16 %v486
        %v1578 = vunpack.c.h.b16 %v486
        %v1579 = vunpack.c.l.b16 %v487
        %v1580 = vunpack.c.h.b16 %v487
        %v1581 = vunpack.c.l.b16 %v488
        %v1582 = vunpack.c.h.b16 %v488
        %v1583 = vunpack.c.l.b16 %v489
        %v1584 = vunpack.c.h.b16 %v489
        %v1585 = vunpack.c.l.b16 %v490
        %v1586 = vunpack.c.h.b16 %v490
        %v1587 = vunpack.c.l.b16 %v491
        %v1588 = vunpack.c.h.b16 %v491
        %v1589 = vunpack.c.l.b16 %v492
        %v1590 = vunpack.c.h.b16 %v492
        %v1591 = vunpack.c.l.b16 %v493
        %v1592 = vunpack.c.h.b16 %v493
        %v1593 = vunpack.c.l.b16 %v494
        %v1594 = vunpack.c.h.b16 %v494
        %v1595 = vunpack.c.l.b16 %v495
        %v1596 = vunpack.c.h.b16 %v495
        %v1597 = vunpack.c.l.b16 %v496
        %v1598 = vunpack.c.h.b16 %v496
        %v1599 = vunpack.c.l.b16 %v497
        %v1600 = vunpack.c.h.b16 %v497
        %v1601 = vunpack.c.l.b16 %v498
        %v1602 = vunpack.c.h.b16 %v498
        %v1603 = vunpack.c.l.b16 %v499
        %v1604 = vunpack.c.h.b16 %v499
        %v1605 = vunpack.c.l.b16 %v500
        %v1606 = vunpack.c.h.b16 %v500
        %v1607 = vunpack.c.l.b16 %v501
        %v1608 = vunpack.c.h.b16 %v501
        %v1609 = vunpack.c.l.b16 %v502
        %v1610 = vunpack.c.h.b16 %v502
        %v1611 = vunpack.c.l.b16 %v503
        %v1612 = vunpack.c.h.b16 %v503
        %v1613 = vunpack.c.l.b16 %v504
        %v1614 = vunpack.c.h.b16 %v504
        %v1615 = vunpack.c.l.b16 %v505
        %v1616 = vunpack.c.h.b16 %v505
        %v1617 = vunpack.c.l.b16 %v506
        %v1618 = vunpack.c.h.b16 %v506
        %v1619 = vunpack.c.l.b16 %v507
        %v1620 = vunpack.c.h.b16 %v507
        %v1621 = vunpack.c.l.b16 %v508
        %v1622 = vunpack.c.h.b16 %v508
        %v1623 = vunpack.c.l.b16 %v509
        %v1624 = vunpack.c.h.b16 %v509
        %v1625 = vunpack.c.l.b16 %v510
        %v1626 = vunpack.c.h.b16 %v510
        %v1627 = vunpack.c.l.b16 %v511
        %v1628 = vunpack.c.h.b16 %v511
        %v1629 = vunpack.c.l.b16 %v512
        %v1630 = vunpack.c.h.b16 %v512
        %v1631 = vunpack.c.l.b16 %v513
        %v1632 = vunpack.c.h.b16 %v513
        %v1633 = vunpack.c.l.b16 %v514
        %v1634 = vunpack.c.h.b16 %v514
        %v1635 = vunpack.c.l.b16 %v515
        %v1636 = vunpack.c.h.b16 %v515
        %v1637 = vunpack.c.l.b16 %v516
        %v1638 = vunpack.c.h.b16 %v516
        %v1639 = vunpack.c.l.b16 %v517
        %v1640 = vunpack.c.h.b16 %v517
        %v1641 = vunpack.c.l.b16 %v518
        %v1642 = vunpack.c.h.b16 %v518
        %v1643 = vunpack.c.l.b16 %v519
        %v1644 = vunpack.c.h.b16 %v519
        %v1645 = vunpack.c.l.b16 %v520
        %v1646 = vunpack.c.h.b16 %v520
        %v1647 = vunpack.c.l.b16 %v521
        %v1648 = vunpack.c.h.b16 %v521
        %v1649 = vunpack.c.l.b16 %v522
        %v1650 = vunpack.c.h.b16 %v522
        %v1651 = vunpack.c.l.b16 %v523
        %v1652 = vunpack.c.h.b16 %v523
        %v1653 = vunpack.c.l.b16 %v524
        %v1654 = vunpack.c.h.b16 %v524
        %v1655 = vunpack.c.l.b16 %v525
        %v1656 = vunpack.c.h.b16 %v525
        %v1657 = vunpack.c.l.b16 %v526
        %v1658 = vunpack.c.h.b16 %v526
        %v1659 = vunpack.c.l.b16 %v527
        %v1660 = vunpack.c.h.b16 %v527
        %v1661 = vunpack.c.l.b16 %v528
        %v1662 = vunpack.c.h.b16 %v528
        %v1663 = vunpack.c.l.b16 %v529
        %v1664 = vunpack.c.h.b16 %v529
        %v1665 = vunpack.c.l.b16 %v530
        %v1666 = vunpack.c.h.b16 %v530
        %v1667 = vunpack.c.l.b16 %v531
        %v1668 = vunpack.c.h.b16 %v531
        %v1669 = vunpack.c.l.b16 %v532
        %v1670 = vunpack.c.h.b16 %v532
        %v1671 = vunpack.c.l.b16 %v533
        %v1672 = vunpack.c.h.b16 %v533
        %v1673 = vunpack.c.l.b16 %v534
        %v1674 = vunpack.c.h.b16 %v534
        %v1675 = vunpack.c.l.b16 %v535
        %v1676 = vunpack.c.h.b16 %v535
        %v1677 = vunpack.c.l.b16 %v536
        %v1678 = vunpack.c.h.b16 %v536
        %v1679 = vunpack.c.l.b16 %v537
        %v1680 = vunpack.c.h.b16 %v537
        %v1681 = vunpack.c.l.b16 %v538
        %v1682 = vunpack.c.h.b16 %v538
        %v1683 = vunpack.c.l.b16 %v539
        %v1684 = vunpack.c.h.b16 %v539
        %v1685 = vunpack.c.l.b16 %v540
        %v1686 = vunpack.c.h.b16 %v540
        %v1687 = vunpack.c.l.b16 %v541
        %v1688 = vunpack.c.h.b16 %v541
        %v1689 = vunpack.c.l.b16 %v542
        %v1690 = vunpack.c.h.b16 %v542
        %v1691 = vunpack.c.l.b16 %v543
        %v1692 = vunpack.c.h.b16 %v543
        %v1693 = vunpack.c.l.b16 %v544
        %v1694 = vunpack.c.h.b16 %v544
        %v1695 = vunpack.c.l.b16 %v545
        %v1696 = vunpack.c.h.b16 %v545
        %v1697 = vunpack.c.l.b16 %v546
        %v1698 = vunpack.c.h.b16 %v546
        %v1699 = vunpack.c.l.b16 %v547
        %v1700 = vunpack.c.h.b16 %v547
        %v1701 = vunpack.c.l.b16 %v548
        %v1702 = vunpack.c.h.b16 %v548
        %v1703 = vunpack.c.l.b16 %v549
        %v1704 = vunpack.c.h.b16 %v549
        %v1705 = vunpack.c.l.b16 %v550
        %v1706 = vunpack.c.h.b16 %v550
        %v1707 = vunpack.c.l.b16 %v551
        %v1708 = vunpack.c.h.b16 %v551
        %v1709 = vunpack.c.l.b16 %v552
        %v1710 = vunpack.c.h.b16 %v552
        %v1711 = vunpack.c.l.b16 %v553
        %v1712 = vunpack.c.h.b16 %v553
        %v1713 = vunpack.c.l.b16 %v554
        %v1714 = vunpack.c.h.b16 %v554
        %v1715 = vunpack.c.l.b16 %v555
        %v1716 = vunpack.c.h.b16 %v555
        %v1717 = vunpack.c.l.b16 %v556
        %v1718 = vunpack.c.h.b16 %v556
        %v1719 = vunpack.c.l.b16 %v557
        %v1720 = vunpack.c.h.b16 %v557
        %v1721 = vunpack.c.l.b16 %v558
        %v1722 = vunpack.c.h.b16 %v558
        %v1723 = vunpack.c.l.b16 %v559
        %v1724 = vunpack.c.h.b16 %v559
        %v1725 = vunpack.c.l.b16 %v560
        %v1726 = vunpack.c.h.b16 %v560
        %v1727 = vunpack.c.l.b16 %v561
        %v1728 = vunpack.c.h.b16 %v561
        %v1729 = vunpack.c.l.b16 %v562
        %v1730 = vunpack.c.h.b16 %v562
        %v1731 = vunpack.c.l.b16 %v563
        %v1732 = vunpack.c.h.b16 %v563
        %v1733 = vunpack.c.l.b16 %v564
        %v1734 = vunpack.c.h.b16 %v564
        %v1735 = vunpack.c.l.b16 %v565
        %v1736 = vunpack.c.h.b16 %v565
        %v1737 = vunpack.c.l.b16 %v566
        %v1738 = vunpack.c.h.b16 %v566
        %v1739 = vunpack.c.l.b16 %v567
        %v1740 = vunpack.c.h.b16 %v567
        %v1741 = vunpack.c.l.b16 %v568
        %v1742 = vunpack.c.h.b16 %v568
        %v1743 = vunpack.c.l.b16 %v569
        %v1744 = vunpack.c.h.b16 %v569
        %v1745 = vunpack.c.l.b16 %v570
        %v1746 = vunpack.c.h.b16 %v570
        %v1747 = vunpack.c.l.b16 %v571
        %v1748 = vunpack.c.h.b16 %v571
        %v1749 = vunpack.c.l.b16 %v572
        %v1750 = vunpack.c.h.b16 %v572
        %v1751 = vunpack.c.l.b16 %v573
        %v1752 = vunpack.c.h.b16 %v573
        %v1753 = vunpack.c.l.b16 %v574
        %v1754 = vunpack.c.h.b16 %v574
        %v1755 = vunpack.c.l.b16 %v575
        %v1756 = vunpack.c.h.b16 %v575
        %v1757 = vunpack.c.l.b16 %v576
        %v1758 = vunpack.c.h.b16 %v576
        %v1759 = vunpack.c.l.b16 %v577
        %v1760 = vunpack.c.h.b16 %v577
        %v1761 = vunpack.c.l.b16 %v578
        %v1762 = vunpack.c.h.b16 %v578
        %v1763 = vunpack.c.l.b16 %v579
        %v1764 = vunpack.c.h.b16 %v579
        %v1765 = vunpack.c.l.b16 %v580
        %v1766 = vunpack.c.h.b16 %v580
        %v1767 = vunpack.c.l.b16 %v581
        %v1768 = vunpack.c.h.b16 %v581
        %v1769 = vunpack.c.l.b16 %v582
        %v1770 = vunpack.c.h.b16 %v582
        %v1771 = vunpack.c.l.b16 %v583
        %v1772 = vunpack.c.h.b16 %v583
        %v1773 = vunpack.c.l.b16 %v584
        %v1774 = vunpack.c.h.b16 %v584
        %v1775 = vunpack.c.l.b16 %v585
        %v1776 = vunpack.c.h.b16 %v585
        %v1777 = vunpack.c.l.b16 %v586
        %v1778 = vunpack.c.h.b16 %v586
        %v1779 = vunpack.c.l.b16 %v587
        %v1780 = vunpack.c.h.b16 %v587
        %v1781 = vunpack.c.l.b16 %v588
        %v1782 = vunpack.c.h.b16 %v588
        %v1783 = vunpack.c.l.b16 %v589
        %v1784 = vunpack.c.h.b16 %v589
        %v1785 = vunpack.c.l.b16 %v590
        %v1786 = vunpack.c.h.b16 %v590
        %v1787 = vunpack.c.l.b16 %v591
        %v1788 = vunpack.c.h.b16 %v591
        %v1789 = vunpack.c.l.b16 %v592
        %v1790 = vunpack.c.h.b16 %v592
        %v1791 = vunpack.c.l.b16 %v593
        %v1792 = vunpack.c.h.b16 %v593
        %v1793 = vunpack.c.l.b16 %v594
        %v1794 = vunpack.c.h.b16 %v594
        %v1795 = vunpack.c.l.b16 %v595
        %v1796 = vunpack.c.h.b16 %v595
        %v1797 = vunpack.c.l.b16 %v596
        %v1798 = vunpack.c.h.b16 %v596
        %v1799 = vunpack.c.l.b16 %v597
        %v1800 = vunpack.c.h.b16 %v597
        %v1801 = vunpack.c.l.b16 %v598
        %v1802 = vunpack.c.h.b16 %v598
        %v1803 = vunpack.c.l.b16 %v599
        %v1804 = vunpack.c.h.b16 %v599
        %v1805 = vunpack.c.l.b16 %v600
        %v1806 = vunpack.c.h.b16 %v600
        %v1807 = vunpack.c.l.b16 %v601
        %v1808 = vunpack.c.h.b16 %v601
        %v1809 = vunpack.c.l.b16 %v602
        %v1810 = vunpack.c.h.b16 %v602
        %v1811 = vunpack.c.l.b16 %v603
        %v1812 = vunpack.c.h.b16 %v603
        %v1813 = vunpack.c.l.b16 %v604
        %v1814 = vunpack.c.h.b16 %v604
        %v1815 = vunpack.c.l.b16 %v605
        %v1816 = vunpack.c.h.b16 %v605
        %v1817 = vunpack.c.l.b16 %v606
        %v1818 = vunpack.c.h.b16 %v606
        %v1819 = vunpack.c.l.b16 %v607
        %v1820 = vunpack.c.h.b16 %v607
        %v1821 = vunpack.c.l.b16 %v608
        %v1822 = vunpack.c.h.b16 %v608
        %v1823 = vunpack.c.l.b16 %v609
        %v1824 = vunpack.c.h.b16 %v609
        %v1825 = vunpack.c.l.b16 %v610
        %v1826 = vunpack.c.h.b16 %v610
        %v1827 = vunpack.c.l.b16 %v611
        %v1828 = vunpack.c.h.b16 %v611
        %v1829 = vunpack.c.l.b16 %v612
        %v1830 = vunpack.c.h.b16 %v612
        %v1831 = vunpack.c.l.b16 %v613
        %v1832 = vunpack.c.h.b16 %v613
        %v1833 = vunpack.c.l.b16 %v614
        %v1834 = vunpack.c.h.b16 %v614
        %v1835 = vunpack.c.l.b16 %v615
        %v1836 = vunpack.c.h.b16 %v615
        %v1837 = vunpack.c.l.b16 %v616
        %v1838 = vunpack.c.h.b16 %v616
        %v1839 = vunpack.c.l.b16 %v617
        %v1840 = vunpack.c.h.b16 %v617
        %v1841 = vunpack.c.l.b16 %v618
        %v1842 = vunpack.c.h.b16 %v618
        %v1843 = vunpack.c.l.b16 %v619
        %v1844 = vunpack.c.h.b16 %v619
        %v1845 = vunpack.c.l.b16 %v620
        %v1846 = vunpack.c.h.b16 %v620
        %v1847 = vunpack.c.l.b16 %v621
        %v1848 = vunpack.c.h.b16 %v621
        %v1849 = vunpack.c.l.b16 %v622
        %v1850 = vunpack.c.h.b16 %v622
        %v1851 = vunpack.c.l.b16 %v623
        %v1852 = vunpack.c.h.b16 %v623
        %v1853 = vunpack.c.l.b16 %v624
        %v1854 = vunpack.c.h.b16 %v624
        %v1855 = vunpack.c.l.b16 %v625
        %v1856 = vunpack.c.h.b16 %v625
        %v1857 = vunpack.c.l.b16 %v626
        %v1858 = vunpack.c.h.b16 %v626
        %v1859 = vunpack.c.l.b16 %v627
        %v1860 = vunpack.c.h.b16 %v627
        %v1861 = vunpack.c.l.b16 %v628
        %v1862 = vunpack.c.h.b16 %v628
        %v1863 = vunpack.c.l.b16 %v629
        %v1864 = vunpack.c.h.b16 %v629
        %v1865 = vunpack.c.l.b16 %v630
        %v1866 = vunpack.c.h.b16 %v630
        %v1867 = vunpack.c.l.b16 %v631
        %v1868 = vunpack.c.h.b16 %v631
        %v1869 = vunpack.c.l.b16 %v632
        %v1870 = vunpack.c.h.b16 %v632
        %v1871 = vunpack.c.l.b16 %v633
        %v1872 = vunpack.c.h.b16 %v633
        %v1873 = vunpack.c.l.b16 %v634
        %v1874 = vunpack.c.h.b16 %v634
        %v1875 = vunpack.c.l.b16 %v635
        %v1876 = vunpack.c.h.b16 %v635
        %v1877 = vunpack.c.l.b16 %v636
        %v1878 = vunpack.c.h.b16 %v636
        %v1879 = vunpack.c.l.b16 %v637
        %v1880 = vunpack.c.h.b16 %v637
        %v1881 = vunpack.c.l.b16 %v638
        %v1882 = vunpack.c.h.b16 %v638
        %v1883 = vunpack.c.l.b16 %v639
        %v1884 = vunpack.c.h.b16 %v639
        %v1885 = vunpack.c.l.b16 %v640
        %v1886 = vunpack.c.h.b16 %v640
        %v1887 = vunpack.c.l.b16 %v641
        %v1888 = vunpack.c.h.b16 %v641
        %v1889 = vunpack.c.l.b16 %v642
        %v1890 = vunpack.c.h.b16 %v642
        %v1891 = vunpack.c.l.b16 %v643
        %v1892 = vunpack.c.h.b16 %v643
        %v1893 = vunpack.c.l.b16 %v644
        %v1894 = vunpack.c.h.b16 %v644
        %v1895 = vunpack.c.l.b16 %v645
        %v1896 = vunpack.c.h.b16 %v645
        %v1897 = vunpack.c.l.b16 %v646
        %v1898 = vunpack.c.h.b16 %v646
        %v1899 = vunpack.c.l.b16 %v647
        %v1900 = vunpack.c.h.b16 %v647
        %v1901 = vunpack.c.l.b16 %v648
        %v1902 = vunpack.c.h.b16 %v648
        %v1903 = vunpack.c.l.b16 %v649
        %v1904 = vunpack.c.h.b16 %v649
        %v1905 = vunpack.c.l.b16 %v650
        %v1906 = vunpack.c.h.b16 %v650
        %v1907 = vunpack.c.l.b16 %v651
        %v1908 = vunpack.c.h.b16 %v651
        %v1909 = vunpack.c.l.b16 %v652
        %v1910 = vunpack.c.h.b16 %v652
        %v1911 = vunpack.c.l.b16 %v653
        %v1912 = vunpack.c.h.b16 %v653
        %v1913 = vunpack.c.l.b16 %v654
        %v1914 = vunpack.c.h.b16 %v654
        %v1915 = vunpack.c.l.b16 %v655
        %v1916 = vunpack.c.h.b16 %v655
        %v1917 = vunpack.c.l.b16 %v656
        %v1918 = vunpack.c.h.b16 %v656
        %v1919 = vunpack.c.l.b16 %v657
        %v1920 = vunpack.c.h.b16 %v657
        %v1921 = vunpack.c.l.b16 %v658
        %v1922 = vunpack.c.h.b16 %v658
        %v1923 = vunpack.c.l.b16 %v659
        %v1924 = vunpack.c.h.b16 %v659
        %v1925 = vunpack.c.l.b16 %v660
        %v1926 = vunpack.c.h.b16 %v660
        %v1927 = vunpack.c.l.b16 %v661
        %v1928 = vunpack.c.h.b16 %v661
        %v1929 = vunpack.c.l.b16 %v662
        %v1930 = vunpack.c.h.b16 %v662
        %v1931 = vunpack.c.l.b16 %v663
        %v1932 = vunpack.c.h.b16 %v663
        %v1933 = vunpack.c.l.b16 %v664
        %v1934 = vunpack.c.h.b16 %v664
        %v1935 = vunpack.c.l.b16 %v665
        %v1936 = vunpack.c.h.b16 %v665
        %v1937 = vunpack.c.l.b16 %v666
        %v1938 = vunpack.c.h.b16 %v666
        %v1939 = vunpack.c.l.b16 %v667
        %v1940 = vunpack.c.h.b16 %v667
        %v1941 = vunpack.c.l.b16 %v668
        %v1942 = vunpack.c.h.b16 %v668
        %v1943 = vunpack.c.l.b16 %v669
        %v1944 = vunpack.c.h.b16 %v669
        %v1945 = vunpack.c.l.b16 %v670
        %v1946 = vunpack.c.h.b16 %v670
        %v1947 = vunpack.c.l.b16 %v671
        %v1948 = vunpack.c.h.b16 %v671
        %v1949 = vunpack.c.l.b16 %v672
        %v1950 = vunpack.c.h.b16 %v672
        %v1951 = vunpack.c.l.b16 %v673
        %v1952 = vunpack.c.h.b16 %v673
        %v1953 = vunpack.c.l.b16 %v674
        %v1954 = vunpack.c.h.b16 %v674
        %v1955 = vunpack.c.l.b16 %v675
        %v1956 = vunpack.c.h.b16 %v675
        %v1957 = vunpack.c.l.b16 %v676
        %v1958 = vunpack.c.h.b16 %v676
        %v1959 = vunpack.c.l.b16 %v677
        %v1960 = vunpack.c.h.b16 %v677
        %v1961 = vunpack.c.l.b16 %v678
        %v1962 = vunpack.c.h.b16 %v678
        %v1963 = vunpack.c.l.b16 %v679
        %v1964 = vunpack.c.h.b16 %v679
        %v1965 = vunpack.c.l.b16 %v680
        %v1966 = vunpack.c.h.b16 %v680
        %v1967 = vunpack.c.l.b16 %v681
        %v1968 = vunpack.c.h.b16 %v681
        %v1969 = vunpack.c.l.b16 %v682
        %v1970 = vunpack.c.h.b16 %v682
        %v1971 = vunpack.c.l.b16 %v683
        %v1972 = vunpack.c.h.b16 %v683
        %v1973 = vunpack.c.l.b16 %v684
        %v1974 = vunpack.c.h.b16 %v684
        %v1975 = vunpack.c.l.b16 %v685
        %v1976 = vunpack.c.h.b16 %v685
        %v1977 = vunpack.c.l.b16 %v686
        %v1978 = vunpack.c.h.b16 %v686
        %v1979 = vunpack.c.l.b16 %v687
        %v1980 = vunpack.c.h.b16 %v687
        %v1981 = vunpack.c.l.b16 %v688
        %v1982 = vunpack.c.h.b16 %v688
        %v1983 = vunpack.c.l.b16 %v689
        %v1984 = vunpack.c.h.b16 %v689
        %v1985 = vunpack.c.l.b16 %v690
        %v1986 = vunpack.c.h.b16 %v690
        %v1987 = vunpack.c.l.b16 %v691
        %v1988 = vunpack.c.h.b16 %v691
        %v1989 = vunpack.c.l.b16 %v692
        %v1990 = vunpack.c.h.b16 %v692
        %v1991 = vunpack.c.l.b16 %v693
        %v1992 = vunpack.c.h.b16 %v693
        %v1993 = vunpack.c.l.b16 %v694
        %v1994 = vunpack.c.h.b16 %v694
        %v1995 = vunpack.c.l.b16 %v695
        %v1996 = vunpack.c.h.b16 %v695
        %v1997 = vunpack.c.l.b16 %v696
        %v1998 = vunpack.c.h.b16 %v696
        %v1999 = vunpack.c.l.b16 %v697
        %v2000 = vunpack.c.h.b16 %v697
        %v2001 = vunpack.c.l.b16 %v698
        %v2002 = vunpack.c.h.b16 %v698
        %v2003 = vunpack.c.l.b16 %v699
        %v2004 = vunpack.c.h.b16 %v699
        %v2005 = vunpack.c.l.b16 %v700
        %v2006 = vunpack.c.h.b16 %v700
        %v2007 = vunpack.c.l.b16 %v701
        %v2008 = vunpack.c.h.b16 %v701
        %v2009 = vunpack.c.l.b16 %v702
        %v2010 = vunpack.c.h.b16 %v702
        %v2011 = vunpack.c.l.b16 %v703
        %v2012 = vunpack.c.h.b16 %v703
        %v2013 = vunpack.c.l.b16 %v704
        %v2014 = vunpack.c.h.b16 %v704
        %v2015 = vunpack.c.l.b16 %v705
        %v2016 = vunpack.c.h.b16 %v705
        %v2017 = vunpack.c.l.b16 %v706
        %v2018 = vunpack.c.h.b16 %v706
        %v2019 = vunpack.c.l.b16 %v707
        %v2020 = vunpack.c.h.b16 %v707
        %v2021 = vunpack.c.l.b16 %v708
        %v2022 = vunpack.c.h.b16 %v708
        %v2023 = vunpack.c.l.b16 %v709
        %v2024 = vunpack.c.h.b16 %v709
        %v2025 = vunpack.c.l.b16 %v710
        %v2026 = vunpack.c.h.b16 %v710
        %v2027 = vunpack.c.l.b16 %v711
        %v2028 = vunpack.c.h.b16 %v711
        %v2029 = vunpack.c.l.b16 %v712
        %v2030 = vunpack.c.h.b16 %v712
        %v2031 = vunpack.c.l.b16 %v713
        %v2032 = vunpack.c.h.b16 %v713
        %v2033 = vunpack.c.l.b16 %v714
        %v2034 = vunpack.c.h.b16 %v714
        %v2035 = vunpack.c.l.b16 %v715
        %v2036 = vunpack.c.h.b16 %v715
        %v2037 = vunpack.c.l.b16 %v716
        %v2038 = vunpack.c.h.b16 %v716
        %v2039 = vunpack.c.l.b16 %v717
        %v2040 = vunpack.c.h.b16 %v717
        %v2041 = vunpack.c.l.b16 %v718
        %v2042 = vunpack.c.h.b16 %v718
        %v2043 = vunpack.c.l.b16 %v719
        %v2044 = vunpack.c.h.b16 %v719
        %v2045 = vunpack.c.l.b16 %v720
        %v2046 = vunpack.c.h.b16 %v720
        %v2047 = vunpack.c.l.b16 %v721
        %v2048 = vunpack.c.h.b16 %v721
        %v2049 = vunpack.c.l.b16 %v722
        %v2050 = vunpack.c.h.b16 %v722
        %v2051 = vunpack.c.l.b16 %v723
        %v2052 = vunpack.c.h.b16 %v723
        %v2053 = vunpack.c.l.b16 %v724
        %v2054 = vunpack.c.h.b16 %v724
        %v2055 = vunpack.c.l.b16 %v725
        %v2056 = vunpack.c.h.b16 %v725
        %v2057 = vunpack.c.l.b16 %v726
        %v2058 = vunpack.c.h.b16 %v726
        %v2059 = vunpack.c.l.b16 %v727
        %v2060 = vunpack.c.h.b16 %v727
        %v2061 = vunpack.c.l.b16 %v728
        %v2062 = vunpack.c.h.b16 %v728
        %v2063 = vunpack.c.l.b16 %v729
        %v2064 = vunpack.c.h.b16 %v729
        %v2065 = vunpack.c.l.b16 %v730
        %v2066 = vunpack.c.h.b16 %v730
        %v2067 = vunpack.c.l.b16 %v731
        %v2068 = vunpack.c.h.b16 %v731
        %v2069 = vunpack.c.l.b16 %v732
        %v2070 = vunpack.c.h.b16 %v732
        %v2071 = vunpack.c.l.b16 %v733
        %v2072 = vunpack.c.h.b16 %v733
        %v2073 = vunpack.c.l.b16 %v734
        %v2074 = vunpack.c.h.b16 %v734
        %v2075 = vunpack.c.l.b16 %v735
        %v2076 = vunpack.c.h.b16 %v735
        %v2077 = vunpack.c.l.b16 %v736
        %v2078 = vunpack.c.h.b16 %v736
        %v2079 = vunpack.c.l.b16 %v737
        %v2080 = vunpack.c.h.b16 %v737
        %v2081 = vunpack.c.l.b16 %v738
        %v2082 = vunpack.c.h.b16 %v738
        %v2083 = vpack.c.b16 %v1191, %v1187
        %v2084 = vpack.c.b16 %v1192, %v1188
        %v2085 = vpack.c.b16 %v1193, %v1189
        %v2086 = vpack.c.b16 %v1194, %v1190
        %v2087 = vpack.c.b16 %v1199, %v1195
        %v2088 = vpack.c.b16 %v1200, %v1196
        %v2089 = vpack.c.b16 %v1201, %v1197
        %v2090 = vpack.c.b16 %v1202, %v1198
        %v2091 = vpack.c.b16 %v1207, %v1203
        %v2092 = vpack.c.b16 %v1208, %v1204
        %v2093 = vpack.c.b16 %v1209, %v1205
        %v2094 = vpack.c.b16 %v1210, %v1206
        %v2095 = vpack.c.b16 %v1215, %v1211
        %v2096 = vpack.c.b16 %v1216, %v1212
        %v2097 = vpack.c.b16 %v1217, %v1213
        %v2098 = vpack.c.b16 %v1218, %v1214
        %v2099 = vpack.c.b16 %v1223, %v1219
        %v2100 = vpack.c.b16 %v1224, %v1220
        %v2101 = vpack.c.b16 %v1225, %v1221
        %v2102 = vpack.c.b16 %v1226, %v1222
        %v2103 = vpack.c.b16 %v1231, %v1227
        %v2104 = vpack.c.b16 %v1232, %v1228
        %v2105 = vpack.c.b16 %v1233, %v1229
        %v2106 = vpack.c.b16 %v1234, %v1230
        %v2107 = vpack.c.b16 %v1239, %v1235
        %v2108 = vpack.c.b16 %v1240, %v1236
        %v2109 = vpack.c.b16 %v1241, %v1237
        %v2110 = vpack.c.b16 %v1242, %v1238
        %v2111 = vpack.c.b16 %v1247, %v1243
        %v2112 = vpack.c.b16 %v1248, %v1244
        %v2113 = vpack.c.b16 %v1249, %v1245
        %v2114 = vpack.c.b16 %v1250, %v1246
        %v2115 = vpack.c.b16 %v1255, %v1251
        %v2116 = vpack.c.b16 %v1256, %v1252
        %v2117 = vpack.c.b16 %v1257, %v1253
        %v2118 = vpack.c.b16 %v1258, %v1254
        %v2119 = vpack.c.b16 %v1263, %v1259
        %v2120 = vpack.c.b16 %v1264, %v1260
        %v2121 = vpack.c.b16 %v1265, %v1261
        %v2122 = vpack.c.b16 %v1266, %v1262
        %v2123 = vpack.c.b16 %v1271, %v1267
        %v2124 = vpack.c.b16 %v1272, %v1268
        %v2125 = vpack.c.b16 %v1273, %v1269
        %v2126 = vpack.c.b16 %v1274, %v1270
        %v2127 = vpack.c.b16 %v1279, %v1275
        %v2128 = vpack.c.b16 %v1280, %v1276
        %v2129 = vpack.c.b16 %v1281, %v1277
        %v2130 = vpack.c.b16 %v1282, %v1278
        %v2131 = vpack.c.b16 %v1287, %v1283
        %v2132 = vpack.c.b16 %v1288, %v1284
        %v2133 = vpack.c.b16 %v1289, %v1285
        %v2134 = vpack.c.b16 %v1290, %v1286
        %v2135 = vpack.c.b16 %v1295, %v1291
        %v2136 = vpack.c.b16 %v1296, %v1292
        %v2137 = vpack.c.b16 %v1297, %v1293
        %v2138 = vpack.c.b16 %v1298, %v1294
        %v2139 = vpack.c.b16 %v1303, %v1299
        %v2140 = vpack.c.b16 %v1304, %v1300
        %v2141 = vpack.c.b16 %v1305, %v1301
        %v2142 = vpack.c.b16 %v1306, %v1302
        %v2143 = vpack.c.b16 %v1311, %v1307
        %v2144 = vpack.c.b16 %v1312, %v1308
        %v2145 = vpack.c.b16 %v1313, %v1309
        %v2146 = vpack.c.b16 %v1314, %v1310
        %v2147 = vpack.c.b16 %v1319, %v1315
        %v2148 = vpack.c.b16 %v1320, %v1316
        %v2149 = vpack.c.b16 %v1321, %v1317
        %v2150 = vpack.c.b16 %v1322, %v1318
        %v2151 = vpack.c.b16 %v1327, %v1323
        %v2152 = vpack.c.b16 %v1328, %v1324
        %v2153 = vpack.c.b16 %v1329, %v1325
        %v2154 = vpack.c.b16 %v1330, %v1326
        %v2155 = vpack.c.b16 %v1335, %v1331
        %v2156 = vpack.c.b16 %v1336, %v1332
        %v2157 = vpack.c.b16 %v1337, %v1333
        %v2158 = vpack.c.b16 %v1338, %v1334
        %v2159 = vpack.c.b16 %v1343, %v1339
        %v2160 = vpack.c.b16 %v1344, %v1340
        %v2161 = vpack.c.b16 %v1345, %v1341
        %v2162 = vpack.c.b16 %v1346, %v1342
        %v2163 = vpack.c.b16 %v1351, %v1347
        %v2164 = vpack.c.b16 %v1352, %v1348
        %v2165 = vpack.c.b16 %v1353, %v1349
        %v2166 = vpack.c.b16 %v1354, %v1350
        %v2167 = vpack.c.b16 %v1359, %v1355
        %v2168 = vpack.c.b16 %v1360, %v1356
        %v2169 = vpack.c.b16 %v1361, %v1357
        %v2170 = vpack.c.b16 %v1362, %v1358
        %v2171 = vpack.c.b16 %v1367, %v1363
        %v2172 = vpack.c.b16 %v1368, %v1364
        %v2173 = vpack.c.b16 %v1369, %v1365
        %v2174 = vpack.c.b16 %v1370, %v1366
        %v2175 = vpack.c.b16 %v1375, %v1371
        %v2176 = vpack.c.b16 %v1376, %v1372
        %v2177 = vpack.c.b16 %v1377, %v1373
        %v2178 = vpack.c.b16 %v1378, %v1374
        %v2179 = vpack.c.b16 %v1383, %v1379
        %v2180 = vpack.c.b16 %v1384, %v1380
        %v2181 = vpack.c.b16 %v1385, %v1381
        %v2182 = vpack.c.b16 %v1386, %v1382
        %v2183 = vpack.c.b16 %v1391, %v1387
        %v2184 = vpack.c.b16 %v1392, %v1388
        %v2185 = vpack.c.b16 %v1393, %v1389
        %v2186 = vpack.c.b16 %v1394, %v1390
        %v2187 = vpack.c.b16 %v1399, %v1395
        %v2188 = vpack.c.b16 %v1400, %v1396
        %v2189 = vpack.c.b16 %v1401, %v1397
        %v2190 = vpack.c.b16 %v1402, %v1398
        %v2191 = vpack.c.b16 %v1407, %v1403
        %v2192 = vpack.c.b16 %v1408, %v1404
        %v2193 = vpack.c.b16 %v1409, %v1405
        %v2194 = vpack.c.b16 %v1410, %v1406
        %v2195 = vpack.c.b16 %v1415, %v1411
        %v2196 = vpack.c.b16 %v1416, %v1412
        %v2197 = vpack.c.b16 %v1417, %v1413
        %v2198 = vpack.c.b16 %v1418, %v1414
        %v2199 = vpack.c.b16 %v1423, %v1419
        %v2200 = vpack.c.b16 %v1424, %v1420
        %v2201 = vpack.c.b16 %v1425, %v1421
        %v2202 = vpack.c.b16 %v1426, %v1422
        %v2203 = vpack.c.b16 %v1431, %v1427
        %v2204 = vpack.c.b16 %v1432, %v1428
        %v2205 = vpack.c.b16 %v1433, %v1429
        %v2206 = vpack.c.b16 %v1434, %v1430
        %v2207 = vpack.c.b16 %v1439, %v1435
        %v2208 = vpack.c.b16 %v1440, %v1436
        %v2209 = vpack.c.b16 %v1441, %v1437
        %v2210 = vpack.c.b16 %v1442, %v1438
        %v2211 = vpack.c.b16 %v1447, %v1443
        %v2212 = vpack.c.b16 %v1448, %v1444
        %v2213 = vpack.c.b16 %v1449, %v1445
        %v2214 = vpack.c.b16 %v1450, %v1446
        %v2215 = vpack.c.b16 %v1455, %v1451
        %v2216 = vpack.c.b16 %v1456, %v1452
        %v2217 = vpack.c.b16 %v1457, %v1453
        %v2218 = vpack.c.b16 %v1458, %v1454
        %v2219 = vpack.c.b16 %v1463, %v1459
        %v2220 = vpack.c.b16 %v1464, %v1460
        %v2221 = vpack.c.b16 %v1465, %v1461
        %v2222 = vpack.c.b16 %v1466, %v1462
        %v2223 = vpack.c.b16 %v1471, %v1467
        %v2224 = vpack.c.b16 %v1472, %v1468
        %v2225 = vpack.c.b16 %v1473, %v1469
        %v2226 = vpack.c.b16 %v1474, %v1470
        %v2227 = vpack.c.b16 %v1479, %v1475
        %v2228 = vpack.c.b16 %v1480, %v1476
        %v2229 = vpack.c.b16 %v1481, %v1477
        %v2230 = vpack.c.b16 %v1482, %v1478
        %v2231 = vpack.c.b16 %v1487, %v1483
        %v2232 = vpack.c.b16 %v1488, %v1484
        %v2233 = vpack.c.b16 %v1489, %v1485
        %v2234 = vpack.c.b16 %v1490, %v1486
        %v2235 = vpack.c.b16 %v1495, %v1491
        %v2236 = vpack.c.b16 %v1496, %v1492
        %v2237 = vpack.c.b16 %v1497, %v1493
        %v2238 = vpack.c.b16 %v1498, %v1494
        %v2239 = vpack.c.b16 %v1503, %v1499
        %v2240 = vpack.c.b16 %v1504, %v1500
        %v2241 = vpack.c.b16 %v1505, %v1501
        %v2242 = vpack.c.b16 %v1506, %v1502
        %v2243 = vpack.c.b16 %v1511, %v1507
        %v2244 = vpack.c.b16 %v1512, %v1508
        %v2245 = vpack.c.b16 %v1513, %v1509
        %v2246 = vpack.c.b16 %v1514, %v1510
        %v2247 = vpack.c.b16 %v1519, %v1515
        %v2248 = vpack.c.b16 %v1520, %v1516
        %v2249 = vpack.c.b16 %v1521, %v1517
        %v2250 = vpack.c.b16 %v1522, %v1518
        %v2251 = vpack.c.b16 %v1527, %v1523
        %v2252 = vpack.c.b16 %v1528, %v1524
        %v2253 = vpack.c.b16 %v1529, %v1525
        %v2254 = vpack.c.b16 %v1530, %v1526
        %v2255 = vpack.c.b16 %v1535, %v1531
        %v2256 = vpack.c.b16 %v1536, %v1532
        %v2257 = vpack.c.b16 %v1537, %v1533
        %v2258 = vpack.c.b16 %v1538, %v1534
        %v2259 = vpack.c.b16 %v1543, %v1539
        %v2260 = vpack.c.b16 %v1544, %v1540
        %v2261 = vpack.c.b16 %v1545, %v1541
        %v2262 = vpack.c.b16 %v1546, %v1542
        %v2263 = vpack.c.b16 %v1551, %v1547
        %v2264 = vpack.c.b16 %v1552, %v1548
        %v2265 = vpack.c.b16 %v1553, %v1549
        %v2266 = vpack.c.b16 %v1554, %v1550
        %v2267 = vpack.c.b16 %v1559, %v1555
        %v2268 = vpack.c.b16 %v1560, %v1556
        %v2269 = vpack.c.b16 %v1561, %v1557
        %v2270 = vpack.c.b16 %v1562, %v1558
        %v2271 = vpack.c.b16 %v1567, %v1563
        %v2272 = vpack.c.b16 %v1568, %v1564
        %v2273 = vpack.c.b16 %v1569, %v1565
        %v2274 = vpack.c.b16 %v1570, %v1566
        %v2275 = vpack.c.b16 %v1575, %v1571
        %v2276 = vpack.c.b16 %v1576, %v1572
        %v2277 = vpack.c.b16 %v1577, %v1573
        %v2278 = vpack.c.b16 %v1578, %v1574
        %v2279 = vpack.c.b16 %v1583, %v1579
        %v2280 = vpack.c.b16 %v1584, %v1580
        %v2281 = vpack.c.b16 %v1585, %v1581
        %v2282 = vpack.c.b16 %v1586, %v1582
        %v2283 = vpack.c.b16 %v1591, %v1587
        %v2284 = vpack.c.b16 %v1592, %v1588
        %v2285 = vpack.c.b16 %v1593, %v1589
        %v2286 = vpack.c.b16 %v1594, %v1590
        %v2287 = vpack.c.b16 %v1599, %v1595
        %v2288 = vpack.c.b16 %v1600, %v1596
        %v2289 = vpack.c.b16 %v1601, %v1597
        %v2290 = vpack.c.b16 %v1602, %v1598
        %v2291 = vpack.c.b16 %v1607, %v1603
        %v2292 = vpack.c.b16 %v1608, %v1604
        %v2293 = vpack.c.b16 %v1609, %v1605
        %v2294 = vpack.c.b16 %v1610, %v1606
        %v2295 = vpack.c.b16 %v1615, %v1611
        %v2296 = vpack.c.b16 %v1616, %v1612
        %v2297 = vpack.c.b16 %v1617, %v1613
        %v2298 = vpack.c.b16 %v1618, %v1614
        %v2299 = vpack.c.b16 %v1623, %v1619
        %v2300 = vpack.c.b16 %v1624, %v1620
        %v2301 = vpack.c.b16 %v1625, %v1621
        %v2302 = vpack.c.b16 %v1626, %v1622
        %v2303 = vpack.c.b16 %v1631, %v1627
        %v2304 = vpack.c.b16 %v1632, %v1628
        %v2305 = vpack.c.b16 %v1633, %v1629
        %v2306 = vpack.c.b16 %v1634, %v1630
        %v2307 = vpack.c.b16 %v1639, %v1635
        %v2308 = vpack.c.b16 %v1640, %v1636
        %v2309 = vpack.c.b16 %v1641, %v1637
        %v2310 = vpack.c.b16 %v1642, %v1638
        %v2311 = vpack.c.b16 %v1647, %v1643
        %v2312 = vpack.c.b16 %v1648, %v1644
        %v2313 = vpack.c.b16 %v1649, %v1645
        %v2314 = vpack.c.b16 %v1650, %v1646
        %v2315 = vpack.c.b16 %v1655, %v1651
        %v2316 = vpack.c.b16 %v1656, %v1652
        %v2317 = vpack.c.b16 %v1657, %v1653
        %v2318 = vpack.c.b16 %v1658, %v1654
        %v2319 = vpack.c.b16 %v1663, %v1659
        %v2320 = vpack.c.b16 %v1664, %v1660
        %v2321 = vpack.c.b16 %v1665, %v1661
        %v2322 = vpack.c.b16 %v1666, %v1662
        %v2323 = vpack.c.b16 %v1671, %v1667
        %v2324 = vpack.c.b16 %v1672, %v1668
        %v2325 = vpack.c.b16 %v1673, %v1669
        %v2326 = vpack.c.b16 %v1674, %v1670
        %v2327 = vpack.c.b16 %v1679, %v1675
        %v2328 = vpack.c.b16 %v1680, %v1676
        %v2329 = vpack.c.b16 %v1681, %v1677
        %v2330 = vpack.c.b16 %v1682, %v1678
        %v2331 = vpack.c.b16 %v1687, %v1683
        %v2332 = vpack.c.b16 %v1688, %v1684
        %v2333 = vpack.c.b16 %v1689, %v1685
        %v2334 = vpack.c.b16 %v1690, %v1686
        %v2335 = vpack.c.b16 %v1695, %v1691
        %v2336 = vpack.c.b16 %v1696, %v1692
        %v2337 = vpack.c.b16 %v1697, %v1693
        %v2338 = vpack.c.b16 %v1698, %v1694
        %v2339 = vpack.c.b16 %v1703, %v1699
        %v2340 = vpack.c.b16 %v1704, %v1700
        %v2341 = vpack.c.b16 %v1705, %v1701
        %v2342 = vpack.c.b16 %v1706, %v1702
        %v2343 = vpack.c.b16 %v1711, %v1707
        %v2344 = vpack.c.b16 %v1712, %v1708
        %v2345 = vpack.c.b16 %v1713, %v1709
        %v2346 = vpack.c.b16 %v1714, %v1710
        %v2347 = vpack.c.b16 %v1719, %v1715
        %v2348 = vpack.c.b16 %v1720, %v1716
        %v2349 = vpack.c.b16 %v1721, %v1717
        %v2350 = vpack.c.b16 %v1722, %v1718
        %v2351 = vpack.c.b16 %v1727, %v1723
        %v2352 = vpack.c.b16 %v1728, %v1724
        %v2353 = vpack.c.b16 %v1729, %v1725
        %v2354 = vpack.c.b16 %v1730, %v1726
        %v2355 = vpack.c.b16 %v1735, %v1731
        %v2356 = vpack.c.b16 %v1736, %v1732
        %v2357 = vpack.c.b16 %v1737, %v1733
        %v2358 = vpack.c.b16 %v1738, %v1734
        %v2359 = vpack.c.b16 %v1743, %v1739
        %v2360 = vpack.c.b16 %v1744, %v1740
        %v2361 = vpack.c.b16 %v1745, %v1741
        %v2362 = vpack.c.b16 %v1746, %v1742
        %v2363 = vpack.c.b16 %v1751, %v1747
        %v2364 = vpack.c.b16 %v1752, %v1748
        %v2365 = vpack.c.b16 %v1753, %v1749
        %v2366 = vpack.c.b16 %v1754, %v1750
        %v2367 = vpack.c.b16 %v1759, %v1755
        %v2368 = vpack.c.b16 %v1760, %v1756
        %v2369 = vpack.c.b16 %v1761, %v1757
        %v2370 = vpack.c.b16 %v1762, %v1758
        %v2371 = vpack.c.b16 %v1767, %v1763
        %v2372 = vpack.c.b16 %v1768, %v1764
        %v2373 = vpack.c.b16 %v1769, %v1765
        %v2374 = vpack.c.b16 %v1770, %v1766
        %v2375 = vpack.c.b16 %v1775, %v1771
        %v2376 = vpack.c.b16 %v1776, %v1772
        %v2377 = vpack.c.b16 %v1777, %v1773
        %v2378 = vpack.c.b16 %v1778, %v1774
        %v2379 = vpack.c.b16 %v1783, %v1779
        %v2380 = vpack.c.b16 %v1784, %v1780
        %v2381 = vpack.c.b16 %v1785, %v1781
        %v2382 = vpack.c.b16 %v1786, %v1782
        %v2383 = vpack.c.b16 %v1791, %v1787
        %v2384 = vpack.c.b16 %v1792, %v1788
        %v2385 = vpack.c.b16 %v1793, %v1789
        %v2386 = vpack.c.b16 %v1794, %v1790
        %v2387 = vpack.c.b16 %v1799, %v1795
        %v2388 = vpack.c.b16 %v1800, %v1796
        %v2389 = vpack.c.b16 %v1801, %v1797
        %v2390 = vpack.c.b16 %v1802, %v1798
        %v2391 = vpack.c.b16 %v1807, %v1803
        %v2392 = vpack.c.b16 %v1808, %v1804
        %v2393 = vpack.c.b16 %v1809, %v1805
        %v2394 = vpack.c.b16 %v1810, %v1806
        %v2395 = vpack.c.b16 %v1815, %v1811
        %v2396 = vpack.c.b16 %v1816, %v1812
        %v2397 = vpack.c.b16 %v1817, %v1813
        %v2398 = vpack.c.b16 %v1818, %v1814
        %v2399 = vpack.c.b16 %v1823, %v1819
        %v2400 = vpack.c.b16 %v1824, %v1820
        %v2401 = vpack.c.b16 %v1825, %v1821
        %v2402 = vpack.c.b16 %v1826, %v1822
        %v2403 = vpack.c.b16 %v1831, %v1827
        %v2404 = vpack.c.b16 %v1832, %v1828
        %v2405 = vpack.c.b16 %v1833, %v1829
        %v2406 = vpack.c.b16 %v1834, %v1830
        %v2407 = vpack.c.b16 %v1839, %v1835
        %v2408 = vpack.c.b16 %v1840, %v1836
        %v2409 = vpack.c.b16 %v1841, %v1837
        %v2410 = vpack.c.b16 %v1842, %v1838
        %v2411 = vpack.c.b16 %v1847, %v1843
        %v2412 = vpack.c.b16 %v1848, %v1844
        %v2413 = vpack.c.b16 %v1849, %v1845
        %v2414 = vpack.c.b16 %v1850, %v1846
        %v2415 = vpack.c.b16 %v1855, %v1851
        %v2416 = vpack.c.b16 %v1856, %v1852
        %v2417 = vpack.c.b16 %v1857, %v1853
        %v2418 = vpack.c.b16 %v1858, %v1854
        %v2419 = vpack.c.b16 %v1863, %v1859
        %v2420 = vpack.c.b16 %v1864, %v1860
        %v2421 = vpack.c.b16 %v1865, %v1861
        %v2422 = vpack.c.b16 %v1866, %v1862
        %v2423 = vpack.c.b16 %v1871, %v1867
        %v2424 = vpack.c.b16 %v1872, %v1868
        %v2425 = vpack.c.b16 %v1873, %v1869
        %v2426 = vpack.c.b16 %v1874, %v1870
        %v2427 = vpack.c.b16 %v1879, %v1875
        %v2428 = vpack.c.b16 %v1880, %v1876
        %v2429 = vpack.c.b16 %v1881, %v1877
        %v2430 = vpack.c.b16 %v1882, %v1878
        %v2431 = vpack.c.b16 %v1887, %v1883
        %v2432 = vpack.c.b16 %v1888, %v1884
        %v2433 = vpack.c.b16 %v1889, %v1885
        %v2434 = vpack.c.b16 %v1890, %v1886
        %v2435 = vpack.c.b16 %v1895, %v1891
        %v2436 = vpack.c.b16 %v1896, %v1892
        %v2437 = vpack.c.b16 %v1897, %v1893
        %v2438 = vpack.c.b16 %v1898, %v1894
        %v2439 = vpack.c.b16 %v1903, %v1899
        %v2440 = vpack.c.b16 %v1904, %v1900
        %v2441 = vpack.c.b16 %v1905, %v1901
        %v2442 = vpack.c.b16 %v1906, %v1902
        %v2443 = vpack.c.b16 %v1911, %v1907
        %v2444 = vpack.c.b16 %v1912, %v1908
        %v2445 = vpack.c.b16 %v1913, %v1909
        %v2446 = vpack.c.b16 %v1914, %v1910
        %v2447 = vpack.c.b16 %v1919, %v1915
        %v2448 = vpack.c.b16 %v1920, %v1916
        %v2449 = vpack.c.b16 %v1921, %v1917
        %v2450 = vpack.c.b16 %v1922, %v1918
        %v2451 = vpack.c.b16 %v1927, %v1923
        %v2452 = vpack.c.b16 %v1928, %v1924
        %v2453 = vpack.c.b16 %v1929, %v1925
        %v2454 = vpack.c.b16 %v1930, %v1926
        %v2455 = vpack.c.b16 %v1935, %v1931
        %v2456 = vpack.c.b16 %v1936, %v1932
        %v2457 = vpack.c.b16 %v1937, %v1933
        %v2458 = vpack.c.b16 %v1938, %v1934
        %v2459 = vpack.c.b16 %v1943, %v1939
        %v2460 = vpack.c.b16 %v1944, %v1940
        %v2461 = vpack.c.b16 %v1945, %v1941
        %v2462 = vpack.c.b16 %v1946, %v1942
        %v2463 = vpack.c.b16 %v1951, %v1947
        %v2464 = vpack.c.b16 %v1952, %v1948
        %v2465 = vpack.c.b16 %v1953, %v1949
        %v2466 = vpack.c.b16 %v1954, %v1950
        %v2467 = vpack.c.b16 %v1959, %v1955
        %v2468 = vpack.c.b16 %v1960, %v1956
        %v2469 = vpack.c.b16 %v1961, %v1957
        %v2470 = vpack.c.b16 %v1962, %v1958
        %v2471 = vpack.c.b16 %v1967, %v1963
        %v2472 = vpack.c.b16 %v1968, %v1964
        %v2473 = vpack.c.b16 %v1969, %v1965
        %v2474 = vpack.c.b16 %v1970, %v1966
        %v2475 = vpack.c.b16 %v1975, %v1971
        %v2476 = vpack.c.b16 %v1976, %v1972
        %v2477 = vpack.c.b16 %v1977, %v1973
        %v2478 = vpack.c.b16 %v1978, %v1974
        %v2479 = vpack.c.b16 %v1983, %v1979
        %v2480 = vpack.c.b16 %v1984, %v1980
        %v2481 = vpack.c.b16 %v1985, %v1981
        %v2482 = vpack.c.b16 %v1986, %v1982
        %v2483 = vpack.c.b16 %v1991, %v1987
        %v2484 = vpack.c.b16 %v1992, %v1988
        %v2485 = vpack.c.b16 %v1993, %v1989
        %v2486 = vpack.c.b16 %v1994, %v1990
        %v2487 = vpack.c.b16 %v1999, %v1995
        %v2488 = vpack.c.b16 %v2000, %v1996
        %v2489 = vpack.c.b16 %v2001, %v1997
        %v2490 = vpack.c.b16 %v2002, %v1998
        %v2491 = vpack.c.b16 %v2007, %v2003
        %v2492 = vpack.c.b16 %v2008, %v2004
        %v2493 = vpack.c.b16 %v2009, %v2005
        %v2494 = vpack.c.b16 %v2010, %v2006
        %v2495 = vpack.c.b16 %v2015, %v2011
        %v2496 = vpack.c.b16 %v2016, %v2012
        %v2497 = vpack.c.b16 %v2017, %v2013
        %v2498 = vpack.c.b16 %v2018, %v2014
        %v2499 = vpack.c.b16 %v2023, %v2019
        %v2500 = vpack.c.b16 %v2024, %v2020
        %v2501 = vpack.c.b16 %v2025, %v2021
        %v2502 = vpack.c.b16 %v2026, %v2022
        %v2503 = vpack.c.b16 %v2031, %v2027
        %v2504 = vpack.c.b16 %v2032, %v2028
        %v2505 = vpack.c.b16 %v2033, %v2029
        %v2506 = vpack.c.b16 %v2034, %v2030
        %v2507 = vpack.c.b16 %v2039, %v2035
        %v2508 = vpack.c.b16 %v2040, %v2036
        %v2509 = vpack.c.b16 %v2041, %v2037
        %v2510 = vpack.c.b16 %v2042, %v2038
        %v2511 = vpack.c.b16 %v2047, %v2043
        %v2512 = vpack.c.b16 %v2048, %v2044
        %v2513 = vpack.c.b16 %v2049, %v2045
        %v2514 = vpack.c.b16 %v2050, %v2046
        %v2515 = vpack.c.b16 %v2055, %v2051
        %v2516 = vpack.c.b16 %v2056, %v2052
        %v2517 = vpack.c.b16 %v2057, %v2053
        %v2518 = vpack.c.b16 %v2058, %v2054
        %v2519 = vpack.c.b16 %v2063, %v2059
        %v2520 = vpack.c.b16 %v2064, %v2060
        %v2521 = vpack.c.b16 %v2065, %v2061
        %v2522 = vpack.c.b16 %v2066, %v2062
        %v2523 = vpack.c.b16 %v2071, %v2067
        %v2524 = vpack.c.b16 %v2072, %v2068
        %v2525 = vpack.c.b16 %v2073, %v2069
        %v2526 = vpack.c.b16 %v2074, %v2070
        %v2527 = vpack.c.b16 %v2079, %v2075
        %v2528 = vpack.c.b16 %v2080, %v2076
        %v2529 = vpack.c.b16 %v2081, %v2077
        %v2530 = vpack.c.b16 %v2082, %v2078
        %2979 = vmatpush.bf16.msra.mxu0 %v2111
        %2980 = vmatpush.bf16.msra.mxu0 %v2107
        %2981 = vmatpush.bf16.msra.mxu0 %v2103
        %2982 = vmatpush.bf16.msra.mxu0 %v2099
        %2983 = vmatpush.bf16.msra.mxu0 %v2095
        %2984 = vmatpush.bf16.msra.mxu0 %v2091
        %2985 = vmatpush.bf16.msra.mxu0 %v2087
        %2986 = vmatpush.bf16.msra.mxu0 %v2083
        %2987 = vmatmul.bf16.gmra.mxu0 %v277
        %v2988 = vpop.f32.mrf.mxu0
        %v2989 = vadd.f32 0.0, %v2988
        %v2990 = vpop.f32.mrf.mxu0
        %2991 = vdwg.mxu0
        %2992 = vmatpush.bf16.msra.mxu0 %v2143
        %2993 = vmatpush.bf16.msra.mxu0 %v2139
        %2994 = vmatpush.bf16.msra.mxu0 %v2135
        %2995 = vmatpush.bf16.msra.mxu0 %v2131
        %2996 = vmatpush.bf16.msra.mxu0 %v2127
        %2997 = vmatpush.bf16.msra.mxu0 %v2123
        %2998 = vmatpush.bf16.msra.mxu0 %v2119
        %2999 = vmatpush.bf16.msra.mxu0 %v2115
        %3000 = vmatmul.bf16.gmra.mxu0 %v278
        %v3001 = vpop.f32.mrf.mxu0
        %v3002 = vadd.f32 %v2989, %v3001
        %v3003 = vpop.f32.mrf.mxu0
        %3004 = vdwg.mxu0
        %3005 = vmatpush.bf16.msra.mxu0 %v2175
        %3006 = vmatpush.bf16.msra.mxu0 %v2171
        %3007 = vmatpush.bf16.msra.mxu0 %v2167
        %3008 = vmatpush.bf16.msra.mxu0 %v2163
        %3009 = vmatpush.bf16.msra.mxu0 %v2159
        %3010 = vmatpush.bf16.msra.mxu0 %v2155
        %3011 = vmatpush.bf16.msra.mxu0 %v2151
        %3012 = vmatpush.bf16.msra.mxu0 %v2147
        %3013 = vmatmul.bf16.gmra.mxu0 %v279
        %v3014 = vpop.f32.mrf.mxu0
        %v3015 = vadd.f32 %v3002, %v3014
        %v3016 = vpop.f32.mrf.mxu0
        %3017 = vdwg.mxu0
        %3018 = vmatpush.bf16.msra.mxu0 %v2207
        %3019 = vmatpush.bf16.msra.mxu0 %v2203
        %3020 = vmatpush.bf16.msra.mxu0 %v2199
        %3021 = vmatpush.bf16.msra.mxu0 %v2195
        %3022 = vmatpush.bf16.msra.mxu0 %v2191
        %3023 = vmatpush.bf16.msra.mxu0 %v2187
        %3024 = vmatpush.bf16.msra.mxu0 %v2183
        %3025 = vmatpush.bf16.msra.mxu0 %v2179
        %3026 = vmatmul.bf16.gmra.mxu0 %v280
        %v3027 = vpop.f32.mrf.mxu0
        %v3028 = vadd.f32 %v3015, %v3027
        %v3029 = vpop.f32.mrf.mxu0
        %3030 = vdwg.mxu0
        %3031 = vmatpush.bf16.msra.mxu0 %v2239
        %3032 = vmatpush.bf16.msra.mxu0 %v2235
        %3033 = vmatpush.bf16.msra.mxu0 %v2231
        %3034 = vmatpush.bf16.msra.mxu0 %v2227
        %3035 = vmatpush.bf16.msra.mxu0 %v2223
        %3036 = vmatpush.bf16.msra.mxu0 %v2219
        %3037 = vmatpush.bf16.msra.mxu0 %v2215
        %3038 = vmatpush.bf16.msra.mxu0 %v2211
        %3039 = vmatmul.bf16.gmra.mxu0 %v281
        %v3040 = vpop.f32.mrf.mxu0
        %v3041 = vadd.f32 %v3028, %v3040
        %v3042 = vpop.f32.mrf.mxu0
        %3043 = vdwg.mxu0
        %3044 = vmatpush.bf16.msra.mxu0 %v2271
        %3045 = vmatpush.bf16.msra.mxu0 %v2267
        %3046 = vmatpush.bf16.msra.mxu0 %v2263
        %3047 = vmatpush.bf16.msra.mxu0 %v2259
        %3048 = vmatpush.bf16.msra.mxu0 %v2255
        %3049 = vmatpush.bf16.msra.mxu0 %v2251
        %3050 = vmatpush.bf16.msra.mxu0 %v2247
        %3051 = vmatpush.bf16.msra.mxu0 %v2243
        %3052 = vmatmul.bf16.gmra.mxu0 %v282
        %v3053 = vpop.f32.mrf.mxu0
        %v3054 = vadd.f32 %v3041, %v3053
        %v3055 = vpop.f32.mrf.mxu0
        %3056 = vdwg.mxu0
        %3057 = vmatpush.bf16.msra.mxu0 %v2303
        %3058 = vmatpush.bf16.msra.mxu0 %v2299
        %3059 = vmatpush.bf16.msra.mxu0 %v2295
        %3060 = vmatpush.bf16.msra.mxu0 %v2291
        %3061 = vmatpush.bf16.msra.mxu0 %v2287
        %3062 = vmatpush.bf16.msra.mxu0 %v2283
        %3063 = vmatpush.bf16.msra.mxu0 %v2279
        %3064 = vmatpush.bf16.msra.mxu0 %v2275
        %3065 = vmatmul.bf16.gmra.mxu0 %v283
        %v3066 = vpop.f32.mrf.mxu0
        %v3067 = vadd.f32 %v3054, %v3066
        %v3068 = vpop.f32.mrf.mxu0
        %3069 = vdwg.mxu0
        %3070 = vmatpush.bf16.msra.mxu0 %v2335
        %3071 = vmatpush.bf16.msra.mxu0 %v2331
        %3072 = vmatpush.bf16.msra.mxu0 %v2327
        %3073 = vmatpush.bf16.msra.mxu0 %v2323
        %3074 = vmatpush.bf16.msra.mxu0 %v2319
        %3075 = vmatpush.bf16.msra.mxu0 %v2315
        %3076 = vmatpush.bf16.msra.mxu0 %v2311
        %3077 = vmatpush.bf16.msra.mxu0 %v2307
        %3078 = vmatmul.bf16.gmra.mxu0 %v284
        %v3079 = vpop.f32.mrf.mxu0
        %v3080 = vadd.f32 %v3067, %v3079
        %v3081 = vpop.f32.mrf.mxu0
        %3082 = vdwg.mxu0
        %3083 = vmatpush.bf16.msra.mxu0 %v2367
        %3084 = vmatpush.bf16.msra.mxu0 %v2363
        %3085 = vmatpush.bf16.msra.mxu0 %v2359
        %3086 = vmatpush.bf16.msra.mxu0 %v2355
        %3087 = vmatpush.bf16.msra.mxu0 %v2351
        %3088 = vmatpush.bf16.msra.mxu0 %v2347
        %3089 = vmatpush.bf16.msra.mxu0 %v2343
        %3090 = vmatpush.bf16.msra.mxu0 %v2339
        %3091 = vmatmul.bf16.gmra.mxu0 %v285
        %v3092 = vpop.f32.mrf.mxu0
        %v3093 = vadd.f32 %v3080, %v3092
        %v3094 = vpop.f32.mrf.mxu0
        %3095 = vdwg.mxu0
        %3096 = vmatpush.bf16.msra.mxu0 %v2399
        %3097 = vmatpush.bf16.msra.mxu0 %v2395
        %3098 = vmatpush.bf16.msra.mxu0 %v2391
        %3099 = vmatpush.bf16.msra.mxu0 %v2387
        %3100 = vmatpush.bf16.msra.mxu0 %v2383
        %3101 = vmatpush.bf16.msra.mxu0 %v2379
        %3102 = vmatpush.bf16.msra.mxu0 %v2375
        %3103 = vmatpush.bf16.msra.mxu0 %v2371
        %3104 = vmatmul.bf16.gmra.mxu0 %v286
        %v3105 = vpop.f32.mrf.mxu0
        %v3106 = vadd.f32 %v3093, %v3105
        %v3107 = vpop.f32.mrf.mxu0
        %3108 = vdwg.mxu0
        %3109 = vmatpush.bf16.msra.mxu0 %v2431
        %3110 = vmatpush.bf16.msra.mxu0 %v2427
        %3111 = vmatpush.bf16.msra.mxu0 %v2423
        %3112 = vmatpush.bf16.msra.mxu0 %v2419
        %3113 = vmatpush.bf16.msra.mxu0 %v2415
        %3114 = vmatpush.bf16.msra.mxu0 %v2411
        %3115 = vmatpush.bf16.msra.mxu0 %v2407
        %3116 = vmatpush.bf16.msra.mxu0 %v2403
        %3117 = vmatmul.bf16.gmra.mxu0 %v287
        %v3118 = vpop.f32.mrf.mxu0
        %v3119 = vadd.f32 %v3106, %v3118
        %v3120 = vpop.f32.mrf.mxu0
        %3121 = vdwg.mxu0
        %3122 = vmatpush.bf16.msra.mxu0 %v2463
        %3123 = vmatpush.bf16.msra.mxu0 %v2459
        %3124 = vmatpush.bf16.msra.mxu0 %v2455
        %3125 = vmatpush.bf16.msra.mxu0 %v2451
        %3126 = vmatpush.bf16.msra.mxu0 %v2447
        %3127 = vmatpush.bf16.msra.mxu0 %v2443
        %3128 = vmatpush.bf16.msra.mxu0 %v2439
        %3129 = vmatpush.bf16.msra.mxu0 %v2435
        %3130 = vmatmul.bf16.gmra.mxu0 %v288
        %v3131 = vpop.f32.mrf.mxu0
        %v3132 = vadd.f32 %v3119, %v3131
        %v3133 = vpop.f32.mrf.mxu0
        %3134 = vdwg.mxu0
        %3135 = vmatpush.bf16.msra.mxu0 %v2495
        %3136 = vmatpush.bf16.msra.mxu0 %v2491
        %3137 = vmatpush.bf16.msra.mxu0 %v2487
        %3138 = vmatpush.bf16.msra.mxu0 %v2483
        %3139 = vmatpush.bf16.msra.mxu0 %v2479
        %3140 = vmatpush.bf16.msra.mxu0 %v2475
        %3141 = vmatpush.bf16.msra.mxu0 %v2471
        %3142 = vmatpush.bf16.msra.mxu0 %v2467
        %3143 = vmatmul.bf16.gmra.mxu0 %v289
        %v3144 = vpop.f32.mrf.mxu0
        %v3145 = vadd.f32 %v3132, %v3144
        %v3146 = vpop.f32.mrf.mxu0
        %3147 = vdwg.mxu0
        %3148 = vmatpush.bf16.msra.mxu0 %v2527
        %3149 = vmatpush.bf16.msra.mxu0 %v2523
        %3150 = vmatpush.bf16.msra.mxu0 %v2519
        %3151 = vmatpush.bf16.msra.mxu0 %v2515
        %3152 = vmatpush.bf16.msra.mxu0 %v2511
        %3153 = vmatpush.bf16.msra.mxu0 %v2507
        %3154 = vmatpush.bf16.msra.mxu0 %v2503
        %3155 = vmatpush.bf16.msra.mxu0 %v2499
        %3156 = vmatmul.bf16.gmra.mxu0 %v290
        %v3157 = vpop.f32.mrf.mxu0
        %v3158 = vadd.f32 %v3145, %v3157
        %v3159 = vpop.f32.mrf.mxu0
        %3160 = vdwg.mxu0
        %3161 = vmatpush.bf16.msra.mxu0 %v2112
        %3162 = vmatpush.bf16.msra.mxu0 %v2108
        %3163 = vmatpush.bf16.msra.mxu0 %v2104
        %3164 = vmatpush.bf16.msra.mxu0 %v2100
        %3165 = vmatpush.bf16.msra.mxu0 %v2096
        %3166 = vmatpush.bf16.msra.mxu0 %v2092
        %3167 = vmatpush.bf16.msra.mxu0 %v2088
        %3168 = vmatpush.bf16.msra.mxu0 %v2084
        %3169 = vmatmul.bf16.gmra.mxu0 %v277
        %v3170 = vpop.f32.mrf.mxu0
        %v3171 = vadd.f32 0.0, %v3170
        %v3172 = vpop.f32.mrf.mxu0
        %3173 = vdwg.mxu0
        %3174 = vmatpush.bf16.msra.mxu0 %v2144
        %3175 = vmatpush.bf16.msra.mxu0 %v2140
        %3176 = vmatpush.bf16.msra.mxu0 %v2136
        %3177 = vmatpush.bf16.msra.mxu0 %v2132
        %3178 = vmatpush.bf16.msra.mxu0 %v2128
        %3179 = vmatpush.bf16.msra.mxu0 %v2124
        %3180 = vmatpush.bf16.msra.mxu0 %v2120
        %3181 = vmatpush.bf16.msra.mxu0 %v2116
        %3182 = vmatmul.bf16.gmra.mxu0 %v278
        %v3183 = vpop.f32.mrf.mxu0
        %v3184 = vadd.f32 %v3171, %v3183
        %v3185 = vpop.f32.mrf.mxu0
        %3186 = vdwg.mxu0
        %3187 = vmatpush.bf16.msra.mxu0 %v2176
        %3188 = vmatpush.bf16.msra.mxu0 %v2172
        %3189 = vmatpush.bf16.msra.mxu0 %v2168
        %3190 = vmatpush.bf16.msra.mxu0 %v2164
        %3191 = vmatpush.bf16.msra.mxu0 %v2160
        %3192 = vmatpush.bf16.msra.mxu0 %v2156
        %3193 = vmatpush.bf16.msra.mxu0 %v2152
        %3194 = vmatpush.bf16.msra.mxu0 %v2148
        %3195 = vmatmul.bf16.gmra.mxu0 %v279
        %v3196 = vpop.f32.mrf.mxu0
        %v3197 = vadd.f32 %v3184, %v3196
        %v3198 = vpop.f32.mrf.mxu0
        %3199 = vdwg.mxu0
        %3200 = vmatpush.bf16.msra.mxu0 %v2208
        %3201 = vmatpush.bf16.msra.mxu0 %v2204
        %3202 = vmatpush.bf16.msra.mxu0 %v2200
        %3203 = vmatpush.bf16.msra.mxu0 %v2196
        %3204 = vmatpush.bf16.msra.mxu0 %v2192
        %3205 = vmatpush.bf16.msra.mxu0 %v2188
        %3206 = vmatpush.bf16.msra.mxu0 %v2184
        %3207 = vmatpush.bf16.msra.mxu0 %v2180
        %3208 = vmatmul.bf16.gmra.mxu0 %v280
        %v3209 = vpop.f32.mrf.mxu0
        %v3210 = vadd.f32 %v3197, %v3209
        %v3211 = vpop.f32.mrf.mxu0
        %3212 = vdwg.mxu0
        %3213 = vmatpush.bf16.msra.mxu0 %v2240
        %3214 = vmatpush.bf16.msra.mxu0 %v2236
        %3215 = vmatpush.bf16.msra.mxu0 %v2232
        %3216 = vmatpush.bf16.msra.mxu0 %v2228
        %3217 = vmatpush.bf16.msra.mxu0 %v2224
        %3218 = vmatpush.bf16.msra.mxu0 %v2220
        %3219 = vmatpush.bf16.msra.mxu0 %v2216
        %3220 = vmatpush.bf16.msra.mxu0 %v2212
        %3221 = vmatmul.bf16.gmra.mxu0 %v281
        %v3222 = vpop.f32.mrf.mxu0
        %v3223 = vadd.f32 %v3210, %v3222
        %v3224 = vpop.f32.mrf.mxu0
        %3225 = vdwg.mxu0
        %3226 = vmatpush.bf16.msra.mxu0 %v2272
        %3227 = vmatpush.bf16.msra.mxu0 %v2268
        %3228 = vmatpush.bf16.msra.mxu0 %v2264
        %3229 = vmatpush.bf16.msra.mxu0 %v2260
        %3230 = vmatpush.bf16.msra.mxu0 %v2256
        %3231 = vmatpush.bf16.msra.mxu0 %v2252
        %3232 = vmatpush.bf16.msra.mxu0 %v2248
        %3233 = vmatpush.bf16.msra.mxu0 %v2244
        %3234 = vmatmul.bf16.gmra.mxu0 %v282
        %v3235 = vpop.f32.mrf.mxu0
        %v3236 = vadd.f32 %v3223, %v3235
        %v3237 = vpop.f32.mrf.mxu0
        %3238 = vdwg.mxu0
        %3239 = vmatpush.bf16.msra.mxu0 %v2304
        %3240 = vmatpush.bf16.msra.mxu0 %v2300
        %3241 = vmatpush.bf16.msra.mxu0 %v2296
        %3242 = vmatpush.bf16.msra.mxu0 %v2292
        %3243 = vmatpush.bf16.msra.mxu0 %v2288
        %3244 = vmatpush.bf16.msra.mxu0 %v2284
        %3245 = vmatpush.bf16.msra.mxu0 %v2280
        %3246 = vmatpush.bf16.msra.mxu0 %v2276
        %3247 = vmatmul.bf16.gmra.mxu0 %v283
        %v3248 = vpop.f32.mrf.mxu0
        %v3249 = vadd.f32 %v3236, %v3248
        %v3250 = vpop.f32.mrf.mxu0
        %3251 = vdwg.mxu0
        %3252 = vmatpush.bf16.msra.mxu0 %v2336
        %3253 = vmatpush.bf16.msra.mxu0 %v2332
        %3254 = vmatpush.bf16.msra.mxu0 %v2328
        %3255 = vmatpush.bf16.msra.mxu0 %v2324
        %3256 = vmatpush.bf16.msra.mxu0 %v2320
        %3257 = vmatpush.bf16.msra.mxu0 %v2316
        %3258 = vmatpush.bf16.msra.mxu0 %v2312
        %3259 = vmatpush.bf16.msra.mxu0 %v2308
        %3260 = vmatmul.bf16.gmra.mxu0 %v284
        %v3261 = vpop.f32.mrf.mxu0
        %v3262 = vadd.f32 %v3249, %v3261
        %v3263 = vpop.f32.mrf.mxu0
        %3264 = vdwg.mxu0
        %3265 = vmatpush.bf16.msra.mxu0 %v2368
        %3266 = vmatpush.bf16.msra.mxu0 %v2364
        %3267 = vmatpush.bf16.msra.mxu0 %v2360
        %3268 = vmatpush.bf16.msra.mxu0 %v2356
        %3269 = vmatpush.bf16.msra.mxu0 %v2352
        %3270 = vmatpush.bf16.msra.mxu0 %v2348
        %3271 = vmatpush.bf16.msra.mxu0 %v2344
        %3272 = vmatpush.bf16.msra.mxu0 %v2340
        %3273 = vmatmul.bf16.gmra.mxu0 %v285
        %v3274 = vpop.f32.mrf.mxu0
        %v3275 = vadd.f32 %v3262, %v3274
        %v3276 = vpop.f32.mrf.mxu0
        %3277 = vdwg.mxu0
        %3278 = vmatpush.bf16.msra.mxu0 %v2400
        %3279 = vmatpush.bf16.msra.mxu0 %v2396
        %3280 = vmatpush.bf16.msra.mxu0 %v2392
        %3281 = vmatpush.bf16.msra.mxu0 %v2388
        %3282 = vmatpush.bf16.msra.mxu0 %v2384
        %3283 = vmatpush.bf16.msra.mxu0 %v2380
        %3284 = vmatpush.bf16.msra.mxu0 %v2376
        %3285 = vmatpush.bf16.msra.mxu0 %v2372
        %3286 = vmatmul.bf16.gmra.mxu0 %v286
        %v3287 = vpop.f32.mrf.mxu0
        %v3288 = vadd.f32 %v3275, %v3287
        %v3289 = vpop.f32.mrf.mxu0
        %3290 = vdwg.mxu0
        %3291 = vmatpush.bf16.msra.mxu0 %v2432
        %3292 = vmatpush.bf16.msra.mxu0 %v2428
        %3293 = vmatpush.bf16.msra.mxu0 %v2424
        %3294 = vmatpush.bf16.msra.mxu0 %v2420
        %3295 = vmatpush.bf16.msra.mxu0 %v2416
        %3296 = vmatpush.bf16.msra.mxu0 %v2412
        %3297 = vmatpush.bf16.msra.mxu0 %v2408
        %3298 = vmatpush.bf16.msra.mxu0 %v2404
        %3299 = vmatmul.bf16.gmra.mxu0 %v287
        %v3300 = vpop.f32.mrf.mxu0
        %v3301 = vadd.f32 %v3288, %v3300
        %v3302 = vpop.f32.mrf.mxu0
        %3303 = vdwg.mxu0
        %3304 = vmatpush.bf16.msra.mxu0 %v2464
        %3305 = vmatpush.bf16.msra.mxu0 %v2460
        %3306 = vmatpush.bf16.msra.mxu0 %v2456
        %3307 = vmatpush.bf16.msra.mxu0 %v2452
        %3308 = vmatpush.bf16.msra.mxu0 %v2448
        %3309 = vmatpush.bf16.msra.mxu0 %v2444
        %3310 = vmatpush.bf16.msra.mxu0 %v2440
        %3311 = vmatpush.bf16.msra.mxu0 %v2436
        %3312 = vmatmul.bf16.gmra.mxu0 %v288
        %v3313 = vpop.f32.mrf.mxu0
        %v3314 = vadd.f32 %v3301, %v3313
        %v3315 = vpop.f32.mrf.mxu0
        %3316 = vdwg.mxu0
        %3317 = vmatpush.bf16.msra.mxu0 %v2496
        %3318 = vmatpush.bf16.msra.mxu0 %v2492
        %3319 = vmatpush.bf16.msra.mxu0 %v2488
        %3320 = vmatpush.bf16.msra.mxu0 %v2484
        %3321 = vmatpush.bf16.msra.mxu0 %v2480
        %3322 = vmatpush.bf16.msra.mxu0 %v2476
        %3323 = vmatpush.bf16.msra.mxu0 %v2472
        %3324 = vmatpush.bf16.msra.mxu0 %v2468
        %3325 = vmatmul.bf16.gmra.mxu0 %v289
        %v3326 = vpop.f32.mrf.mxu0
        %v3327 = vadd.f32 %v3314, %v3326
        %v3328 = vpop.f32.mrf.mxu0
        %3329 = vdwg.mxu0
        %3330 = vmatpush.bf16.msra.mxu0 %v2528
        %3331 = vmatpush.bf16.msra.mxu0 %v2524
        %3332 = vmatpush.bf16.msra.mxu0 %v2520
        %3333 = vmatpush.bf16.msra.mxu0 %v2516
        %3334 = vmatpush.bf16.msra.mxu0 %v2512
        %3335 = vmatpush.bf16.msra.mxu0 %v2508
        %3336 = vmatpush.bf16.msra.mxu0 %v2504
        %3337 = vmatpush.bf16.msra.mxu0 %v2500
        %3338 = vmatmul.bf16.gmra.mxu0 %v290
        %v3339 = vpop.f32.mrf.mxu0
        %v3340 = vadd.f32 %v3327, %v3339
        %v3341 = vpop.f32.mrf.mxu0
        %3342 = vdwg.mxu0
        %3343 = vmatpush.bf16.msra.mxu0 %v2113
        %3344 = vmatpush.bf16.msra.mxu0 %v2109
        %3345 = vmatpush.bf16.msra.mxu0 %v2105
        %3346 = vmatpush.bf16.msra.mxu0 %v2101
        %3347 = vmatpush.bf16.msra.mxu0 %v2097
        %3348 = vmatpush.bf16.msra.mxu0 %v2093
        %3349 = vmatpush.bf16.msra.mxu0 %v2089
        %3350 = vmatpush.bf16.msra.mxu0 %v2085
        %3351 = vmatmul.bf16.gmra.mxu0 %v277
        %v3352 = vpop.f32.mrf.mxu0
        %v3353 = vadd.f32 0.0, %v3352
        %v3354 = vpop.f32.mrf.mxu0
        %3355 = vdwg.mxu0
        %3356 = vmatpush.bf16.msra.mxu0 %v2145
        %3357 = vmatpush.bf16.msra.mxu0 %v2141
        %3358 = vmatpush.bf16.msra.mxu0 %v2137
        %3359 = vmatpush.bf16.msra.mxu0 %v2133
        %3360 = vmatpush.bf16.msra.mxu0 %v2129
        %3361 = vmatpush.bf16.msra.mxu0 %v2125
        %3362 = vmatpush.bf16.msra.mxu0 %v2121
        %3363 = vmatpush.bf16.msra.mxu0 %v2117
        %3364 = vmatmul.bf16.gmra.mxu0 %v278
        %v3365 = vpop.f32.mrf.mxu0
        %v3366 = vadd.f32 %v3353, %v3365
        %v3367 = vpop.f32.mrf.mxu0
        %3368 = vdwg.mxu0
        %3369 = vmatpush.bf16.msra.mxu0 %v2177
        %3370 = vmatpush.bf16.msra.mxu0 %v2173
        %3371 = vmatpush.bf16.msra.mxu0 %v2169
        %3372 = vmatpush.bf16.msra.mxu0 %v2165
        %3373 = vmatpush.bf16.msra.mxu0 %v2161
        %3374 = vmatpush.bf16.msra.mxu0 %v2157
        %3375 = vmatpush.bf16.msra.mxu0 %v2153
        %3376 = vmatpush.bf16.msra.mxu0 %v2149
        %3377 = vmatmul.bf16.gmra.mxu0 %v279
        %v3378 = vpop.f32.mrf.mxu0
        %v3379 = vadd.f32 %v3366, %v3378
        %v3380 = vpop.f32.mrf.mxu0
        %3381 = vdwg.mxu0
        %3382 = vmatpush.bf16.msra.mxu0 %v2209
        %3383 = vmatpush.bf16.msra.mxu0 %v2205
        %3384 = vmatpush.bf16.msra.mxu0 %v2201
        %3385 = vmatpush.bf16.msra.mxu0 %v2197
        %3386 = vmatpush.bf16.msra.mxu0 %v2193
        %3387 = vmatpush.bf16.msra.mxu0 %v2189
        %3388 = vmatpush.bf16.msra.mxu0 %v2185
        %3389 = vmatpush.bf16.msra.mxu0 %v2181
        %3390 = vmatmul.bf16.gmra.mxu0 %v280
        %v3391 = vpop.f32.mrf.mxu0
        %v3392 = vadd.f32 %v3379, %v3391
        %v3393 = vpop.f32.mrf.mxu0
        %3394 = vdwg.mxu0
        %3395 = vmatpush.bf16.msra.mxu0 %v2241
        %3396 = vmatpush.bf16.msra.mxu0 %v2237
        %3397 = vmatpush.bf16.msra.mxu0 %v2233
        %3398 = vmatpush.bf16.msra.mxu0 %v2229
        %3399 = vmatpush.bf16.msra.mxu0 %v2225
        %3400 = vmatpush.bf16.msra.mxu0 %v2221
        %3401 = vmatpush.bf16.msra.mxu0 %v2217
        %3402 = vmatpush.bf16.msra.mxu0 %v2213
        %3403 = vmatmul.bf16.gmra.mxu0 %v281
        %v3404 = vpop.f32.mrf.mxu0
        %v3405 = vadd.f32 %v3392, %v3404
        %v3406 = vpop.f32.mrf.mxu0
        %3407 = vdwg.mxu0
        %3408 = vmatpush.bf16.msra.mxu0 %v2273
        %3409 = vmatpush.bf16.msra.mxu0 %v2269
        %3410 = vmatpush.bf16.msra.mxu0 %v2265
        %3411 = vmatpush.bf16.msra.mxu0 %v2261
        %3412 = vmatpush.bf16.msra.mxu0 %v2257
        %3413 = vmatpush.bf16.msra.mxu0 %v2253
        %3414 = vmatpush.bf16.msra.mxu0 %v2249
        %3415 = vmatpush.bf16.msra.mxu0 %v2245
        %3416 = vmatmul.bf16.gmra.mxu0 %v282
        %v3417 = vpop.f32.mrf.mxu0
        %v3418 = vadd.f32 %v3405, %v3417
        %v3419 = vpop.f32.mrf.mxu0
        %3420 = vdwg.mxu0
        %3421 = vmatpush.bf16.msra.mxu0 %v2305
        %3422 = vmatpush.bf16.msra.mxu0 %v2301
        %3423 = vmatpush.bf16.msra.mxu0 %v2297
        %3424 = vmatpush.bf16.msra.mxu0 %v2293
        %3425 = vmatpush.bf16.msra.mxu0 %v2289
        %3426 = vmatpush.bf16.msra.mxu0 %v2285
        %3427 = vmatpush.bf16.msra.mxu0 %v2281
        %3428 = vmatpush.bf16.msra.mxu0 %v2277
        %3429 = vmatmul.bf16.gmra.mxu0 %v283
        %v3430 = vpop.f32.mrf.mxu0
        %v3431 = vadd.f32 %v3418, %v3430
        %v3432 = vpop.f32.mrf.mxu0
        %3433 = vdwg.mxu0
        %3434 = vmatpush.bf16.msra.mxu0 %v2337
        %3435 = vmatpush.bf16.msra.mxu0 %v2333
        %3436 = vmatpush.bf16.msra.mxu0 %v2329
        %3437 = vmatpush.bf16.msra.mxu0 %v2325
        %3438 = vmatpush.bf16.msra.mxu0 %v2321
        %3439 = vmatpush.bf16.msra.mxu0 %v2317
        %3440 = vmatpush.bf16.msra.mxu0 %v2313
        %3441 = vmatpush.bf16.msra.mxu0 %v2309
        %3442 = vmatmul.bf16.gmra.mxu0 %v284
        %v3443 = vpop.f32.mrf.mxu0
        %v3444 = vadd.f32 %v3431, %v3443
        %v3445 = vpop.f32.mrf.mxu0
        %3446 = vdwg.mxu0
        %3447 = vmatpush.bf16.msra.mxu0 %v2369
        %3448 = vmatpush.bf16.msra.mxu0 %v2365
        %3449 = vmatpush.bf16.msra.mxu0 %v2361
        %3450 = vmatpush.bf16.msra.mxu0 %v2357
        %3451 = vmatpush.bf16.msra.mxu0 %v2353
        %3452 = vmatpush.bf16.msra.mxu0 %v2349
        %3453 = vmatpush.bf16.msra.mxu0 %v2345
        %3454 = vmatpush.bf16.msra.mxu0 %v2341
        %3455 = vmatmul.bf16.gmra.mxu0 %v285
        %v3456 = vpop.f32.mrf.mxu0
        %v3457 = vadd.f32 %v3444, %v3456
        %v3458 = vpop.f32.mrf.mxu0
        %3459 = vdwg.mxu0
        %3460 = vmatpush.bf16.msra.mxu0 %v2401
        %3461 = vmatpush.bf16.msra.mxu0 %v2397
        %3462 = vmatpush.bf16.msra.mxu0 %v2393
        %3463 = vmatpush.bf16.msra.mxu0 %v2389
        %3464 = vmatpush.bf16.msra.mxu0 %v2385
        %3465 = vmatpush.bf16.msra.mxu0 %v2381
        %3466 = vmatpush.bf16.msra.mxu0 %v2377
        %3467 = vmatpush.bf16.msra.mxu0 %v2373
        %3468 = vmatmul.bf16.gmra.mxu0 %v286
        %v3469 = vpop.f32.mrf.mxu0
        %v3470 = vadd.f32 %v3457, %v3469
        %v3471 = vpop.f32.mrf.mxu0
        %3472 = vdwg.mxu0
        %3473 = vmatpush.bf16.msra.mxu0 %v2433
        %3474 = vmatpush.bf16.msra.mxu0 %v2429
        %3475 = vmatpush.bf16.msra.mxu0 %v2425
        %3476 = vmatpush.bf16.msra.mxu0 %v2421
        %3477 = vmatpush.bf16.msra.mxu0 %v2417
        %3478 = vmatpush.bf16.msra.mxu0 %v2413
        %3479 = vmatpush.bf16.msra.mxu0 %v2409
        %3480 = vmatpush.bf16.msra.mxu0 %v2405
        %3481 = vmatmul.bf16.gmra.mxu0 %v287
        %v3482 = vpop.f32.mrf.mxu0
        %v3483 = vadd.f32 %v3470, %v3482
        %v3484 = vpop.f32.mrf.mxu0
        %3485 = vdwg.mxu0
        %3486 = vmatpush.bf16.msra.mxu0 %v2465
        %3487 = vmatpush.bf16.msra.mxu0 %v2461
        %3488 = vmatpush.bf16.msra.mxu0 %v2457
        %3489 = vmatpush.bf16.msra.mxu0 %v2453
        %3490 = vmatpush.bf16.msra.mxu0 %v2449
        %3491 = vmatpush.bf16.msra.mxu0 %v2445
        %3492 = vmatpush.bf16.msra.mxu0 %v2441
        %3493 = vmatpush.bf16.msra.mxu0 %v2437
        %3494 = vmatmul.bf16.gmra.mxu0 %v288
        %v3495 = vpop.f32.mrf.mxu0
        %v3496 = vadd.f32 %v3483, %v3495
        %v3497 = vpop.f32.mrf.mxu0
        %3498 = vdwg.mxu0
        %3499 = vmatpush.bf16.msra.mxu0 %v2497
        %3500 = vmatpush.bf16.msra.mxu0 %v2493
        %3501 = vmatpush.bf16.msra.mxu0 %v2489
        %3502 = vmatpush.bf16.msra.mxu0 %v2485
        %3503 = vmatpush.bf16.msra.mxu0 %v2481
        %3504 = vmatpush.bf16.msra.mxu0 %v2477
        %3505 = vmatpush.bf16.msra.mxu0 %v2473
        %3506 = vmatpush.bf16.msra.mxu0 %v2469
        %3507 = vmatmul.bf16.gmra.mxu0 %v289
        %v3508 = vpop.f32.mrf.mxu0
        %v3509 = vadd.f32 %v3496, %v3508
        %v3510 = vpop.f32.mrf.mxu0
        %3511 = vdwg.mxu0
        %3512 = vmatpush.bf16.msra.mxu0 %v2529
        %3513 = vmatpush.bf16.msra.mxu0 %v2525
        %3514 = vmatpush.bf16.msra.mxu0 %v2521
        %3515 = vmatpush.bf16.msra.mxu0 %v2517
        %3516 = vmatpush.bf16.msra.mxu0 %v2513
        %3517 = vmatpush.bf16.msra.mxu0 %v2509
        %3518 = vmatpush.bf16.msra.mxu0 %v2505
        %3519 = vmatpush.bf16.msra.mxu0 %v2501
        %3520 = vmatmul.bf16.gmra.mxu0 %v290
        %v3521 = vpop.f32.mrf.mxu0
        %v3522 = vadd.f32 %v3509, %v3521
        %v3523 = vpop.f32.mrf.mxu0
        %3524 = vdwg.mxu0
        %3525 = vmatpush.bf16.msra.mxu0 %v2114
        %3526 = vmatpush.bf16.msra.mxu0 %v2110
        %3527 = vmatpush.bf16.msra.mxu0 %v2106
        %3528 = vmatpush.bf16.msra.mxu0 %v2102
        %3529 = vmatpush.bf16.msra.mxu0 %v2098
        %3530 = vmatpush.bf16.msra.mxu0 %v2094
        %3531 = vmatpush.bf16.msra.mxu0 %v2090
        %3532 = vmatpush.bf16.msra.mxu0 %v2086
        %3533 = vmatmul.bf16.gmra.mxu0 %v277
        %v3534 = vpop.f32.mrf.mxu0
        %v3535 = vadd.f32 0.0, %v3534
        %v3536 = vpop.f32.mrf.mxu0
        %3537 = vdwg.mxu0
        %3538 = vmatpush.bf16.msra.mxu0 %v2146
        %3539 = vmatpush.bf16.msra.mxu0 %v2142
        %3540 = vmatpush.bf16.msra.mxu0 %v2138
        %3541 = vmatpush.bf16.msra.mxu0 %v2134
        %3542 = vmatpush.bf16.msra.mxu0 %v2130
        %3543 = vmatpush.bf16.msra.mxu0 %v2126
        %3544 = vmatpush.bf16.msra.mxu0 %v2122
        %3545 = vmatpush.bf16.msra.mxu0 %v2118
        %3546 = vmatmul.bf16.gmra.mxu0 %v278
        %v3547 = vpop.f32.mrf.mxu0
        %v3548 = vadd.f32 %v3535, %v3547
        %v3549 = vpop.f32.mrf.mxu0
        %3550 = vdwg.mxu0
        %3551 = vmatpush.bf16.msra.mxu0 %v2178
        %3552 = vmatpush.bf16.msra.mxu0 %v2174
        %3553 = vmatpush.bf16.msra.mxu0 %v2170
        %3554 = vmatpush.bf16.msra.mxu0 %v2166
        %3555 = vmatpush.bf16.msra.mxu0 %v2162
        %3556 = vmatpush.bf16.msra.mxu0 %v2158
        %3557 = vmatpush.bf16.msra.mxu0 %v2154
        %3558 = vmatpush.bf16.msra.mxu0 %v2150
        %3559 = vmatmul.bf16.gmra.mxu0 %v279
        %v3560 = vpop.f32.mrf.mxu0
        %v3561 = vadd.f32 %v3548, %v3560
        %v3562 = vpop.f32.mrf.mxu0
        %3563 = vdwg.mxu0
        %3564 = vmatpush.bf16.msra.mxu0 %v2210
        %3565 = vmatpush.bf16.msra.mxu0 %v2206
        %3566 = vmatpush.bf16.msra.mxu0 %v2202
        %3567 = vmatpush.bf16.msra.mxu0 %v2198
        %3568 = vmatpush.bf16.msra.mxu0 %v2194
        %3569 = vmatpush.bf16.msra.mxu0 %v2190
        %3570 = vmatpush.bf16.msra.mxu0 %v2186
        %3571 = vmatpush.bf16.msra.mxu0 %v2182
        %3572 = vmatmul.bf16.gmra.mxu0 %v280
        %v3573 = vpop.f32.mrf.mxu0
        %v3574 = vadd.f32 %v3561, %v3573
        %v3575 = vpop.f32.mrf.mxu0
        %3576 = vdwg.mxu0
        %3577 = vmatpush.bf16.msra.mxu0 %v2242
        %3578 = vmatpush.bf16.msra.mxu0 %v2238
        %3579 = vmatpush.bf16.msra.mxu0 %v2234
        %3580 = vmatpush.bf16.msra.mxu0 %v2230
        %3581 = vmatpush.bf16.msra.mxu0 %v2226
        %3582 = vmatpush.bf16.msra.mxu0 %v2222
        %3583 = vmatpush.bf16.msra.mxu0 %v2218
        %3584 = vmatpush.bf16.msra.mxu0 %v2214
        %3585 = vmatmul.bf16.gmra.mxu0 %v281
        %v3586 = vpop.f32.mrf.mxu0
        %v3587 = vadd.f32 %v3574, %v3586
        %v3588 = vpop.f32.mrf.mxu0
        %3589 = vdwg.mxu0
        %3590 = vmatpush.bf16.msra.mxu0 %v2274
        %3591 = vmatpush.bf16.msra.mxu0 %v2270
        %3592 = vmatpush.bf16.msra.mxu0 %v2266
        %3593 = vmatpush.bf16.msra.mxu0 %v2262
        %3594 = vmatpush.bf16.msra.mxu0 %v2258
        %3595 = vmatpush.bf16.msra.mxu0 %v2254
        %3596 = vmatpush.bf16.msra.mxu0 %v2250
        %3597 = vmatpush.bf16.msra.mxu0 %v2246
        %3598 = vmatmul.bf16.gmra.mxu0 %v282
        %v3599 = vpop.f32.mrf.mxu0
        %v3600 = vadd.f32 %v3587, %v3599
        %v3601 = vpop.f32.mrf.mxu0
        %3602 = vdwg.mxu0
        %3603 = vmatpush.bf16.msra.mxu0 %v2306
        %3604 = vmatpush.bf16.msra.mxu0 %v2302
        %3605 = vmatpush.bf16.msra.mxu0 %v2298
        %3606 = vmatpush.bf16.msra.mxu0 %v2294
        %3607 = vmatpush.bf16.msra.mxu0 %v2290
        %3608 = vmatpush.bf16.msra.mxu0 %v2286
        %3609 = vmatpush.bf16.msra.mxu0 %v2282
        %3610 = vmatpush.bf16.msra.mxu0 %v2278
        %3611 = vmatmul.bf16.gmra.mxu0 %v283
        %v3612 = vpop.f32.mrf.mxu0
        %v3613 = vadd.f32 %v3600, %v3612
        %v3614 = vpop.f32.mrf.mxu0
        %3615 = vdwg.mxu0
        %3616 = vmatpush.bf16.msra.mxu0 %v2338
        %3617 = vmatpush.bf16.msra.mxu0 %v2334
        %3618 = vmatpush.bf16.msra.mxu0 %v2330
        %3619 = vmatpush.bf16.msra.mxu0 %v2326
        %3620 = vmatpush.bf16.msra.mxu0 %v2322
        %3621 = vmatpush.bf16.msra.mxu0 %v2318
        %3622 = vmatpush.bf16.msra.mxu0 %v2314
        %3623 = vmatpush.bf16.msra.mxu0 %v2310
        %3624 = vmatmul.bf16.gmra.mxu0 %v284
        %v3625 = vpop.f32.mrf.mxu0
        %v3626 = vadd.f32 %v3613, %v3625
        %v3627 = vpop.f32.mrf.mxu0
        %3628 = vdwg.mxu0
        %3629 = vmatpush.bf16.msra.mxu0 %v2370
        %3630 = vmatpush.bf16.msra.mxu0 %v2366
        %3631 = vmatpush.bf16.msra.mxu0 %v2362
        %3632 = vmatpush.bf16.msra.mxu0 %v2358
        %3633 = vmatpush.bf16.msra.mxu0 %v2354
        %3634 = vmatpush.bf16.msra.mxu0 %v2350
        %3635 = vmatpush.bf16.msra.mxu0 %v2346
        %3636 = vmatpush.bf16.msra.mxu0 %v2342
        %3637 = vmatmul.bf16.gmra.mxu0 %v285
        %v3638 = vpop.f32.mrf.mxu0
        %v3639 = vadd.f32 %v3626, %v3638
        %v3640 = vpop.f32.mrf.mxu0
        %3641 = vdwg.mxu0
        %3642 = vmatpush.bf16.msra.mxu0 %v2402
        %3643 = vmatpush.bf16.msra.mxu0 %v2398
        %3644 = vmatpush.bf16.msra.mxu0 %v2394
        %3645 = vmatpush.bf16.msra.mxu0 %v2390
        %3646 = vmatpush.bf16.msra.mxu0 %v2386
        %3647 = vmatpush.bf16.msra.mxu0 %v2382
        %3648 = vmatpush.bf16.msra.mxu0 %v2378
        %3649 = vmatpush.bf16.msra.mxu0 %v2374
        %3650 = vmatmul.bf16.gmra.mxu0 %v286
        %v3651 = vpop.f32.mrf.mxu0
        %v3652 = vadd.f32 %v3639, %v3651
        %v3653 = vpop.f32.mrf.mxu0
        %3654 = vdwg.mxu0
        %3655 = vmatpush.bf16.msra.mxu0 %v2434
        %3656 = vmatpush.bf16.msra.mxu0 %v2430
        %3657 = vmatpush.bf16.msra.mxu0 %v2426
        %3658 = vmatpush.bf16.msra.mxu0 %v2422
        %3659 = vmatpush.bf16.msra.mxu0 %v2418
        %3660 = vmatpush.bf16.msra.mxu0 %v2414
        %3661 = vmatpush.bf16.msra.mxu0 %v2410
        %3662 = vmatpush.bf16.msra.mxu0 %v2406
        %3663 = vmatmul.bf16.gmra.mxu0 %v287
        %v3664 = vpop.f32.mrf.mxu0
        %v3665 = vadd.f32 %v3652, %v3664
        %v3666 = vpop.f32.mrf.mxu0
        %3667 = vdwg.mxu0
        %3668 = vmatpush.bf16.msra.mxu0 %v2466
        %3669 = vmatpush.bf16.msra.mxu0 %v2462
        %3670 = vmatpush.bf16.msra.mxu0 %v2458
        %3671 = vmatpush.bf16.msra.mxu0 %v2454
        %3672 = vmatpush.bf16.msra.mxu0 %v2450
        %3673 = vmatpush.bf16.msra.mxu0 %v2446
        %3674 = vmatpush.bf16.msra.mxu0 %v2442
        %3675 = vmatpush.bf16.msra.mxu0 %v2438
        %3676 = vmatmul.bf16.gmra.mxu0 %v288
        %v3677 = vpop.f32.mrf.mxu0
        %v3678 = vadd.f32 %v3665, %v3677
        %v3679 = vpop.f32.mrf.mxu0
        %3680 = vdwg.mxu0
        %3681 = vmatpush.bf16.msra.mxu0 %v2498
        %3682 = vmatpush.bf16.msra.mxu0 %v2494
        %3683 = vmatpush.bf16.msra.mxu0 %v2490
        %3684 = vmatpush.bf16.msra.mxu0 %v2486
        %3685 = vmatpush.bf16.msra.mxu0 %v2482
        %3686 = vmatpush.bf16.msra.mxu0 %v2478
        %3687 = vmatpush.bf16.msra.mxu0 %v2474
        %3688 = vmatpush.bf16.msra.mxu0 %v2470
        %3689 = vmatmul.bf16.gmra.mxu0 %v289
        %v3690 = vpop.f32.mrf.mxu0
        %v3691 = vadd.f32 %v3678, %v3690
        %v3692 = vpop.f32.mrf.mxu0
        %3693 = vdwg.mxu0
        %3694 = vmatpush.bf16.msra.mxu0 %v2530
        %3695 = vmatpush.bf16.msra.mxu0 %v2526
        %3696 = vmatpush.bf16.msra.mxu0 %v2522
        %3697 = vmatpush.bf16.msra.mxu0 %v2518
        %3698 = vmatpush.bf16.msra.mxu0 %v2514
        %3699 = vmatpush.bf16.msra.mxu0 %v2510
        %3700 = vmatpush.bf16.msra.mxu0 %v2506
        %3701 = vmatpush.bf16.msra.mxu0 %v2502
        %3702 = vmatmul.bf16.gmra.mxu0 %v290
        %v3703 = vpop.f32.mrf.mxu0
        %v3704 = vadd.f32 %v3691, %v3703
        %v3705 = vpop.f32.mrf.mxu0
        %3706 = vdwg.mxu0
        %v3711 = vrot.slane %v3340, 7
        %v3712 = vrot.slane %v3522, 6
        %v3713 = vrot.slane %v3704, 5
        %vm3714 = vcmask 1040384
        %v3715 = vsel %vm3714, %v3158, %v3711
        %vm3716 = vcmask 1042434
        %v3717 = vsel %vm3716, %v3712, %v3713
        %vm3718 = vcmask 1041408
        %v3719 = vsel %vm3718, %v3715, %v3717
        %v3721 = vadd.f32 %v244, %v3719
        %v3722 = vlaneseq
        %vm3723 = vcmp.ge.s32.totalorder %v3722, 0
        %vm3724 = vcmp.lt.s32.totalorder %v3722, 512
        %vm3725 = vmand %vm3723, %vm3724
        %3726 = vst.msk [vmem:[#allocation2] sm:$0xf] %vm3725, %v3721
        %p3727 = scmp.eq.s32.totalorder %s17, 4
        // Predicated region
        $region45: #{qnetwork_cnn_forward.7} parent=39 // pred_check
          %p3728 = pneg %p3727
        $region46: #{qnetwork_cnn_forward.7} parent=39 // pred_check_branch
          %3730 = sbr.rel (%p3728) target = $region48
        $region47: #{qnetwork_cnn_forward.7} parent=39 // pred_region
          %v3731 = vld [vmem:[#allocation2] sm:$0xf]
          %v3732 = vld [vmem:[%s2] sm:$0xf]
          %v3733 = vadd.f32 %v3731, %v3732
          %vm3734 = vcmp.gt.f32.partialorder %v3733, 0.0
          %v3735 = vmul.f32 %v3733, 0.01
          %v3736 = vsel %vm3734, %v3733, %v3735
          %v3737 = vld [vmem:[%s3] sm:$0xff]
          %v3738 = vld [vmem:[%s3 + $0x8] sm:$0xff]
          %v3739 = vld [vmem:[%s3 + $0x10] sm:$0xff]
          %v3740 = vld [vmem:[%s3 + $0x18] sm:$0xff]
          %v3741 = vld [vmem:[%s3 + $0x20] sm:$0xff]
          %v3742 = vld [vmem:[%s3 + $0x28] sm:$0xff]
          %v3743 = vld [vmem:[%s3 + $0x30] sm:$0xff]
          %v3744 = vld [vmem:[%s3 + $0x38] sm:$0xff]
          %v3745 = vld [vmem:[%s3 + $0x40] sm:$0xff]
          %v3746 = vld [vmem:[%s3 + $0x48] sm:$0xff]
          %v3747 = vld [vmem:[%s3 + $0x50] sm:$0xff]
          %v3748 = vld [vmem:[%s3 + $0x58] sm:$0xff]
          %v3749 = vld [vmem:[%s3 + $0x60] sm:$0xff]
          %v3750 = vld [vmem:[%s3 + $0x68] sm:$0xff]
          %v3751 = vld [vmem:[%s3 + $0x70] sm:$0xff]
          %v3752 = vld [vmem:[%s3 + $0x78] sm:$0xff]
          %v3753 = vld [vmem:[%s3 + $0x80] sm:$0xff]
          %v3754 = vld [vmem:[%s3 + $0x88] sm:$0xff]
          %v3755 = vld [vmem:[%s3 + $0x90] sm:$0xff]
          %v3756 = vld [vmem:[%s3 + $0x98] sm:$0xff]
          %v3757 = vld [vmem:[%s3 + $0xa0] sm:$0xff]
          %v3758 = vld [vmem:[%s3 + $0xa8] sm:$0xff]
          %v3759 = vld [vmem:[%s3 + $0xb0] sm:$0xff]
          %v3760 = vld [vmem:[%s3 + $0xb8] sm:$0xff]
          %v3761 = vld [vmem:[%s3 + $0xc0] sm:$0xff]
          %v3762 = vld [vmem:[%s3 + $0xc8] sm:$0xff]
          %v3763 = vld [vmem:[%s3 + $0xd0] sm:$0xff]
          %v3764 = vld [vmem:[%s3 + $0xd8] sm:$0xff]
          %v3765 = vld [vmem:[%s3 + $0xe0] sm:$0xff]
          %v3766 = vld [vmem:[%s3 + $0xe8] sm:$0xff]
          %v3767 = vld [vmem:[%s3 + $0xf0] sm:$0xff]
          %v3768 = vld [vmem:[%s3 + $0xf8] sm:$0xff]
          %v3769 = vld [vmem:[%s3 + $0x100] sm:$0xff]
          %v3770 = vld [vmem:[%s3 + $0x108] sm:$0xff]
          %v3771 = vld [vmem:[%s3 + $0x110] sm:$0xff]
          %v3772 = vld [vmem:[%s3 + $0x118] sm:$0xff]
          %v3773 = vld [vmem:[%s3 + $0x120] sm:$0xff]
          %v3774 = vld [vmem:[%s3 + $0x128] sm:$0xff]
          %v3775 = vld [vmem:[%s3 + $0x130] sm:$0xff]
          %v3776 = vld [vmem:[%s3 + $0x138] sm:$0xff]
          %v3777 = vld [vmem:[%s3 + $0x140] sm:$0xff]
          %v3778 = vld [vmem:[%s3 + $0x148] sm:$0xff]
          %v3779 = vld [vmem:[%s3 + $0x150] sm:$0xff]
          %v3780 = vld [vmem:[%s3 + $0x158] sm:$0xff]
          %v3781 = vld [vmem:[%s3 + $0x160] sm:$0xff]
          %v3782 = vld [vmem:[%s3 + $0x168] sm:$0xff]
          %v3783 = vld [vmem:[%s3 + $0x170] sm:$0xff]
          %v3784 = vld [vmem:[%s3 + $0x178] sm:$0xff]
          %v3785 = vld [vmem:[%s3 + $0x180] sm:$0xff]
          %v3786 = vld [vmem:[%s3 + $0x188] sm:$0xff]
          %v3787 = vld [vmem:[%s3 + $0x190] sm:$0xff]
          %v3788 = vld [vmem:[%s3 + $0x198] sm:$0xff]
          %v3789 = vld [vmem:[%s3 + $0x1a0] sm:$0xff]
          %v3790 = vld [vmem:[%s3 + $0x1a8] sm:$0xff]
          %v3791 = vld [vmem:[%s3 + $0x1b0] sm:$0xff]
          %v3792 = vld [vmem:[%s3 + $0x1b8] sm:$0xff]
          %v3793 = vld [vmem:[%s3 + $0x1c0] sm:$0xff]
          %v3794 = vld [vmem:[%s3 + $0x1c8] sm:$0xff]
          %v3795 = vld [vmem:[%s3 + $0x1d0] sm:$0xff]
          %v3796 = vld [vmem:[%s3 + $0x1d8] sm:$0xff]
          %v3797 = vld [vmem:[%s3 + $0x1e0] sm:$0xff]
          %v3798 = vld [vmem:[%s3 + $0x1e8] sm:$0xff]
          %v3799 = vld [vmem:[%s3 + $0x1f0] sm:$0xff]
          %v3800 = vld [vmem:[%s3 + $0x1f8] sm:$0xff]
          %v3801 = vld [vmem:[%s4] sm:$0x1]
          %v3803 = vperm.slane %v3736, 0
          %v3804 = vperm.slane %v3736, 1
          %v3805 = vperm.slane %v3736, 2
          %v3806 = vperm.slane %v3736, 3
          %3811 = vmatpush.msra.mxu0 %v3752
          %3812 = vmatpush.msra.mxu0 %v3751
          %3813 = vmatpush.msra.mxu0 %v3750
          %3814 = vmatpush.msra.mxu0 %v3749
          %3815 = vmatpush.msra.mxu0 %v3748
          %3816 = vmatpush.msra.mxu0 %v3747
          %3817 = vmatpush.msra.mxu0 %v3746
          %3818 = vmatpush.msra.mxu0 %v3745
          %3819 = vmatpush.msra.mxu0 %v3744
          %3820 = vmatpush.msra.mxu0 %v3743
          %3821 = vmatpush.msra.mxu0 %v3742
          %3822 = vmatpush.msra.mxu0 %v3741
          %3823 = vmatpush.msra.mxu0 %v3740
          %3824 = vmatpush.msra.mxu0 %v3739
          %3825 = vmatpush.msra.mxu0 %v3738
          %3826 = vmatpush.msra.mxu0 %v3737
          %3827 = vmatmul.f32.gmra.mxu0 %v3803
          %v3828 = vpop.f32.mrf.mxu0
          %v3829 = vadd.f32 %v3801, %v3828
          %3830 = vdwg.mxu0
          %3831 = vmatpush.msra.mxu0 %v3768
          %3832 = vmatpush.msra.mxu0 %v3767
          %3833 = vmatpush.msra.mxu0 %v3766
          %3834 = vmatpush.msra.mxu0 %v3765
          %3835 = vmatpush.msra.mxu0 %v3764
          %3836 = vmatpush.msra.mxu0 %v3763
          %3837 = vmatpush.msra.mxu0 %v3762
          %3838 = vmatpush.msra.mxu0 %v3761
          %3839 = vmatpush.msra.mxu0 %v3760
          %3840 = vmatpush.msra.mxu0 %v3759
          %3841 = vmatpush.msra.mxu0 %v3758
          %3842 = vmatpush.msra.mxu0 %v3757
          %3843 = vmatpush.msra.mxu0 %v3756
          %3844 = vmatpush.msra.mxu0 %v3755
          %3845 = vmatpush.msra.mxu0 %v3754
          %3846 = vmatpush.msra.mxu0 %v3753
          %3847 = vmatmul.f32.gmra.mxu0 %v3804
          %v3848 = vpop.f32.mrf.mxu0
          %v3849 = vadd.f32 %v3829, %v3848
          %3850 = vdwg.mxu0
          %3851 = vmatpush.msra.mxu0 %v3784
          %3852 = vmatpush.msra.mxu0 %v3783
          %3853 = vmatpush.msra.mxu0 %v3782
          %3854 = vmatpush.msra.mxu0 %v3781
          %3855 = vmatpush.msra.mxu0 %v3780
          %3856 = vmatpush.msra.mxu0 %v3779
          %3857 = vmatpush.msra.mxu0 %v3778
          %3858 = vmatpush.msra.mxu0 %v3777
          %3859 = vmatpush.msra.mxu0 %v3776
          %3860 = vmatpush.msra.mxu0 %v3775
          %3861 = vmatpush.msra.mxu0 %v3774
          %3862 = vmatpush.msra.mxu0 %v3773
          %3863 = vmatpush.msra.mxu0 %v3772
          %3864 = vmatpush.msra.mxu0 %v3771
          %3865 = vmatpush.msra.mxu0 %v3770
          %3866 = vmatpush.msra.mxu0 %v3769
          %3867 = vmatmul.f32.gmra.mxu0 %v3805
          %v3868 = vpop.f32.mrf.mxu0
          %v3869 = vadd.f32 %v3849, %v3868
          %3870 = vdwg.mxu0
          %3871 = vmatpush.msra.mxu0 %v3800
          %3872 = vmatpush.msra.mxu0 %v3799
          %3873 = vmatpush.msra.mxu0 %v3798
          %3874 = vmatpush.msra.mxu0 %v3797
          %3875 = vmatpush.msra.mxu0 %v3796
          %3876 = vmatpush.msra.mxu0 %v3795
          %3877 = vmatpush.msra.mxu0 %v3794
          %3878 = vmatpush.msra.mxu0 %v3793
          %3879 = vmatpush.msra.mxu0 %v3792
          %3880 = vmatpush.msra.mxu0 %v3791
          %3881 = vmatpush.msra.mxu0 %v3790
          %3882 = vmatpush.msra.mxu0 %v3789
          %3883 = vmatpush.msra.mxu0 %v3788
          %3884 = vmatpush.msra.mxu0 %v3787
          %3885 = vmatpush.msra.mxu0 %v3786
          %3886 = vmatpush.msra.mxu0 %v3785
          %3887 = vmatmul.f32.gmra.mxu0 %v3806
          %v3888 = vpop.f32.mrf.mxu0
          %v3889 = vadd.f32 %v3869, %v3888
          %3890 = vdwg.mxu0
          %vm3891 = vcmask 40960
          %3892 = vst.msk [vmem:[#allocation3] sm:$0x1] %vm3891, %v3889
        $region48: #{qnetwork_cnn_forward.7} parent=39 // pred_fallthru
          _
        // Predicated region
        $region49: #{qnetwork_cnn_forward.7} parent=39 // pred_check
          %p3893 = pneg %p145
        $region50: #{qnetwork_cnn_forward.7} parent=39 // pred_check_branch
          %3895 = sbr.rel (%p3893) target = $region52
        $region51: #{qnetwork_cnn_forward.7} parent=39 // pred_region
          %3897 = vsyncadd [#allocation4], 0
          %s3899 = sshll.u32 [#allocation3], 4
          %s3900 = int_to_ptr.vmem [resolvable:$true] %s3899
          %s3901 = sshll.u32 %s5, 4
          %s3902 = int_to_ptr.hbm [resolvable:$true] %s3901
          %3904 = dma.vmem_to_hbm [thread:$0]  %s3900, 16, %s3902, [#allocation4]
        $region52: #{qnetwork_cnn_forward.7} parent=39 // pred_fallthru
          _
        // Predicated region
        $region53: #{qnetwork_cnn_forward.7} parent=39 // pred_check
          %p3905 = pneg %p145
        $region54: #{qnetwork_cnn_forward.7} parent=39 // pred_check_branch
          %3907 = sbr.rel (%p3905) target = $region56
        $region55: #{qnetwork_cnn_forward.7} parent=39 // pred_region
          %3909 = dma.done [#allocation4], 16
        $region56: #{qnetwork_cnn_forward.7} parent=39 // pred_fallthru
          _
      $region40: #{qnetwork_cnn_forward.7} parent=5 // pred_fallthru
        _
      %p3910 = scmp.le.s32.totalorder 2, %s12
      // Predicated region
      $region57: #{qnetwork_cnn_forward.7} parent=5 // pred_check
        %p3911 = pneg %p3910
      $region58: #{qnetwork_cnn_forward.7} parent=5 // pred_check_branch
        %3913 = sbr.rel (%p3911) target = $region60
      $region59: #{qnetwork_cnn_forward.7} parent=5 // pred_region
        %s3914 = ssub.s32 %s12, 2
      $region60: #{qnetwork_cnn_forward.7} parent=5 // pred_fallthru
        _
    $region6: #{qnetwork_cnn_forward.7} parent=1 // loop_footer
      %s16 = sadd.s32 1, %s12
    $region7: #{qnetwork_cnn_forward.7} parent=1 // loop_footer_branch
      %11 = sbr.rel target = $region3
    $region8: #{qnetwork_cnn_forward.7} parent=1 // loop_exit
      _
    %3915 = vsyncpa [#allocation4], 1
    %s3916 = scalar_lea.sflag [#allocation4], 1
    %3917 = vsyncpa %s3916, 1

</llo_original>
